<compile_context>
chip_gen: v6e
topology: v6e:2x2x1
jax: 0.10.0
libtpu: 0.0.40
codegen_flags: <defaults>
</compile_context>

<pallas_src>
import jax
import jax.numpy as jnp
import numpy as np
from jax.experimental import pallas as pl
from jax.experimental.pallas import tpu as pltpu


# ----------------------------------------------------------------------------------------
# Static tap tables for the stride^2 phase decomposition.
#   out[n, co, s*i + rh, s*j + rw] = bias[co]
#       + sum_{(dh,dw,kh,kw) in taps[(rh,rw)]} sum_ci w[ci,co,kh,kw] * x[n, ci, i+dh, j+dw]
# (derived directly from oh = ih*stride - padding + kh; no kernel flip needed).
# ----------------------------------------------------------------------------------------
def _taps_1d(K, stride, padding, r):
    taps = []
    for k in range(K):
        t = r + padding - k
        if t % stride == 0:
            taps.append((t // stride, k))          # (d, k)
    return taps


def _phase_taps(K, stride, padding):
    table = {}
    for rh in range(stride):
        th = _taps_1d(K, stride, padding, rh)
        for rw in range(stride):
            tw = _taps_1d(K, stride, padding, rw)
            table[(rh, rw)] = [(dh, dw, kh, kw) for (dh, kh) in th for (dw, kw) in tw]
    return table


def _make_convt_kernel(taps, K, Cin, Cout, Hg, L, d_min, stride):
    """Phase-decomposed ConvTranspose2d on a lane-dense (batch, row-group)-packed layout."""
    shift_pairs = sorted({(dh, dw) for tl in taps.values() for (dh, dw, _, _) in tl})

    def kernel(w_smem, b_smem, x_ref, o_ref):
        # w_smem: (K*K*Cin*Cout,) f32 SMEM, flat layout [((kh*K+kw)*Cin+ci)*Cout+co]
        # b_smem: (Cout,) f32 SMEM
        # x_ref : (n_d, Cin, RH, L) -- one lane-dense plane per column shift dw, row halo in RH
        # o_ref : (P, Cout, Hg, L)  -- P = stride**2 output phases, lane-dense last dim
        #
        # Hoist the tap views once (Cin * |shift_pairs| ~ 16 small loads, each a static
        # sublane-offset slice of a lane-dense plane); they are reused by every phase/co.
        views = {}
        for ci in range(Cin):
            for (dh, dw) in shift_pairs:
                dhi, dwi = dh - d_min, dw - d_min
                views[(ci, dh, dw)] = x_ref[dwi, ci, dhi:dhi + Hg, :].astype(jnp.float32)

        # One (Hg, L) accumulator live at a time -> bounded vreg pressure.
        for rh in range(stride):
            for rw in range(stride):
                ph = rh * stride + rw
                tap_list = taps[(rh, rw)]
                for co in range(Cout):
                    acc = jnp.full((Hg, L), b_smem[co], dtype=jnp.float32)   # bias folded in
                    for (dh, dw, kh, kw) in tap_list:
                        base = (kh * K + kw) * Cin * Cout + co
                        for ci in range(Cin):
                            acc = acc + w_smem[base + ci * Cout] * views[(ci, dh, dw)]
                    o_ref[ph, co, :, :] = acc.astype(o_ref.dtype)

    return kernel


def conv_transpose2d_pallas(x, weight, bias, *, stride, padding, scale,
                            compute_dtype=jnp.float32, out_dtype=jnp.float32):
    """PyTorch-style conv_transpose2d.  x: (N,Cin,H,W), weight: (Cin,Cout,K,K)."""
    N, Cin, H, W = x.shape
    Cin_w, Cout, K, Kw = weight.shape
    assert Cin_w == Cin and K == Kw, "weight must be (Cin, Cout, K, K)"
    s = int(stride)
    P = s * s

    Ho = (H - 1) * s - 2 * padding + K
    Wo = (W - 1) * s - 2 * padding + K
    assert Ho >= 1 and Wo >= 1
    # The phase grid computes stride*H x stride*W candidate outputs; must cover (Ho, Wo).
    assert Ho <= s * H and Wo <= s * W, "padding too small for the phase-grid layout"

    # ---- static tap tables & halo extents (pure Python, trace time) ----
    taps = _phase_taps(K, s, padding)
    all_d = [d for tl in taps.values() for (dh, dw, _, _) in tl for d in (dh, dw)]
    d_min = min(all_d) if all_d else 0
    d_max = max(all_d) if all_d else 0
    n_d = d_max - d_min + 1
    pad_lo = max(0, -d_min)
    pad_hi = max(0, d_max)
    row0 = max(d_min, 0)

    # Row-group factor G: pack (batch, row-group) stripes along lanes so the kernel's last
    # dim is >= 128 (lane-dense).  For the test shape N*G*W = 2*4*16 = 128 exactly.
    G = 1
    for g in range(1, H + 1):
        if H % g != 0:
            continue
        G = g
        if N * g * W >= 128:
            break
    Hg = H // G
    RH = Hg + (d_max - d_min)          # rows per stripe incl. row halo
    L = N * G * W                      # lane width of every kernel block

    # ---- input packing (plain JAX, tiny): one lane-dense plane per column shift ----
    x_pad = jnp.pad(x, ((0, 0), (0, 0), (pad_lo, pad_hi), (pad_lo, pad_hi)))
    planes = []
    for dw in range(d_min, d_max + 1):
        c0 = dw + pad_lo
        xw = x_pad[:, :, :, c0:c0 + W]                                   # (N,Cin,H+dlt,W)
        grp = jnp.stack(
            [xw[:, :, g * Hg + row0: g * Hg + row0 + RH, :] for g in range(G)],
            axis=2)                                                      # (N,Cin,G,RH,W)
        planes.append(jnp.transpose(grp, (1, 3, 0, 2, 4)).reshape(Cin, RH, L))
    xp = jnp.stack(planes, axis=0).astype(compute_dtype)                 # (n_d,Cin,RH,L)

    # ---- weights / bias: SMEM scalars, scale folded in, NOT flipped (direct adjoint) ----
    wf = weight.astype(jnp.float32) * jnp.float32(scale)                 # (Cin,Cout,K,K)
    w_flat = jnp.transpose(wf, (2, 3, 0, 1)).reshape(-1)                 # [(kh,kw,ci,co)]
    b_vec = (jnp.zeros((Cout,), jnp.float32) if bias is None
             else bias.reshape(Cout).astype(jnp.float32))

    # ---- VMEM budget check (derived from hardware, not hard-coded) ----
    def _rup(v, m):
        return (v + m - 1) // m * m

    in_bytes = n_d * Cin * _rup(RH, 8) * _rup(L, 128) * jnp.dtype(compute_dtype).itemsize
    out_bytes = P * Cout * _rup(Hg, 8) * _rup(L, 128) * jnp.dtype(out_dtype).itemsize
    try:
        vmem_cap = int(pltpu.get_tpu_info().vmem_capacity_bytes)
    except Exception:
        vmem_cap = 64 * 1024 * 1024    # v7x per-TC physical VMEM (most restrictive gen)
    assert in_bytes + out_bytes < vmem_cap // 4, (
        "blocks too large for VMEM; add a row-group-tiled grid with a halo-aware "
        "index_map for larger shapes")

    kernel = _make_convt_kernel(taps, K, Cin, Cout, Hg, L, d_min, s)

    total_taps = sum(len(v) for v in taps.values())       # == K*K real taps, no zero MACs
    flops = 2 * N * Cout * Cin * total_taps * H * W
    bytes_accessed = int(xp.size * jnp.dtype(compute_dtype).itemsize
                         + w_flat.size * 4 + Cout * 4
                         + P * Cout * Hg * L * jnp.dtype(out_dtype).itemsize)

    # Single grid step: both images are packed into the lane axis, so there is no per-step
    # overhead or pipeline fill/drain.  (For shapes that exceed the VMEM budget, tile over
    # (batch, row-group) grid axes instead -- that also restores v7x 2-TC parallelism.)
    out_packed = pl.pallas_call(
        kernel,
        out_shape=jax.ShapeDtypeStruct((P, Cout, Hg, L), out_dtype),
        grid_spec=pltpu.PrefetchScalarGridSpec(
            num_scalar_prefetch=0,
            grid=(1,),
            in_specs=[
                pl.BlockSpec(memory_space=pltpu.MemorySpace.SMEM),            # flat weights
                pl.BlockSpec(memory_space=pltpu.MemorySpace.SMEM),            # bias
                pl.BlockSpec((n_d, Cin, RH, L), lambda i: (0, 0, 0, 0)),      # packed input
            ],
            out_specs=pl.BlockSpec((P, Cout, Hg, L), lambda i: (0, 0, 0, 0)),
        ),
        compiler_params=pltpu.CompilerParams(dimension_semantics=("arbitrary",)),
        cost_estimate=pl.CostEstimate(flops=flops, transcendentals=0,
                                      bytes_accessed=bytes_accessed),
    )(w_flat, b_vec, xp)

    # ---- un-pack: interleave the stride^2 phases and (batch, row-group) stripes ----
    op = out_packed.reshape(s, s, Cout, Hg, N, G, W)       # (rh, rw, Cout, Hg, N, G, W)
    op = jnp.transpose(op, (4, 2, 5, 3, 0, 6, 1))          # (N, Cout, G, Hg, rh, W, rw)
    out = op.reshape(N, Cout, G * Hg * s, W * s)[:, :, :Ho, :Wo]
    return out


def _reference(x, weight, bias, *, stride, padding, scale):
    # independent reference: conv_transpose == dilated conv with flipped / transposed kernel
    w = weight * scale
    K = weight.shape[-1]
    rhs = jnp.transpose(w[:, :, ::-1, ::-1], (1, 0, 2, 3))             # (Cout, Cin, K, K)
    pad = K - 1 - padding
    out = jax.lax.conv_general_dilated(
        x, rhs, window_strides=(1, 1),
        padding=[(pad, pad), (pad, pad)],
        lhs_dilation=(stride, stride),
        dimension_numbers=("NCHW", "OIHW", "NCHW"))
    if bias is not None:
        out = out + bias[None, :, None, None]
    return out


if __name__ == "__main__":
    # module configuration (mirrors ConvTranspose2d.__init__)
    in_channels, out_channels = 4, 8
    kernel_size, stride = 3, 2
    use_bias = True
    variance_scale, weight_scale = 1.0, True
    padding = kernel_size // 2

    std = float(np.sqrt(variance_scale / in_channels / kernel_size / kernel_size))
    key = jax.random.PRNGKey(0)
    kw_, kx_ = jax.random.split(key)

    if weight_scale:
        weight = jax.random.normal(
            kw_, (in_channels, out_channels, kernel_size, kernel_size), jnp.float32)
        scale = std
    else:
        weight = std * jax.random.normal(
            kw_, (in_channels, out_channels, kernel_size, kernel_size), jnp.float32)
        scale = 1.0
    bias = jnp.zeros((out_channels,), jnp.float32) if use_bias else None

    x = jax.random.normal(kx_, (2, in_channels, 16, 16), jnp.float32)

    out = conv_transpose2d_pallas(x, weight, bias, stride=stride,
                                  padding=padding, scale=scale)
    out = jax.block_until_ready(out)

    ref = _reference(x, weight, bias, stride=stride, padding=padding, scale=scale)
    np.testing.assert_allclose(np.asarray(out), np.asarray(ref), atol=1e-4, rtol=1e-4)
    assert out.shape == (2, out_channels,
                         (16 - 1) * stride - 2 * padding + kernel_size,
                         (16 - 1) * stride - 2 * padding + kernel_size)
    print("KERNEL_OK")
</pallas_src>

<mosaic_0001>
module attributes {stable_mosaic.version = 11 : i64} {
  func.func @kernel(%arg0: i32, %arg1: memref<288xf32, #tpu.memory_space<smem>>, %arg2: memref<8xf32, #tpu.memory_space<smem>>, %arg3: memref<2x4x5x128xf32, #tpu.memory_space<vmem>>, %arg4: memref<4x8x4x128xf32, #tpu.memory_space<vmem>>) attributes {dimension_semantics = [#tpu.dimension_semantics<arbitrary>], iteration_bounds = array<i64: 1>, scalar_prefetch = 0 : i64, scratch_operands = 0 : i64, tpu.core_type = #tpu.core_type<tc>, window_params = [{transform_indices = @transform_0, window_bounds = array<i64: 288>}, {transform_indices = @transform_1, window_bounds = array<i64: 8>}, {pipeline_mode = #tpu.pipeline_mode<synchronous>, transform_indices = @transform_2, window_bounds = array<i64: 2, 4, 5, 128>}, {pipeline_mode = #tpu.pipeline_mode<synchronous>, transform_indices = @transform_3, window_bounds = array<i64: 4, 8, 4, 128>}]} {
    %c0 = arith.constant 0 : index
    %c0_0 = arith.constant 0 : index
    %c0_1 = arith.constant 0 : index
    %c0_2 = arith.constant 0 : index
    %0 = vector.load %arg3[%c0, %c0_0, %c0_1, %c0_2] : memref<2x4x5x128xf32, #tpu.memory_space<vmem>>, vector<1x1x4x128xf32>
    %1 = vector.shape_cast %0 : vector<1x1x4x128xf32> to vector<4x128xf32>
    %c1 = arith.constant 1 : index
    %c0_3 = arith.constant 0 : index
    %c0_4 = arith.constant 0 : index
    %c0_5 = arith.constant 0 : index
    %2 = vector.load %arg3[%c1, %c0_3, %c0_4, %c0_5] : memref<2x4x5x128xf32, #tpu.memory_space<vmem>>, vector<1x1x4x128xf32>
    %3 = vector.shape_cast %2 : vector<1x1x4x128xf32> to vector<4x128xf32>
    %c0_6 = arith.constant 0 : index
    %c0_7 = arith.constant 0 : index
    %c1_8 = arith.constant 1 : index
    %c0_9 = arith.constant 0 : index
    %4 = vector.load %arg3[%c0_6, %c0_7, %c1_8, %c0_9] : memref<2x4x5x128xf32, #tpu.memory_space<vmem>>, vector<1x1x4x128xf32>
    %5 = vector.shape_cast %4 : vector<1x1x4x128xf32> to vector<4x128xf32>
    %c1_10 = arith.constant 1 : index
    %c0_11 = arith.constant 0 : index
    %c1_12 = arith.constant 1 : index
    %c0_13 = arith.constant 0 : index
    %6 = vector.load %arg3[%c1_10, %c0_11, %c1_12, %c0_13] : memref<2x4x5x128xf32, #tpu.memory_space<vmem>>, vector<1x1x4x128xf32>
    %7 = vector.shape_cast %6 : vector<1x1x4x128xf32> to vector<4x128xf32>
    %c0_14 = arith.constant 0 : index
    %c1_15 = arith.constant 1 : index
    %c0_16 = arith.constant 0 : index
    %c0_17 = arith.constant 0 : index
    %8 = vector.load %arg3[%c0_14, %c1_15, %c0_16, %c0_17] : memref<2x4x5x128xf32, #tpu.memory_space<vmem>>, vector<1x1x4x128xf32>
    %9 = vector.shape_cast %8 : vector<1x1x4x128xf32> to vector<4x128xf32>
    %c1_18 = arith.constant 1 : index
    %c1_19 = arith.constant 1 : index
    %c0_20 = arith.constant 0 : index
    %c0_21 = arith.constant 0 : index
    %10 = vector.load %arg3[%c1_18, %c1_19, %c0_20, %c0_21] : memref<2x4x5x128xf32, #tpu.memory_space<vmem>>, vector<1x1x4x128xf32>
    %11 = vector.shape_cast %10 : vector<1x1x4x128xf32> to vector<4x128xf32>
    %c0_22 = arith.constant 0 : index
    %c1_23 = arith.constant 1 : index
    %c1_24 = arith.constant 1 : index
    %c0_25 = arith.constant 0 : index
    %12 = vector.load %arg3[%c0_22, %c1_23, %c1_24, %c0_25] : memref<2x4x5x128xf32, #tpu.memory_space<vmem>>, vector<1x1x4x128xf32>
    %13 = vector.shape_cast %12 : vector<1x1x4x128xf32> to vector<4x128xf32>
    %c1_26 = arith.constant 1 : index
    %c1_27 = arith.constant 1 : index
    %c1_28 = arith.constant 1 : index
    %c0_29 = arith.constant 0 : index
    %14 = vector.load %arg3[%c1_26, %c1_27, %c1_28, %c0_29] : memref<2x4x5x128xf32, #tpu.memory_space<vmem>>, vector<1x1x4x128xf32>
    %15 = vector.shape_cast %14 : vector<1x1x4x128xf32> to vector<4x128xf32>
    %c0_30 = arith.constant 0 : index
    %c2 = arith.constant 2 : index
    %c0_31 = arith.constant 0 : index
    %c0_32 = arith.constant 0 : index
    %16 = vector.load %arg3[%c0_30, %c2, %c0_31, %c0_32] : memref<2x4x5x128xf32, #tpu.memory_space<vmem>>, vector<1x1x4x128xf32>
    %17 = vector.shape_cast %16 : vector<1x1x4x128xf32> to vector<4x128xf32>
    %c1_33 = arith.constant 1 : index
    %c2_34 = arith.constant 2 : index
    %c0_35 = arith.constant 0 : index
    %c0_36 = arith.constant 0 : index
    %18 = vector.load %arg3[%c1_33, %c2_34, %c0_35, %c0_36] : memref<2x4x5x128xf32, #tpu.memory_space<vmem>>, vector<1x1x4x128xf32>
    %19 = vector.shape_cast %18 : vector<1x1x4x128xf32> to vector<4x128xf32>
    %c0_37 = arith.constant 0 : index
    %c2_38 = arith.constant 2 : index
    %c1_39 = arith.constant 1 : index
    %c0_40 = arith.constant 0 : index
    %20 = vector.load %arg3[%c0_37, %c2_38, %c1_39, %c0_40] : memref<2x4x5x128xf32, #tpu.memory_space<vmem>>, vector<1x1x4x128xf32>
    %21 = vector.shape_cast %20 : vector<1x1x4x128xf32> to vector<4x128xf32>
    %c1_41 = arith.constant 1 : index
    %c2_42 = arith.constant 2 : index
    %c1_43 = arith.constant 1 : index
    %c0_44 = arith.constant 0 : index
    %22 = vector.load %arg3[%c1_41, %c2_42, %c1_43, %c0_44] : memref<2x4x5x128xf32, #tpu.memory_space<vmem>>, vector<1x1x4x128xf32>
    %23 = vector.shape_cast %22 : vector<1x1x4x128xf32> to vector<4x128xf32>
    %c0_45 = arith.constant 0 : index
    %c3 = arith.constant 3 : index
    %c0_46 = arith.constant 0 : index
    %c0_47 = arith.constant 0 : index
    %24 = vector.load %arg3[%c0_45, %c3, %c0_46, %c0_47] : memref<2x4x5x128xf32, #tpu.memory_space<vmem>>, vector<1x1x4x128xf32>
    %25 = vector.shape_cast %24 : vector<1x1x4x128xf32> to vector<4x128xf32>
    %c1_48 = arith.constant 1 : index
    %c3_49 = arith.constant 3 : index
    %c0_50 = arith.constant 0 : index
    %c0_51 = arith.constant 0 : index
    %26 = vector.load %arg3[%c1_48, %c3_49, %c0_50, %c0_51] : memref<2x4x5x128xf32, #tpu.memory_space<vmem>>, vector<1x1x4x128xf32>
    %27 = vector.shape_cast %26 : vector<1x1x4x128xf32> to vector<4x128xf32>
    %c0_52 = arith.constant 0 : index
    %c3_53 = arith.constant 3 : index
    %c1_54 = arith.constant 1 : index
    %c0_55 = arith.constant 0 : index
    %28 = vector.load %arg3[%c0_52, %c3_53, %c1_54, %c0_55] : memref<2x4x5x128xf32, #tpu.memory_space<vmem>>, vector<1x1x4x128xf32>
    %29 = vector.shape_cast %28 : vector<1x1x4x128xf32> to vector<4x128xf32>
    %c1_56 = arith.constant 1 : index
    %c3_57 = arith.constant 3 : index
    %c1_58 = arith.constant 1 : index
    %c0_59 = arith.constant 0 : index
    %30 = vector.load %arg3[%c1_56, %c3_57, %c1_58, %c0_59] : memref<2x4x5x128xf32, #tpu.memory_space<vmem>>, vector<1x1x4x128xf32>
    %31 = vector.shape_cast %30 : vector<1x1x4x128xf32> to vector<4x128xf32>
    %c0_60 = arith.constant 0 : index
    %32 = memref.load %arg2[%c0_60] : memref<8xf32, #tpu.memory_space<smem>>
    %33 = vector.broadcast %32 : f32 to vector<4x128xf32>
    %c128 = arith.constant 128 : index
    %34 = memref.load %arg1[%c128] : memref<288xf32, #tpu.memory_space<smem>>
    %35 = vector.broadcast %34 : f32 to vector<4x128xf32>
    %36 = arith.mulf %35, %1 : vector<4x128xf32>
    %37 = arith.addf %33, %36 : vector<4x128xf32>
    %c136 = arith.constant 136 : index
    %38 = memref.load %arg1[%c136] : memref<288xf32, #tpu.memory_space<smem>>
    %39 = vector.broadcast %38 : f32 to vector<4x128xf32>
    %40 = arith.mulf %39, %9 : vector<4x128xf32>
    %41 = arith.addf %37, %40 : vector<4x128xf32>
    %c144 = arith.constant 144 : index
    %42 = memref.load %arg1[%c144] : memref<288xf32, #tpu.memory_space<smem>>
    %43 = vector.broadcast %42 : f32 to vector<4x128xf32>
    %44 = arith.mulf %43, %17 : vector<4x128xf32>
    %45 = arith.addf %41, %44 : vector<4x128xf32>
    %c152 = arith.constant 152 : index
    %46 = memref.load %arg1[%c152] : memref<288xf32, #tpu.memory_space<smem>>
    %47 = vector.broadcast %46 : f32 to vector<4x128xf32>
    %48 = arith.mulf %47, %25 : vector<4x128xf32>
    %49 = arith.addf %45, %48 : vector<4x128xf32>
    %c0_61 = arith.constant 0 : index
    %c0_62 = arith.constant 0 : index
    %c0_63 = arith.constant 0 : index
    %c0_64 = arith.constant 0 : index
    %50 = vector.load %arg4[%c0_61, %c0_62, %c0_63, %c0_64] : memref<4x8x4x128xf32, #tpu.memory_space<vmem>>, vector<1x1x4x128xf32>
    %51 = vector.shape_cast %50 : vector<1x1x4x128xf32> to vector<4x128xf32>
    %52 = vector.shape_cast %49 : vector<4x128xf32> to vector<1x1x4x128xf32>
    tpu.vector_store %arg4[%c0_61, %c0_62, %c0_63, %c0_64], %52 {strides = array<i32>} : memref<4x8x4x128xf32, #tpu.memory_space<vmem>>, vector<1x1x4x128xf32>,
    %c1_65 = arith.constant 1 : index
    %53 = memref.load %arg2[%c1_65] : memref<8xf32, #tpu.memory_space<smem>>
    %54 = vector.broadcast %53 : f32 to vector<4x128xf32>
    %c129 = arith.constant 129 : index
    %55 = memref.load %arg1[%c129] : memref<288xf32, #tpu.memory_space<smem>>
    %56 = vector.broadcast %55 : f32 to vector<4x128xf32>
    %57 = arith.mulf %56, %1 : vector<4x128xf32>
    %58 = arith.addf %54, %57 : vector<4x128xf32>
    %c137 = arith.constant 137 : index
    %59 = memref.load %arg1[%c137] : memref<288xf32, #tpu.memory_space<smem>>
    %60 = vector.broadcast %59 : f32 to vector<4x128xf32>
    %61 = arith.mulf %60, %9 : vector<4x128xf32>
    %62 = arith.addf %58, %61 : vector<4x128xf32>
    %c145 = arith.constant 145 : index
    %63 = memref.load %arg1[%c145] : memref<288xf32, #tpu.memory_space<smem>>
    %64 = vector.broadcast %63 : f32 to vector<4x128xf32>
    %65 = arith.mulf %64, %17 : vector<4x128xf32>
    %66 = arith.addf %62, %65 : vector<4x128xf32>
    %c153 = arith.constant 153 : index
    %67 = memref.load %arg1[%c153] : memref<288xf32, #tpu.memory_space<smem>>
    %68 = vector.broadcast %67 : f32 to vector<4x128xf32>
    %69 = arith.mulf %68, %25 : vector<4x128xf32>
    %70 = arith.addf %66, %69 : vector<4x128xf32>
    %c0_66 = arith.constant 0 : index
    %c1_67 = arith.constant 1 : index
    %c0_68 = arith.constant 0 : index
    %c0_69 = arith.constant 0 : index
    %71 = vector.load %arg4[%c0_66, %c1_67, %c0_68, %c0_69] : memref<4x8x4x128xf32, #tpu.memory_space<vmem>>, vector<1x1x4x128xf32>
    %72 = vector.shape_cast %71 : vector<1x1x4x128xf32> to vector<4x128xf32>
    %73 = vector.shape_cast %70 : vector<4x128xf32> to vector<1x1x4x128xf32>
    tpu.vector_store %arg4[%c0_66, %c1_67, %c0_68, %c0_69], %73 {strides = array<i32>} : memref<4x8x4x128xf32, #tpu.memory_space<vmem>>, vector<1x1x4x128xf32>,
    %c2_70 = arith.constant 2 : index
    %74 = memref.load %arg2[%c2_70] : memref<8xf32, #tpu.memory_space<smem>>
    %75 = vector.broadcast %74 : f32 to vector<4x128xf32>
    %c130 = arith.constant 130 : index
    %76 = memref.load %arg1[%c130] : memref<288xf32, #tpu.memory_space<smem>>
    %77 = vector.broadcast %76 : f32 to vector<4x128xf32>
    %78 = arith.mulf %77, %1 : vector<4x128xf32>
    %79 = arith.addf %75, %78 : vector<4x128xf32>
    %c138 = arith.constant 138 : index
    %80 = memref.load %arg1[%c138] : memref<288xf32, #tpu.memory_space<smem>>
    %81 = vector.broadcast %80 : f32 to vector<4x128xf32>
    %82 = arith.mulf %81, %9 : vector<4x128xf32>
    %83 = arith.addf %79, %82 : vector<4x128xf32>
    %c146 = arith.constant 146 : index
    %84 = memref.load %arg1[%c146] : memref<288xf32, #tpu.memory_space<smem>>
    %85 = vector.broadcast %84 : f32 to vector<4x128xf32>
    %86 = arith.mulf %85, %17 : vector<4x128xf32>
    %87 = arith.addf %83, %86 : vector<4x128xf32>
    %c154 = arith.constant 154 : index
    %88 = memref.load %arg1[%c154] : memref<288xf32, #tpu.memory_space<smem>>
    %89 = vector.broadcast %88 : f32 to vector<4x128xf32>
    %90 = arith.mulf %89, %25 : vector<4x128xf32>
    %91 = arith.addf %87, %90 : vector<4x128xf32>
    %c0_71 = arith.constant 0 : index
    %c2_72 = arith.constant 2 : index
    %c0_73 = arith.constant 0 : index
    %c0_74 = arith.constant 0 : index
    %92 = vector.load %arg4[%c0_71, %c2_72, %c0_73, %c0_74] : memref<4x8x4x128xf32, #tpu.memory_space<vmem>>, vector<1x1x4x128xf32>
    %93 = vector.shape_cast %92 : vector<1x1x4x128xf32> to vector<4x128xf32>
    %94 = vector.shape_cast %91 : vector<4x128xf32> to vector<1x1x4x128xf32>
    tpu.vector_store %arg4[%c0_71, %c2_72, %c0_73, %c0_74], %94 {strides = array<i32>} : memref<4x8x4x128xf32, #tpu.memory_space<vmem>>, vector<1x1x4x128xf32>,
    %c3_75 = arith.constant 3 : index
    %95 = memref.load %arg2[%c3_75] : memref<8xf32, #tpu.memory_space<smem>>
    %96 = vector.broadcast %95 : f32 to vector<4x128xf32>
    %c131 = arith.constant 131 : index
    %97 = memref.load %arg1[%c131] : memref<288xf32, #tpu.memory_space<smem>>
    %98 = vector.broadcast %97 : f32 to vector<4x128xf32>
    %99 = arith.mulf %98, %1 : vector<4x128xf32>
    %100 = arith.addf %96, %99 : vector<4x128xf32>
    %c139 = arith.constant 139 : index
    %101 = memref.load %arg1[%c139] : memref<288xf32, #tpu.memory_space<smem>>
    %102 = vector.broadcast %101 : f32 to vector<4x128xf32>
    %103 = arith.mulf %102, %9 : vector<4x128xf32>
    %104 = arith.addf %100, %103 : vector<4x128xf32>
    %c147 = arith.constant 147 : index
    %105 = memref.load %arg1[%c147] : memref<288xf32, #tpu.memory_space<smem>>
    %106 = vector.broadcast %105 : f32 to vector<4x128xf32>
    %107 = arith.mulf %106, %17 : vector<4x128xf32>
    %108 = arith.addf %104, %107 : vector<4x128xf32>
    %c155 = arith.constant 155 : index
    %109 = memref.load %arg1[%c155] : memref<288xf32, #tpu.memory_space<smem>>
    %110 = vector.broadcast %109 : f32 to vector<4x128xf32>
    %111 = arith.mulf %110, %25 : vector<4x128xf32>
    %112 = arith.addf %108, %111 : vector<4x128xf32>
    %c0_76 = arith.constant 0 : index
    %c3_77 = arith.constant 3 : index
    %c0_78 = arith.constant 0 : index
    %c0_79 = arith.constant 0 : index
    %113 = vector.load %arg4[%c0_76, %c3_77, %c0_78, %c0_79] : memref<4x8x4x128xf32, #tpu.memory_space<vmem>>, vector<1x1x4x128xf32>
    %114 = vector.shape_cast %113 : vector<1x1x4x128xf32> to vector<4x128xf32>
    %115 = vector.shape_cast %112 : vector<4x128xf32> to vector<1x1x4x128xf32>
    tpu.vector_store %arg4[%c0_76, %c3_77, %c0_78, %c0_79], %115 {strides = array<i32>} : memref<4x8x4x128xf32, #tpu.memory_space<vmem>>, vector<1x1x4x128xf32>,
    %c4 = arith.constant 4 : index
    %116 = memref.load %arg2[%c4] : memref<8xf32, #tpu.memory_space<smem>>
    %117 = vector.broadcast %116 : f32 to vector<4x128xf32>
    %c132 = arith.constant 132 : index
    %118 = memref.load %arg1[%c132] : memref<288xf32, #tpu.memory_space<smem>>
    %119 = vector.broadcast %118 : f32 to vector<4x128xf32>
    %120 = arith.mulf %119, %1 : vector<4x128xf32>
    %121 = arith.addf %117, %120 : vector<4x128xf32>
    %c140 = arith.constant 140 : index
    %122 = memref.load %arg1[%c140] : memref<288xf32, #tpu.memory_space<smem>>
    %123 = vector.broadcast %122 : f32 to vector<4x128xf32>
    %124 = arith.mulf %123, %9 : vector<4x128xf32>
    %125 = arith.addf %121, %124 : vector<4x128xf32>
    %c148 = arith.constant 148 : index
    %126 = memref.load %arg1[%c148] : memref<288xf32, #tpu.memory_space<smem>>
    %127 = vector.broadcast %126 : f32 to vector<4x128xf32>
    %128 = arith.mulf %127, %17 : vector<4x128xf32>
    %129 = arith.addf %125, %128 : vector<4x128xf32>
    %c156 = arith.constant 156 : index
    %130 = memref.load %arg1[%c156] : memref<288xf32, #tpu.memory_space<smem>>
    %131 = vector.broadcast %130 : f32 to vector<4x128xf32>
    %132 = arith.mulf %131, %25 : vector<4x128xf32>
    %133 = arith.addf %129, %132 : vector<4x128xf32>
    %c0_80 = arith.constant 0 : index
    %c4_81 = arith.constant 4 : index
    %c0_82 = arith.constant 0 : index
    %c0_83 = arith.constant 0 : index
    %134 = vector.load %arg4[%c0_80, %c4_81, %c0_82, %c0_83] : memref<4x8x4x128xf32, #tpu.memory_space<vmem>>, vector<1x1x4x128xf32>
    %135 = vector.shape_cast %134 : vector<1x1x4x128xf32> to vector<4x128xf32>
    %136 = vector.shape_cast %133 : vector<4x128xf32> to vector<1x1x4x128xf32>
    tpu.vector_store %arg4[%c0_80, %c4_81, %c0_82, %c0_83], %136 {strides = array<i32>} : memref<4x8x4x128xf32, #tpu.memory_space<vmem>>, vector<1x1x4x128xf32>,
    %c5 = arith.constant 5 : index
    %137 = memref.load %arg2[%c5] : memref<8xf32, #tpu.memory_space<smem>>
    %138 = vector.broadcast %137 : f32 to vector<4x128xf32>
    %c133 = arith.constant 133 : index
    %139 = memref.load %arg1[%c133] : memref<288xf32, #tpu.memory_space<smem>>
    %140 = vector.broadcast %139 : f32 to vector<4x128xf32>
    %141 = arith.mulf %140, %1 : vector<4x128xf32>
    %142 = arith.addf %138, %141 : vector<4x128xf32>
    %c141 = arith.constant 141 : index
    %143 = memref.load %arg1[%c141] : memref<288xf32, #tpu.memory_space<smem>>
    %144 = vector.broadcast %143 : f32 to vector<4x128xf32>
    %145 = arith.mulf %144, %9 : vector<4x128xf32>
    %146 = arith.addf %142, %145 : vector<4x128xf32>
    %c149 = arith.constant 149 : index
    %147 = memref.load %arg1[%c149] : memref<288xf32, #tpu.memory_space<smem>>
    %148 = vector.broadcast %147 : f32 to vector<4x128xf32>
    %149 = arith.mulf %148, %17 : vector<4x128xf32>
    %150 = arith.addf %146, %149 : vector<4x128xf32>
    %c157 = arith.constant 157 : index
    %151 = memref.load %arg1[%c157] : memref<288xf32, #tpu.memory_space<smem>>
    %152 = vector.broadcast %151 : f32 to vector<4x128xf32>
    %153 = arith.mulf %152, %25 : vector<4x128xf32>
    %154 = arith.addf %150, %153 : vector<4x128xf32>
    %c0_84 = arith.constant 0 : index
    %c5_85 = arith.constant 5 : index
    %c0_86 = arith.constant 0 : index
    %c0_87 = arith.constant 0 : index
    %155 = vector.load %arg4[%c0_84, %c5_85, %c0_86, %c0_87] : memref<4x8x4x128xf32, #tpu.memory_space<vmem>>, vector<1x1x4x128xf32>
    %156 = vector.shape_cast %155 : vector<1x1x4x128xf32> to vector<4x128xf32>
    %157 = vector.shape_cast %154 : vector<4x128xf32> to vector<1x1x4x128xf32>
    tpu.vector_store %arg4[%c0_84, %c5_85, %c0_86, %c0_87], %157 {strides = array<i32>} : memref<4x8x4x128xf32, #tpu.memory_space<vmem>>, vector<1x1x4x128xf32>,
    %c6 = arith.constant 6 : index
    %158 = memref.load %arg2[%c6] : memref<8xf32, #tpu.memory_space<smem>>
    %159 = vector.broadcast %158 : f32 to vector<4x128xf32>
    %c134 = arith.constant 134 : index
    %160 = memref.load %arg1[%c134] : memref<288xf32, #tpu.memory_space<smem>>
    %161 = vector.broadcast %160 : f32 to vector<4x128xf32>
    %162 = arith.mulf %161, %1 : vector<4x128xf32>
    %163 = arith.addf %159, %162 : vector<4x128xf32>
    %c142 = arith.constant 142 : index
    %164 = memref.load %arg1[%c142] : memref<288xf32, #tpu.memory_space<smem>>
    %165 = vector.broadcast %164 : f32 to vector<4x128xf32>
    %166 = arith.mulf %165, %9 : vector<4x128xf32>
    %167 = arith.addf %163, %166 : vector<4x128xf32>
    %c150 = arith.constant 150 : index
    %168 = memref.load %arg1[%c150] : memref<288xf32, #tpu.memory_space<smem>>
    %169 = vector.broadcast %168 : f32 to vector<4x128xf32>
    %170 = arith.mulf %169, %17 : vector<4x128xf32>
    %171 = arith.addf %167, %170 : vector<4x128xf32>
    %c158 = arith.constant 158 : index
    %172 = memref.load %arg1[%c158] : memref<288xf32, #tpu.memory_space<smem>>
    %173 = vector.broadcast %172 : f32 to vector<4x128xf32>
    %174 = arith.mulf %173, %25 : vector<4x128xf32>
    %175 = arith.addf %171, %174 : vector<4x128xf32>
    %c0_88 = arith.constant 0 : index
    %c6_89 = arith.constant 6 : index
    %c0_90 = arith.constant 0 : index
    %c0_91 = arith.constant 0 : index
    %176 = vector.load %arg4[%c0_88, %c6_89, %c0_90, %c0_91] : memref<4x8x4x128xf32, #tpu.memory_space<vmem>>, vector<1x1x4x128xf32>
    %177 = vector.shape_cast %176 : vector<1x1x4x128xf32> to vector<4x128xf32>
    %178 = vector.shape_cast %175 : vector<4x128xf32> to vector<1x1x4x128xf32>
    tpu.vector_store %arg4[%c0_88, %c6_89, %c0_90, %c0_91], %178 {strides = array<i32>} : memref<4x8x4x128xf32, #tpu.memory_space<vmem>>, vector<1x1x4x128xf32>,
    %c7 = arith.constant 7 : index
    %179 = memref.load %arg2[%c7] : memref<8xf32, #tpu.memory_space<smem>>
    %180 = vector.broadcast %179 : f32 to vector<4x128xf32>
    %c135 = arith.constant 135 : index
    %181 = memref.load %arg1[%c135] : memref<288xf32, #tpu.memory_space<smem>>
    %182 = vector.broadcast %181 : f32 to vector<4x128xf32>
    %183 = arith.mulf %182, %1 : vector<4x128xf32>
    %184 = arith.addf %180, %183 : vector<4x128xf32>
    %c143 = arith.constant 143 : index
    %185 = memref.load %arg1[%c143] : memref<288xf32, #tpu.memory_space<smem>>
    %186 = vector.broadcast %185 : f32 to vector<4x128xf32>
    %187 = arith.mulf %186, %9 : vector<4x128xf32>
    %188 = arith.addf %184, %187 : vector<4x128xf32>
    %c151 = arith.constant 151 : index
    %189 = memref.load %arg1[%c151] : memref<288xf32, #tpu.memory_space<smem>>
    %190 = vector.broadcast %189 : f32 to vector<4x128xf32>
    %191 = arith.mulf %190, %17 : vector<4x128xf32>
    %192 = arith.addf %188, %191 : vector<4x128xf32>
    %c159 = arith.constant 159 : index
    %193 = memref.load %arg1[%c159] : memref<288xf32, #tpu.memory_space<smem>>
    %194 = vector.broadcast %193 : f32 to vector<4x128xf32>
    %195 = arith.mulf %194, %25 : vector<4x128xf32>
    %196 = arith.addf %192, %195 : vector<4x128xf32>
    %c0_92 = arith.constant 0 : index
    %c7_93 = arith.constant 7 : index
    %c0_94 = arith.constant 0 : index
    %c0_95 = arith.constant 0 : index
    %197 = vector.load %arg4[%c0_92, %c7_93, %c0_94, %c0_95] : memref<4x8x4x128xf32, #tpu.memory_space<vmem>>, vector<1x1x4x128xf32>
    %198 = vector.shape_cast %197 : vector<1x1x4x128xf32> to vector<4x128xf32>
    %199 = vector.shape_cast %196 : vector<4x128xf32> to vector<1x1x4x128xf32>
    tpu.vector_store %arg4[%c0_92, %c7_93, %c0_94, %c0_95], %199 {strides = array<i32>} : memref<4x8x4x128xf32, #tpu.memory_space<vmem>>, vector<1x1x4x128xf32>,
    %c0_96 = arith.constant 0 : index
    %200 = memref.load %arg2[%c0_96] : memref<8xf32, #tpu.memory_space<smem>>
    %201 = vector.broadcast %200 : f32 to vector<4x128xf32>
    %c96 = arith.constant 96 : index
    %202 = memref.load %arg1[%c96] : memref<288xf32, #tpu.memory_space<smem>>
    %203 = vector.broadcast %202 : f32 to vector<4x128xf32>
    %204 = arith.mulf %203, %3 : vector<4x128xf32>
    %205 = arith.addf %201, %204 : vector<4x128xf32>
    %c104 = arith.constant 104 : index
    %206 = memref.load %arg1[%c104] : memref<288xf32, #tpu.memory_space<smem>>
    %207 = vector.broadcast %206 : f32 to vector<4x128xf32>
    %208 = arith.mulf %207, %11 : vector<4x128xf32>
    %209 = arith.addf %205, %208 : vector<4x128xf32>
    %c112 = arith.constant 112 : index
    %210 = memref.load %arg1[%c112] : memref<288xf32, #tpu.memory_space<smem>>
    %211 = vector.broadcast %210 : f32 to vector<4x128xf32>
    %212 = arith.mulf %211, %19 : vector<4x128xf32>
    %213 = arith.addf %209, %212 : vector<4x128xf32>
    %c120 = arith.constant 120 : index
    %214 = memref.load %arg1[%c120] : memref<288xf32, #tpu.memory_space<smem>>
    %215 = vector.broadcast %214 : f32 to vector<4x128xf32>
    %216 = arith.mulf %215, %27 : vector<4x128xf32>
    %217 = arith.addf %213, %216 : vector<4x128xf32>
    %c160 = arith.constant 160 : index
    %218 = memref.load %arg1[%c160] : memref<288xf32, #tpu.memory_space<smem>>
    %219 = vector.broadcast %218 : f32 to vector<4x128xf32>
    %220 = arith.mulf %219, %1 : vector<4x128xf32>
    %221 = arith.addf %217, %220 : vector<4x128xf32>
    %c168 = arith.constant 168 : index
    %222 = memref.load %arg1[%c168] : memref<288xf32, #tpu.memory_space<smem>>
    %223 = vector.broadcast %222 : f32 to vector<4x128xf32>
    %224 = arith.mulf %223, %9 : vector<4x128xf32>
    %225 = arith.addf %221, %224 : vector<4x128xf32>
    %c176 = arith.constant 176 : index
    %226 = memref.load %arg1[%c176] : memref<288xf32, #tpu.memory_space<smem>>
    %227 = vector.broadcast %226 : f32 to vector<4x128xf32>
    %228 = arith.mulf %227, %17 : vector<4x128xf32>
    %229 = arith.addf %225, %228 : vector<4x128xf32>
    %c184 = arith.constant 184 : index
    %230 = memref.load %arg1[%c184] : memref<288xf32, #tpu.memory_space<smem>>
    %231 = vector.broadcast %230 : f32 to vector<4x128xf32>
    %232 = arith.mulf %231, %25 : vector<4x128xf32>
    %233 = arith.addf %229, %232 : vector<4x128xf32>
    %c1_97 = arith.constant 1 : index
    %c0_98 = arith.constant 0 : index
    %c0_99 = arith.constant 0 : index
    %c0_100 = arith.constant 0 : index
    %234 = vector.load %arg4[%c1_97, %c0_98, %c0_99, %c0_100] : memref<4x8x4x128xf32, #tpu.memory_space<vmem>>, vector<1x1x4x128xf32>
    %235 = vector.shape_cast %234 : vector<1x1x4x128xf32> to vector<4x128xf32>
    %236 = vector.shape_cast %233 : vector<4x128xf32> to vector<1x1x4x128xf32>
    tpu.vector_store %arg4[%c1_97, %c0_98, %c0_99, %c0_100], %236 {strides = array<i32>} : memref<4x8x4x128xf32, #tpu.memory_space<vmem>>, vector<1x1x4x128xf32>,
    %c1_101 = arith.constant 1 : index
    %237 = memref.load %arg2[%c1_101] : memref<8xf32, #tpu.memory_space<smem>>
    %238 = vector.broadcast %237 : f32 to vector<4x128xf32>
    %c97 = arith.constant 97 : index
    %239 = memref.load %arg1[%c97] : memref<288xf32, #tpu.memory_space<smem>>
    %240 = vector.broadcast %239 : f32 to vector<4x128xf32>
    %241 = arith.mulf %240, %3 : vector<4x128xf32>
    %242 = arith.addf %238, %241 : vector<4x128xf32>
    %c105 = arith.constant 105 : index
    %243 = memref.load %arg1[%c105] : memref<288xf32, #tpu.memory_space<smem>>
    %244 = vector.broadcast %243 : f32 to vector<4x128xf32>
    %245 = arith.mulf %244, %11 : vector<4x128xf32>
    %246 = arith.addf %242, %245 : vector<4x128xf32>
    %c113 = arith.constant 113 : index
    %247 = memref.load %arg1[%c113] : memref<288xf32, #tpu.memory_space<smem>>
    %248 = vector.broadcast %247 : f32 to vector<4x128xf32>
    %249 = arith.mulf %248, %19 : vector<4x128xf32>
    %250 = arith.addf %246, %249 : vector<4x128xf32>
    %c121 = arith.constant 121 : index
    %251 = memref.load %arg1[%c121] : memref<288xf32, #tpu.memory_space<smem>>
    %252 = vector.broadcast %251 : f32 to vector<4x128xf32>
    %253 = arith.mulf %252, %27 : vector<4x128xf32>
    %254 = arith.addf %250, %253 : vector<4x128xf32>
    %c161 = arith.constant 161 : index
    %255 = memref.load %arg1[%c161] : memref<288xf32, #tpu.memory_space<smem>>
    %256 = vector.broadcast %255 : f32 to vector<4x128xf32>
    %257 = arith.mulf %256, %1 : vector<4x128xf32>
    %258 = arith.addf %254, %257 : vector<4x128xf32>
    %c169 = arith.constant 169 : index
    %259 = memref.load %arg1[%c169] : memref<288xf32, #tpu.memory_space<smem>>
    %260 = vector.broadcast %259 : f32 to vector<4x128xf32>
    %261 = arith.mulf %260, %9 : vector<4x128xf32>
    %262 = arith.addf %258, %261 : vector<4x128xf32>
    %c177 = arith.constant 177 : index
    %263 = memref.load %arg1[%c177] : memref<288xf32, #tpu.memory_space<smem>>
    %264 = vector.broadcast %263 : f32 to vector<4x128xf32>
    %265 = arith.mulf %264, %17 : vector<4x128xf32>
    %266 = arith.addf %262, %265 : vector<4x128xf32>
    %c185 = arith.constant 185 : index
    %267 = memref.load %arg1[%c185] : memref<288xf32, #tpu.memory_space<smem>>
    %268 = vector.broadcast %267 : f32 to vector<4x128xf32>
    %269 = arith.mulf %268, %25 : vector<4x128xf32>
    %270 = arith.addf %266, %269 : vector<4x128xf32>
    %c1_102 = arith.constant 1 : index
    %c1_103 = arith.constant 1 : index
    %c0_104 = arith.constant 0 : index
    %c0_105 = arith.constant 0 : index
    %271 = vector.load %arg4[%c1_102, %c1_103, %c0_104, %c0_105] : memref<4x8x4x128xf32, #tpu.memory_space<vmem>>, vector<1x1x4x128xf32>
    %272 = vector.shape_cast %271 : vector<1x1x4x128xf32> to vector<4x128xf32>
    %273 = vector.shape_cast %270 : vector<4x128xf32> to vector<1x1x4x128xf32>
    tpu.vector_store %arg4[%c1_102, %c1_103, %c0_104, %c0_105], %273 {strides = array<i32>} : memref<4x8x4x128xf32, #tpu.memory_space<vmem>>, vector<1x1x4x128xf32>,
    %c2_106 = arith.constant 2 : index
    %274 = memref.load %arg2[%c2_106] : memref<8xf32, #tpu.memory_space<smem>>
    %275 = vector.broadcast %274 : f32 to vector<4x128xf32>
    %c98 = arith.constant 98 : index
    %276 = memref.load %arg1[%c98] : memref<288xf32, #tpu.memory_space<smem>>
    %277 = vector.broadcast %276 : f32 to vector<4x128xf32>
    %278 = arith.mulf %277, %3 : vector<4x128xf32>
    %279 = arith.addf %275, %278 : vector<4x128xf32>
    %c106 = arith.constant 106 : index
    %280 = memref.load %arg1[%c106] : memref<288xf32, #tpu.memory_space<smem>>
    %281 = vector.broadcast %280 : f32 to vector<4x128xf32>
    %282 = arith.mulf %281, %11 : vector<4x128xf32>
    %283 = arith.addf %279, %282 : vector<4x128xf32>
    %c114 = arith.constant 114 : index
    %284 = memref.load %arg1[%c114] : memref<288xf32, #tpu.memory_space<smem>>
    %285 = vector.broadcast %284 : f32 to vector<4x128xf32>
    %286 = arith.mulf %285, %19 : vector<4x128xf32>
    %287 = arith.addf %283, %286 : vector<4x128xf32>
    %c122 = arith.constant 122 : index
    %288 = memref.load %arg1[%c122] : memref<288xf32, #tpu.memory_space<smem>>
    %289 = vector.broadcast %288 : f32 to vector<4x128xf32>
    %290 = arith.mulf %289, %27 : vector<4x128xf32>
    %291 = arith.addf %287, %290 : vector<4x128xf32>
    %c162 = arith.constant 162 : index
    %292 = memref.load %arg1[%c162] : memref<288xf32, #tpu.memory_space<smem>>
    %293 = vector.broadcast %292 : f32 to vector<4x128xf32>
    %294 = arith.mulf %293, %1 : vector<4x128xf32>
    %295 = arith.addf %291, %294 : vector<4x128xf32>
    %c170 = arith.constant 170 : index
    %296 = memref.load %arg1[%c170] : memref<288xf32, #tpu.memory_space<smem>>
    %297 = vector.broadcast %296 : f32 to vector<4x128xf32>
    %298 = arith.mulf %297, %9 : vector<4x128xf32>
    %299 = arith.addf %295, %298 : vector<4x128xf32>
    %c178 = arith.constant 178 : index
    %300 = memref.load %arg1[%c178] : memref<288xf32, #tpu.memory_space<smem>>
    %301 = vector.broadcast %300 : f32 to vector<4x128xf32>
    %302 = arith.mulf %301, %17 : vector<4x128xf32>
    %303 = arith.addf %299, %302 : vector<4x128xf32>
    %c186 = arith.constant 186 : index
    %304 = memref.load %arg1[%c186] : memref<288xf32, #tpu.memory_space<smem>>
    %305 = vector.broadcast %304 : f32 to vector<4x128xf32>
    %306 = arith.mulf %305, %25 : vector<4x128xf32>
    %307 = arith.addf %303, %306 : vector<4x128xf32>
    %c1_107 = arith.constant 1 : index
    %c2_108 = arith.constant 2 : index
    %c0_109 = arith.constant 0 : index
    %c0_110 = arith.constant 0 : index
    %308 = vector.load %arg4[%c1_107, %c2_108, %c0_109, %c0_110] : memref<4x8x4x128xf32, #tpu.memory_space<vmem>>, vector<1x1x4x128xf32>
    %309 = vector.shape_cast %308 : vector<1x1x4x128xf32> to vector<4x128xf32>
    %310 = vector.shape_cast %307 : vector<4x128xf32> to vector<1x1x4x128xf32>
    tpu.vector_store %arg4[%c1_107, %c2_108, %c0_109, %c0_110], %310 {strides = array<i32>} : memref<4x8x4x128xf32, #tpu.memory_space<vmem>>, vector<1x1x4x128xf32>,
    %c3_111 = arith.constant 3 : index
    %311 = memref.load %arg2[%c3_111] : memref<8xf32, #tpu.memory_space<smem>>
    %312 = vector.broadcast %311 : f32 to vector<4x128xf32>
    %c99 = arith.constant 99 : index
    %313 = memref.load %arg1[%c99] : memref<288xf32, #tpu.memory_space<smem>>
    %314 = vector.broadcast %313 : f32 to vector<4x128xf32>
    %315 = arith.mulf %314, %3 : vector<4x128xf32>
    %316 = arith.addf %312, %315 : vector<4x128xf32>
    %c107 = arith.constant 107 : index
    %317 = memref.load %arg1[%c107] : memref<288xf32, #tpu.memory_space<smem>>
    %318 = vector.broadcast %317 : f32 to vector<4x128xf32>
    %319 = arith.mulf %318, %11 : vector<4x128xf32>
    %320 = arith.addf %316, %319 : vector<4x128xf32>
    %c115 = arith.constant 115 : index
    %321 = memref.load %arg1[%c115] : memref<288xf32, #tpu.memory_space<smem>>
    %322 = vector.broadcast %321 : f32 to vector<4x128xf32>
    %323 = arith.mulf %322, %19 : vector<4x128xf32>
    %324 = arith.addf %320, %323 : vector<4x128xf32>
    %c123 = arith.constant 123 : index
    %325 = memref.load %arg1[%c123] : memref<288xf32, #tpu.memory_space<smem>>
    %326 = vector.broadcast %325 : f32 to vector<4x128xf32>
    %327 = arith.mulf %326, %27 : vector<4x128xf32>
    %328 = arith.addf %324, %327 : vector<4x128xf32>
    %c163 = arith.constant 163 : index
    %329 = memref.load %arg1[%c163] : memref<288xf32, #tpu.memory_space<smem>>
    %330 = vector.broadcast %329 : f32 to vector<4x128xf32>
    %331 = arith.mulf %330, %1 : vector<4x128xf32>
    %332 = arith.addf %328, %331 : vector<4x128xf32>
    %c171 = arith.constant 171 : index
    %333 = memref.load %arg1[%c171] : memref<288xf32, #tpu.memory_space<smem>>
    %334 = vector.broadcast %333 : f32 to vector<4x128xf32>
    %335 = arith.mulf %334, %9 : vector<4x128xf32>
    %336 = arith.addf %332, %335 : vector<4x128xf32>
    %c179 = arith.constant 179 : index
    %337 = memref.load %arg1[%c179] : memref<288xf32, #tpu.memory_space<smem>>
    %338 = vector.broadcast %337 : f32 to vector<4x128xf32>
    %339 = arith.mulf %338, %17 : vector<4x128xf32>
    %340 = arith.addf %336, %339 : vector<4x128xf32>
    %c187 = arith.constant 187 : index
    %341 = memref.load %arg1[%c187] : memref<288xf32, #tpu.memory_space<smem>>
    %342 = vector.broadcast %341 : f32 to vector<4x128xf32>
    %343 = arith.mulf %342, %25 : vector<4x128xf32>
    %344 = arith.addf %340, %343 : vector<4x128xf32>
    %c1_112 = arith.constant 1 : index
    %c3_113 = arith.constant 3 : index
    %c0_114 = arith.constant 0 : index
    %c0_115 = arith.constant 0 : index
    %345 = vector.load %arg4[%c1_112, %c3_113, %c0_114, %c0_115] : memref<4x8x4x128xf32, #tpu.memory_space<vmem>>, vector<1x1x4x128xf32>
    %346 = vector.shape_cast %345 : vector<1x1x4x128xf32> to vector<4x128xf32>
    %347 = vector.shape_cast %344 : vector<4x128xf32> to vector<1x1x4x128xf32>
    tpu.vector_store %arg4[%c1_112, %c3_113, %c0_114, %c0_115], %347 {strides = array<i32>} : memref<4x8x4x128xf32, #tpu.memory_space<vmem>>, vector<1x1x4x128xf32>,
    %c4_116 = arith.constant 4 : index
    %348 = memref.load %arg2[%c4_116] : memref<8xf32, #tpu.memory_space<smem>>
    %349 = vector.broadcast %348 : f32 to vector<4x128xf32>
    %c100 = arith.constant 100 : index
    %350 = memref.load %arg1[%c100] : memref<288xf32, #tpu.memory_space<smem>>
    %351 = vector.broadcast %350 : f32 to vector<4x128xf32>
    %352 = arith.mulf %351, %3 : vector<4x128xf32>
    %353 = arith.addf %349, %352 : vector<4x128xf32>
    %c108 = arith.constant 108 : index
    %354 = memref.load %arg1[%c108] : memref<288xf32, #tpu.memory_space<smem>>
    %355 = vector.broadcast %354 : f32 to vector<4x128xf32>
    %356 = arith.mulf %355, %11 : vector<4x128xf32>
    %357 = arith.addf %353, %356 : vector<4x128xf32>
    %c116 = arith.constant 116 : index
    %358 = memref.load %arg1[%c116] : memref<288xf32, #tpu.memory_space<smem>>
    %359 = vector.broadcast %358 : f32 to vector<4x128xf32>
    %360 = arith.mulf %359, %19 : vector<4x128xf32>
    %361 = arith.addf %357, %360 : vector<4x128xf32>
    %c124 = arith.constant 124 : index
    %362 = memref.load %arg1[%c124] : memref<288xf32, #tpu.memory_space<smem>>
    %363 = vector.broadcast %362 : f32 to vector<4x128xf32>
    %364 = arith.mulf %363, %27 : vector<4x128xf32>
    %365 = arith.addf %361, %364 : vector<4x128xf32>
    %c164 = arith.constant 164 : index
    %366 = memref.load %arg1[%c164] : memref<288xf32, #tpu.memory_space<smem>>
    %367 = vector.broadcast %366 : f32 to vector<4x128xf32>
    %368 = arith.mulf %367, %1 : vector<4x128xf32>
    %369 = arith.addf %365, %368 : vector<4x128xf32>
    %c172 = arith.constant 172 : index
    %370 = memref.load %arg1[%c172] : memref<288xf32, #tpu.memory_space<smem>>
    %371 = vector.broadcast %370 : f32 to vector<4x128xf32>
    %372 = arith.mulf %371, %9 : vector<4x128xf32>
    %373 = arith.addf %369, %372 : vector<4x128xf32>
    %c180 = arith.constant 180 : index
    %374 = memref.load %arg1[%c180] : memref<288xf32, #tpu.memory_space<smem>>
    %375 = vector.broadcast %374 : f32 to vector<4x128xf32>
    %376 = arith.mulf %375, %17 : vector<4x128xf32>
    %377 = arith.addf %373, %376 : vector<4x128xf32>
    %c188 = arith.constant 188 : index
    %378 = memref.load %arg1[%c188] : memref<288xf32, #tpu.memory_space<smem>>
    %379 = vector.broadcast %378 : f32 to vector<4x128xf32>
    %380 = arith.mulf %379, %25 : vector<4x128xf32>
    %381 = arith.addf %377, %380 : vector<4x128xf32>
    %c1_117 = arith.constant 1 : index
    %c4_118 = arith.constant 4 : index
    %c0_119 = arith.constant 0 : index
    %c0_120 = arith.constant 0 : index
    %382 = vector.load %arg4[%c1_117, %c4_118, %c0_119, %c0_120] : memref<4x8x4x128xf32, #tpu.memory_space<vmem>>, vector<1x1x4x128xf32>
    %383 = vector.shape_cast %382 : vector<1x1x4x128xf32> to vector<4x128xf32>
    %384 = vector.shape_cast %381 : vector<4x128xf32> to vector<1x1x4x128xf32>
    tpu.vector_store %arg4[%c1_117, %c4_118, %c0_119, %c0_120], %384 {strides = array<i32>} : memref<4x8x4x128xf32, #tpu.memory_space<vmem>>, vector<1x1x4x128xf32>,
    %c5_121 = arith.constant 5 : index
    %385 = memref.load %arg2[%c5_121] : memref<8xf32, #tpu.memory_space<smem>>
    %386 = vector.broadcast %385 : f32 to vector<4x128xf32>
    %c101 = arith.constant 101 : index
    %387 = memref.load %arg1[%c101] : memref<288xf32, #tpu.memory_space<smem>>
    %388 = vector.broadcast %387 : f32 to vector<4x128xf32>
    %389 = arith.mulf %388, %3 : vector<4x128xf32>
    %390 = arith.addf %386, %389 : vector<4x128xf32>
    %c109 = arith.constant 109 : index
    %391 = memref.load %arg1[%c109] : memref<288xf32, #tpu.memory_space<smem>>
    %392 = vector.broadcast %391 : f32 to vector<4x128xf32>
    %393 = arith.mulf %392, %11 : vector<4x128xf32>
    %394 = arith.addf %390, %393 : vector<4x128xf32>
    %c117 = arith.constant 117 : index
    %395 = memref.load %arg1[%c117] : memref<288xf32, #tpu.memory_space<smem>>
    %396 = vector.broadcast %395 : f32 to vector<4x128xf32>
    %397 = arith.mulf %396, %19 : vector<4x128xf32>
    %398 = arith.addf %394, %397 : vector<4x128xf32>
    %c125 = arith.constant 125 : index
    %399 = memref.load %arg1[%c125] : memref<288xf32, #tpu.memory_space<smem>>
    %400 = vector.broadcast %399 : f32 to vector<4x128xf32>
    %401 = arith.mulf %400, %27 : vector<4x128xf32>
    %402 = arith.addf %398, %401 : vector<4x128xf32>
    %c165 = arith.constant 165 : index
    %403 = memref.load %arg1[%c165] : memref<288xf32, #tpu.memory_space<smem>>
    %404 = vector.broadcast %403 : f32 to vector<4x128xf32>
    %405 = arith.mulf %404, %1 : vector<4x128xf32>
    %406 = arith.addf %402, %405 : vector<4x128xf32>
    %c173 = arith.constant 173 : index
    %407 = memref.load %arg1[%c173] : memref<288xf32, #tpu.memory_space<smem>>
    %408 = vector.broadcast %407 : f32 to vector<4x128xf32>
    %409 = arith.mulf %408, %9 : vector<4x128xf32>
    %410 = arith.addf %406, %409 : vector<4x128xf32>
    %c181 = arith.constant 181 : index
    %411 = memref.load %arg1[%c181] : memref<288xf32, #tpu.memory_space<smem>>
    %412 = vector.broadcast %411 : f32 to vector<4x128xf32>
    %413 = arith.mulf %412, %17 : vector<4x128xf32>
    %414 = arith.addf %410, %413 : vector<4x128xf32>
    %c189 = arith.constant 189 : index
    %415 = memref.load %arg1[%c189] : memref<288xf32, #tpu.memory_space<smem>>
    %416 = vector.broadcast %415 : f32 to vector<4x128xf32>
    %417 = arith.mulf %416, %25 : vector<4x128xf32>
    %418 = arith.addf %414, %417 : vector<4x128xf32>
    %c1_122 = arith.constant 1 : index
    %c5_123 = arith.constant 5 : index
    %c0_124 = arith.constant 0 : index
    %c0_125 = arith.constant 0 : index
    %419 = vector.load %arg4[%c1_122, %c5_123, %c0_124, %c0_125] : memref<4x8x4x128xf32, #tpu.memory_space<vmem>>, vector<1x1x4x128xf32>
    %420 = vector.shape_cast %419 : vector<1x1x4x128xf32> to vector<4x128xf32>
    %421 = vector.shape_cast %418 : vector<4x128xf32> to vector<1x1x4x128xf32>
    tpu.vector_store %arg4[%c1_122, %c5_123, %c0_124, %c0_125], %421 {strides = array<i32>} : memref<4x8x4x128xf32, #tpu.memory_space<vmem>>, vector<1x1x4x128xf32>,
    %c6_126 = arith.constant 6 : index
    %422 = memref.load %arg2[%c6_126] : memref<8xf32, #tpu.memory_space<smem>>
    %423 = vector.broadcast %422 : f32 to vector<4x128xf32>
    %c102 = arith.constant 102 : index
    %424 = memref.load %arg1[%c102] : memref<288xf32, #tpu.memory_space<smem>>
    %425 = vector.broadcast %424 : f32 to vector<4x128xf32>
    %426 = arith.mulf %425, %3 : vector<4x128xf32>
    %427 = arith.addf %423, %426 : vector<4x128xf32>
    %c110 = arith.constant 110 : index
    %428 = memref.load %arg1[%c110] : memref<288xf32, #tpu.memory_space<smem>>
    %429 = vector.broadcast %428 : f32 to vector<4x128xf32>
    %430 = arith.mulf %429, %11 : vector<4x128xf32>
    %431 = arith.addf %427, %430 : vector<4x128xf32>
    %c118 = arith.constant 118 : index
    %432 = memref.load %arg1[%c118] : memref<288xf32, #tpu.memory_space<smem>>
    %433 = vector.broadcast %432 : f32 to vector<4x128xf32>
    %434 = arith.mulf %433, %19 : vector<4x128xf32>
    %435 = arith.addf %431, %434 : vector<4x128xf32>
    %c126 = arith.constant 126 : index
    %436 = memref.load %arg1[%c126] : memref<288xf32, #tpu.memory_space<smem>>
    %437 = vector.broadcast %436 : f32 to vector<4x128xf32>
    %438 = arith.mulf %437, %27 : vector<4x128xf32>
    %439 = arith.addf %435, %438 : vector<4x128xf32>
    %c166 = arith.constant 166 : index
    %440 = memref.load %arg1[%c166] : memref<288xf32, #tpu.memory_space<smem>>
    %441 = vector.broadcast %440 : f32 to vector<4x128xf32>
    %442 = arith.mulf %441, %1 : vector<4x128xf32>
    %443 = arith.addf %439, %442 : vector<4x128xf32>
    %c174 = arith.constant 174 : index
    %444 = memref.load %arg1[%c174] : memref<288xf32, #tpu.memory_space<smem>>
    %445 = vector.broadcast %444 : f32 to vector<4x128xf32>
    %446 = arith.mulf %445, %9 : vector<4x128xf32>
    %447 = arith.addf %443, %446 : vector<4x128xf32>
    %c182 = arith.constant 182 : index
    %448 = memref.load %arg1[%c182] : memref<288xf32, #tpu.memory_space<smem>>
    %449 = vector.broadcast %448 : f32 to vector<4x128xf32>
    %450 = arith.mulf %449, %17 : vector<4x128xf32>
    %451 = arith.addf %447, %450 : vector<4x128xf32>
    %c190 = arith.constant 190 : index
    %452 = memref.load %arg1[%c190] : memref<288xf32, #tpu.memory_space<smem>>
    %453 = vector.broadcast %452 : f32 to vector<4x128xf32>
    %454 = arith.mulf %453, %25 : vector<4x128xf32>
    %455 = arith.addf %451, %454 : vector<4x128xf32>
    %c1_127 = arith.constant 1 : index
    %c6_128 = arith.constant 6 : index
    %c0_129 = arith.constant 0 : index
    %c0_130 = arith.constant 0 : index
    %456 = vector.load %arg4[%c1_127, %c6_128, %c0_129, %c0_130] : memref<4x8x4x128xf32, #tpu.memory_space<vmem>>, vector<1x1x4x128xf32>
    %457 = vector.shape_cast %456 : vector<1x1x4x128xf32> to vector<4x128xf32>
    %458 = vector.shape_cast %455 : vector<4x128xf32> to vector<1x1x4x128xf32>
    tpu.vector_store %arg4[%c1_127, %c6_128, %c0_129, %c0_130], %458 {strides = array<i32>} : memref<4x8x4x128xf32, #tpu.memory_space<vmem>>, vector<1x1x4x128xf32>,
    %c7_131 = arith.constant 7 : index
    %459 = memref.load %arg2[%c7_131] : memref<8xf32, #tpu.memory_space<smem>>
    %460 = vector.broadcast %459 : f32 to vector<4x128xf32>
    %c103 = arith.constant 103 : index
    %461 = memref.load %arg1[%c103] : memref<288xf32, #tpu.memory_space<smem>>
    %462 = vector.broadcast %461 : f32 to vector<4x128xf32>
    %463 = arith.mulf %462, %3 : vector<4x128xf32>
    %464 = arith.addf %460, %463 : vector<4x128xf32>
    %c111 = arith.constant 111 : index
    %465 = memref.load %arg1[%c111] : memref<288xf32, #tpu.memory_space<smem>>
    %466 = vector.broadcast %465 : f32 to vector<4x128xf32>
    %467 = arith.mulf %466, %11 : vector<4x128xf32>
    %468 = arith.addf %464, %467 : vector<4x128xf32>
    %c119 = arith.constant 119 : index
    %469 = memref.load %arg1[%c119] : memref<288xf32, #tpu.memory_space<smem>>
    %470 = vector.broadcast %469 : f32 to vector<4x128xf32>
    %471 = arith.mulf %470, %19 : vector<4x128xf32>
    %472 = arith.addf %468, %471 : vector<4x128xf32>
    %c127 = arith.constant 127 : index
    %473 = memref.load %arg1[%c127] : memref<288xf32, #tpu.memory_space<smem>>
    %474 = vector.broadcast %473 : f32 to vector<4x128xf32>
    %475 = arith.mulf %474, %27 : vector<4x128xf32>
    %476 = arith.addf %472, %475 : vector<4x128xf32>
    %c167 = arith.constant 167 : index
    %477 = memref.load %arg1[%c167] : memref<288xf32, #tpu.memory_space<smem>>
    %478 = vector.broadcast %477 : f32 to vector<4x128xf32>
    %479 = arith.mulf %478, %1 : vector<4x128xf32>
    %480 = arith.addf %476, %479 : vector<4x128xf32>
    %c175 = arith.constant 175 : index
    %481 = memref.load %arg1[%c175] : memref<288xf32, #tpu.memory_space<smem>>
    %482 = vector.broadcast %481 : f32 to vector<4x128xf32>
    %483 = arith.mulf %482, %9 : vector<4x128xf32>
    %484 = arith.addf %480, %483 : vector<4x128xf32>
    %c183 = arith.constant 183 : index
    %485 = memref.load %arg1[%c183] : memref<288xf32, #tpu.memory_space<smem>>
    %486 = vector.broadcast %485 : f32 to vector<4x128xf32>
    %487 = arith.mulf %486, %17 : vector<4x128xf32>
    %488 = arith.addf %484, %487 : vector<4x128xf32>
    %c191 = arith.constant 191 : index
    %489 = memref.load %arg1[%c191] : memref<288xf32, #tpu.memory_space<smem>>
    %490 = vector.broadcast %489 : f32 to vector<4x128xf32>
    %491 = arith.mulf %490, %25 : vector<4x128xf32>
    %492 = arith.addf %488, %491 : vector<4x128xf32>
    %c1_132 = arith.constant 1 : index
    %c7_133 = arith.constant 7 : index
    %c0_134 = arith.constant 0 : index
    %c0_135 = arith.constant 0 : index
    %493 = vector.load %arg4[%c1_132, %c7_133, %c0_134, %c0_135] : memref<4x8x4x128xf32, #tpu.memory_space<vmem>>, vector<1x1x4x128xf32>
    %494 = vector.shape_cast %493 : vector<1x1x4x128xf32> to vector<4x128xf32>
    %495 = vector.shape_cast %492 : vector<4x128xf32> to vector<1x1x4x128xf32>
    tpu.vector_store %arg4[%c1_132, %c7_133, %c0_134, %c0_135], %495 {strides = array<i32>} : memref<4x8x4x128xf32, #tpu.memory_space<vmem>>, vector<1x1x4x128xf32>,
    %c0_136 = arith.constant 0 : index
    %496 = memref.load %arg2[%c0_136] : memref<8xf32, #tpu.memory_space<smem>>
    %497 = vector.broadcast %496 : f32 to vector<4x128xf32>
    %c32 = arith.constant 32 : index
    %498 = memref.load %arg1[%c32] : memref<288xf32, #tpu.memory_space<smem>>
    %499 = vector.broadcast %498 : f32 to vector<4x128xf32>
    %500 = arith.mulf %499, %5 : vector<4x128xf32>
    %501 = arith.addf %497, %500 : vector<4x128xf32>
    %c40 = arith.constant 40 : index
    %502 = memref.load %arg1[%c40] : memref<288xf32, #tpu.memory_space<smem>>
    %503 = vector.broadcast %502 : f32 to vector<4x128xf32>
    %504 = arith.mulf %503, %13 : vector<4x128xf32>
    %505 = arith.addf %501, %504 : vector<4x128xf32>
    %c48 = arith.constant 48 : index
    %506 = memref.load %arg1[%c48] : memref<288xf32, #tpu.memory_space<smem>>
    %507 = vector.broadcast %506 : f32 to vector<4x128xf32>
    %508 = arith.mulf %507, %21 : vector<4x128xf32>
    %509 = arith.addf %505, %508 : vector<4x128xf32>
    %c56 = arith.constant 56 : index
    %510 = memref.load %arg1[%c56] : memref<288xf32, #tpu.memory_space<smem>>
    %511 = vector.broadcast %510 : f32 to vector<4x128xf32>
    %512 = arith.mulf %511, %29 : vector<4x128xf32>
    %513 = arith.addf %509, %512 : vector<4x128xf32>
    %c224 = arith.constant 224 : index
    %514 = memref.load %arg1[%c224] : memref<288xf32, #tpu.memory_space<smem>>
    %515 = vector.broadcast %514 : f32 to vector<4x128xf32>
    %516 = arith.mulf %515, %1 : vector<4x128xf32>
    %517 = arith.addf %513, %516 : vector<4x128xf32>
    %c232 = arith.constant 232 : index
    %518 = memref.load %arg1[%c232] : memref<288xf32, #tpu.memory_space<smem>>
    %519 = vector.broadcast %518 : f32 to vector<4x128xf32>
    %520 = arith.mulf %519, %9 : vector<4x128xf32>
    %521 = arith.addf %517, %520 : vector<4x128xf32>
    %c240 = arith.constant 240 : index
    %522 = memref.load %arg1[%c240] : memref<288xf32, #tpu.memory_space<smem>>
    %523 = vector.broadcast %522 : f32 to vector<4x128xf32>
    %524 = arith.mulf %523, %17 : vector<4x128xf32>
    %525 = arith.addf %521, %524 : vector<4x128xf32>
    %c248 = arith.constant 248 : index
    %526 = memref.load %arg1[%c248] : memref<288xf32, #tpu.memory_space<smem>>
    %527 = vector.broadcast %526 : f32 to vector<4x128xf32>
    %528 = arith.mulf %527, %25 : vector<4x128xf32>
    %529 = arith.addf %525, %528 : vector<4x128xf32>
    %c2_137 = arith.constant 2 : index
    %c0_138 = arith.constant 0 : index
    %c0_139 = arith.constant 0 : index
    %c0_140 = arith.constant 0 : index
    %530 = vector.load %arg4[%c2_137, %c0_138, %c0_139, %c0_140] : memref<4x8x4x128xf32, #tpu.memory_space<vmem>>, vector<1x1x4x128xf32>
    %531 = vector.shape_cast %530 : vector<1x1x4x128xf32> to vector<4x128xf32>
    %532 = vector.shape_cast %529 : vector<4x128xf32> to vector<1x1x4x128xf32>
    tpu.vector_store %arg4[%c2_137, %c0_138, %c0_139, %c0_140], %532 {strides = array<i32>} : memref<4x8x4x128xf32, #tpu.memory_space<vmem>>, vector<1x1x4x128xf32>,
    %c1_141 = arith.constant 1 : index
    %533 = memref.load %arg2[%c1_141] : memref<8xf32, #tpu.memory_space<smem>>
    %534 = vector.broadcast %533 : f32 to vector<4x128xf32>
    %c33 = arith.constant 33 : index
    %535 = memref.load %arg1[%c33] : memref<288xf32, #tpu.memory_space<smem>>
    %536 = vector.broadcast %535 : f32 to vector<4x128xf32>
    %537 = arith.mulf %536, %5 : vector<4x128xf32>
    %538 = arith.addf %534, %537 : vector<4x128xf32>
    %c41 = arith.constant 41 : index
    %539 = memref.load %arg1[%c41] : memref<288xf32, #tpu.memory_space<smem>>
    %540 = vector.broadcast %539 : f32 to vector<4x128xf32>
    %541 = arith.mulf %540, %13 : vector<4x128xf32>
    %542 = arith.addf %538, %541 : vector<4x128xf32>
    %c49 = arith.constant 49 : index
    %543 = memref.load %arg1[%c49] : memref<288xf32, #tpu.memory_space<smem>>
    %544 = vector.broadcast %543 : f32 to vector<4x128xf32>
    %545 = arith.mulf %544, %21 : vector<4x128xf32>
    %546 = arith.addf %542, %545 : vector<4x128xf32>
    %c57 = arith.constant 57 : index
    %547 = memref.load %arg1[%c57] : memref<288xf32, #tpu.memory_space<smem>>
    %548 = vector.broadcast %547 : f32 to vector<4x128xf32>
    %549 = arith.mulf %548, %29 : vector<4x128xf32>
    %550 = arith.addf %546, %549 : vector<4x128xf32>
    %c225 = arith.constant 225 : index
    %551 = memref.load %arg1[%c225] : memref<288xf32, #tpu.memory_space<smem>>
    %552 = vector.broadcast %551 : f32 to vector<4x128xf32>
    %553 = arith.mulf %552, %1 : vector<4x128xf32>
    %554 = arith.addf %550, %553 : vector<4x128xf32>
    %c233 = arith.constant 233 : index
    %555 = memref.load %arg1[%c233] : memref<288xf32, #tpu.memory_space<smem>>
    %556 = vector.broadcast %555 : f32 to vector<4x128xf32>
    %557 = arith.mulf %556, %9 : vector<4x128xf32>
    %558 = arith.addf %554, %557 : vector<4x128xf32>
    %c241 = arith.constant 241 : index
    %559 = memref.load %arg1[%c241] : memref<288xf32, #tpu.memory_space<smem>>
    %560 = vector.broadcast %559 : f32 to vector<4x128xf32>
    %561 = arith.mulf %560, %17 : vector<4x128xf32>
    %562 = arith.addf %558, %561 : vector<4x128xf32>
    %c249 = arith.constant 249 : index
    %563 = memref.load %arg1[%c249] : memref<288xf32, #tpu.memory_space<smem>>
    %564 = vector.broadcast %563 : f32 to vector<4x128xf32>
    %565 = arith.mulf %564, %25 : vector<4x128xf32>
    %566 = arith.addf %562, %565 : vector<4x128xf32>
    %c2_142 = arith.constant 2 : index
    %c1_143 = arith.constant 1 : index
    %c0_144 = arith.constant 0 : index
    %c0_145 = arith.constant 0 : index
    %567 = vector.load %arg4[%c2_142, %c1_143, %c0_144, %c0_145] : memref<4x8x4x128xf32, #tpu.memory_space<vmem>>, vector<1x1x4x128xf32>
    %568 = vector.shape_cast %567 : vector<1x1x4x128xf32> to vector<4x128xf32>
    %569 = vector.shape_cast %566 : vector<4x128xf32> to vector<1x1x4x128xf32>
    tpu.vector_store %arg4[%c2_142, %c1_143, %c0_144, %c0_145], %569 {strides = array<i32>} : memref<4x8x4x128xf32, #tpu.memory_space<vmem>>, vector<1x1x4x128xf32>,
    %c2_146 = arith.constant 2 : index
    %570 = memref.load %arg2[%c2_146] : memref<8xf32, #tpu.memory_space<smem>>
    %571 = vector.broadcast %570 : f32 to vector<4x128xf32>
    %c34 = arith.constant 34 : index
    %572 = memref.load %arg1[%c34] : memref<288xf32, #tpu.memory_space<smem>>
    %573 = vector.broadcast %572 : f32 to vector<4x128xf32>
    %574 = arith.mulf %573, %5 : vector<4x128xf32>
    %575 = arith.addf %571, %574 : vector<4x128xf32>
    %c42 = arith.constant 42 : index
    %576 = memref.load %arg1[%c42] : memref<288xf32, #tpu.memory_space<smem>>
    %577 = vector.broadcast %576 : f32 to vector<4x128xf32>
    %578 = arith.mulf %577, %13 : vector<4x128xf32>
    %579 = arith.addf %575, %578 : vector<4x128xf32>
    %c50 = arith.constant 50 : index
    %580 = memref.load %arg1[%c50] : memref<288xf32, #tpu.memory_space<smem>>
    %581 = vector.broadcast %580 : f32 to vector<4x128xf32>
    %582 = arith.mulf %581, %21 : vector<4x128xf32>
    %583 = arith.addf %579, %582 : vector<4x128xf32>
    %c58 = arith.constant 58 : index
    %584 = memref.load %arg1[%c58] : memref<288xf32, #tpu.memory_space<smem>>
    %585 = vector.broadcast %584 : f32 to vector<4x128xf32>
    %586 = arith.mulf %585, %29 : vector<4x128xf32>
    %587 = arith.addf %583, %586 : vector<4x128xf32>
    %c226 = arith.constant 226 : index
    %588 = memref.load %arg1[%c226] : memref<288xf32, #tpu.memory_space<smem>>
    %589 = vector.broadcast %588 : f32 to vector<4x128xf32>
    %590 = arith.mulf %589, %1 : vector<4x128xf32>
    %591 = arith.addf %587, %590 : vector<4x128xf32>
    %c234 = arith.constant 234 : index
    %592 = memref.load %arg1[%c234] : memref<288xf32, #tpu.memory_space<smem>>
    %593 = vector.broadcast %592 : f32 to vector<4x128xf32>
    %594 = arith.mulf %593, %9 : vector<4x128xf32>
    %595 = arith.addf %591, %594 : vector<4x128xf32>
    %c242 = arith.constant 242 : index
    %596 = memref.load %arg1[%c242] : memref<288xf32, #tpu.memory_space<smem>>
    %597 = vector.broadcast %596 : f32 to vector<4x128xf32>
    %598 = arith.mulf %597, %17 : vector<4x128xf32>
    %599 = arith.addf %595, %598 : vector<4x128xf32>
    %c250 = arith.constant 250 : index
    %600 = memref.load %arg1[%c250] : memref<288xf32, #tpu.memory_space<smem>>
    %601 = vector.broadcast %600 : f32 to vector<4x128xf32>
    %602 = arith.mulf %601, %25 : vector<4x128xf32>
    %603 = arith.addf %599, %602 : vector<4x128xf32>
    %c2_147 = arith.constant 2 : index
    %c2_148 = arith.constant 2 : index
    %c0_149 = arith.constant 0 : index
    %c0_150 = arith.constant 0 : index
    %604 = vector.load %arg4[%c2_147, %c2_148, %c0_149, %c0_150] : memref<4x8x4x128xf32, #tpu.memory_space<vmem>>, vector<1x1x4x128xf32>
    %605 = vector.shape_cast %604 : vector<1x1x4x128xf32> to vector<4x128xf32>
    %606 = vector.shape_cast %603 : vector<4x128xf32> to vector<1x1x4x128xf32>
    tpu.vector_store %arg4[%c2_147, %c2_148, %c0_149, %c0_150], %606 {strides = array<i32>} : memref<4x8x4x128xf32, #tpu.memory_space<vmem>>, vector<1x1x4x128xf32>,
    %c3_151 = arith.constant 3 : index
    %607 = memref.load %arg2[%c3_151] : memref<8xf32, #tpu.memory_space<smem>>
    %608 = vector.broadcast %607 : f32 to vector<4x128xf32>
    %c35 = arith.constant 35 : index
    %609 = memref.load %arg1[%c35] : memref<288xf32, #tpu.memory_space<smem>>
    %610 = vector.broadcast %609 : f32 to vector<4x128xf32>
    %611 = arith.mulf %610, %5 : vector<4x128xf32>
    %612 = arith.addf %608, %611 : vector<4x128xf32>
    %c43 = arith.constant 43 : index
    %613 = memref.load %arg1[%c43] : memref<288xf32, #tpu.memory_space<smem>>
    %614 = vector.broadcast %613 : f32 to vector<4x128xf32>
    %615 = arith.mulf %614, %13 : vector<4x128xf32>
    %616 = arith.addf %612, %615 : vector<4x128xf32>
    %c51 = arith.constant 51 : index
    %617 = memref.load %arg1[%c51] : memref<288xf32, #tpu.memory_space<smem>>
    %618 = vector.broadcast %617 : f32 to vector<4x128xf32>
    %619 = arith.mulf %618, %21 : vector<4x128xf32>
    %620 = arith.addf %616, %619 : vector<4x128xf32>
    %c59 = arith.constant 59 : index
    %621 = memref.load %arg1[%c59] : memref<288xf32, #tpu.memory_space<smem>>
    %622 = vector.broadcast %621 : f32 to vector<4x128xf32>
    %623 = arith.mulf %622, %29 : vector<4x128xf32>
    %624 = arith.addf %620, %623 : vector<4x128xf32>
    %c227 = arith.constant 227 : index
    %625 = memref.load %arg1[%c227] : memref<288xf32, #tpu.memory_space<smem>>
    %626 = vector.broadcast %625 : f32 to vector<4x128xf32>
    %627 = arith.mulf %626, %1 : vector<4x128xf32>
    %628 = arith.addf %624, %627 : vector<4x128xf32>
    %c235 = arith.constant 235 : index
    %629 = memref.load %arg1[%c235] : memref<288xf32, #tpu.memory_space<smem>>
    %630 = vector.broadcast %629 : f32 to vector<4x128xf32>
    %631 = arith.mulf %630, %9 : vector<4x128xf32>
    %632 = arith.addf %628, %631 : vector<4x128xf32>
    %c243 = arith.constant 243 : index
    %633 = memref.load %arg1[%c243] : memref<288xf32, #tpu.memory_space<smem>>
    %634 = vector.broadcast %633 : f32 to vector<4x128xf32>
    %635 = arith.mulf %634, %17 : vector<4x128xf32>
    %636 = arith.addf %632, %635 : vector<4x128xf32>
    %c251 = arith.constant 251 : index
    %637 = memref.load %arg1[%c251] : memref<288xf32, #tpu.memory_space<smem>>
    %638 = vector.broadcast %637 : f32 to vector<4x128xf32>
    %639 = arith.mulf %638, %25 : vector<4x128xf32>
    %640 = arith.addf %636, %639 : vector<4x128xf32>
    %c2_152 = arith.constant 2 : index
    %c3_153 = arith.constant 3 : index
    %c0_154 = arith.constant 0 : index
    %c0_155 = arith.constant 0 : index
    %641 = vector.load %arg4[%c2_152, %c3_153, %c0_154, %c0_155] : memref<4x8x4x128xf32, #tpu.memory_space<vmem>>, vector<1x1x4x128xf32>
    %642 = vector.shape_cast %641 : vector<1x1x4x128xf32> to vector<4x128xf32>
    %643 = vector.shape_cast %640 : vector<4x128xf32> to vector<1x1x4x128xf32>
    tpu.vector_store %arg4[%c2_152, %c3_153, %c0_154, %c0_155], %643 {strides = array<i32>} : memref<4x8x4x128xf32, #tpu.memory_space<vmem>>, vector<1x1x4x128xf32>,
    %c4_156 = arith.constant 4 : index
    %644 = memref.load %arg2[%c4_156] : memref<8xf32, #tpu.memory_space<smem>>
    %645 = vector.broadcast %644 : f32 to vector<4x128xf32>
    %c36 = arith.constant 36 : index
    %646 = memref.load %arg1[%c36] : memref<288xf32, #tpu.memory_space<smem>>
    %647 = vector.broadcast %646 : f32 to vector<4x128xf32>
    %648 = arith.mulf %647, %5 : vector<4x128xf32>
    %649 = arith.addf %645, %648 : vector<4x128xf32>
    %c44 = arith.constant 44 : index
    %650 = memref.load %arg1[%c44] : memref<288xf32, #tpu.memory_space<smem>>
    %651 = vector.broadcast %650 : f32 to vector<4x128xf32>
    %652 = arith.mulf %651, %13 : vector<4x128xf32>
    %653 = arith.addf %649, %652 : vector<4x128xf32>
    %c52 = arith.constant 52 : index
    %654 = memref.load %arg1[%c52] : memref<288xf32, #tpu.memory_space<smem>>
    %655 = vector.broadcast %654 : f32 to vector<4x128xf32>
    %656 = arith.mulf %655, %21 : vector<4x128xf32>
    %657 = arith.addf %653, %656 : vector<4x128xf32>
    %c60 = arith.constant 60 : index
    %658 = memref.load %arg1[%c60] : memref<288xf32, #tpu.memory_space<smem>>
    %659 = vector.broadcast %658 : f32 to vector<4x128xf32>
    %660 = arith.mulf %659, %29 : vector<4x128xf32>
    %661 = arith.addf %657, %660 : vector<4x128xf32>
    %c228 = arith.constant 228 : index
    %662 = memref.load %arg1[%c228] : memref<288xf32, #tpu.memory_space<smem>>
    %663 = vector.broadcast %662 : f32 to vector<4x128xf32>
    %664 = arith.mulf %663, %1 : vector<4x128xf32>
    %665 = arith.addf %661, %664 : vector<4x128xf32>
    %c236 = arith.constant 236 : index
    %666 = memref.load %arg1[%c236] : memref<288xf32, #tpu.memory_space<smem>>
    %667 = vector.broadcast %666 : f32 to vector<4x128xf32>
    %668 = arith.mulf %667, %9 : vector<4x128xf32>
    %669 = arith.addf %665, %668 : vector<4x128xf32>
    %c244 = arith.constant 244 : index
    %670 = memref.load %arg1[%c244] : memref<288xf32, #tpu.memory_space<smem>>
    %671 = vector.broadcast %670 : f32 to vector<4x128xf32>
    %672 = arith.mulf %671, %17 : vector<4x128xf32>
    %673 = arith.addf %669, %672 : vector<4x128xf32>
    %c252 = arith.constant 252 : index
    %674 = memref.load %arg1[%c252] : memref<288xf32, #tpu.memory_space<smem>>
    %675 = vector.broadcast %674 : f32 to vector<4x128xf32>
    %676 = arith.mulf %675, %25 : vector<4x128xf32>
    %677 = arith.addf %673, %676 : vector<4x128xf32>
    %c2_157 = arith.constant 2 : index
    %c4_158 = arith.constant 4 : index
    %c0_159 = arith.constant 0 : index
    %c0_160 = arith.constant 0 : index
    %678 = vector.load %arg4[%c2_157, %c4_158, %c0_159, %c0_160] : memref<4x8x4x128xf32, #tpu.memory_space<vmem>>, vector<1x1x4x128xf32>
    %679 = vector.shape_cast %678 : vector<1x1x4x128xf32> to vector<4x128xf32>
    %680 = vector.shape_cast %677 : vector<4x128xf32> to vector<1x1x4x128xf32>
    tpu.vector_store %arg4[%c2_157, %c4_158, %c0_159, %c0_160], %680 {strides = array<i32>} : memref<4x8x4x128xf32, #tpu.memory_space<vmem>>, vector<1x1x4x128xf32>,
    %c5_161 = arith.constant 5 : index
    %681 = memref.load %arg2[%c5_161] : memref<8xf32, #tpu.memory_space<smem>>
    %682 = vector.broadcast %681 : f32 to vector<4x128xf32>
    %c37 = arith.constant 37 : index
    %683 = memref.load %arg1[%c37] : memref<288xf32, #tpu.memory_space<smem>>
    %684 = vector.broadcast %683 : f32 to vector<4x128xf32>
    %685 = arith.mulf %684, %5 : vector<4x128xf32>
    %686 = arith.addf %682, %685 : vector<4x128xf32>
    %c45 = arith.constant 45 : index
    %687 = memref.load %arg1[%c45] : memref<288xf32, #tpu.memory_space<smem>>
    %688 = vector.broadcast %687 : f32 to vector<4x128xf32>
    %689 = arith.mulf %688, %13 : vector<4x128xf32>
    %690 = arith.addf %686, %689 : vector<4x128xf32>
    %c53 = arith.constant 53 : index
    %691 = memref.load %arg1[%c53] : memref<288xf32, #tpu.memory_space<smem>>
    %692 = vector.broadcast %691 : f32 to vector<4x128xf32>
    %693 = arith.mulf %692, %21 : vector<4x128xf32>
    %694 = arith.addf %690, %693 : vector<4x128xf32>
    %c61 = arith.constant 61 : index
    %695 = memref.load %arg1[%c61] : memref<288xf32, #tpu.memory_space<smem>>
    %696 = vector.broadcast %695 : f32 to vector<4x128xf32>
    %697 = arith.mulf %696, %29 : vector<4x128xf32>
    %698 = arith.addf %694, %697 : vector<4x128xf32>
    %c229 = arith.constant 229 : index
    %699 = memref.load %arg1[%c229] : memref<288xf32, #tpu.memory_space<smem>>
    %700 = vector.broadcast %699 : f32 to vector<4x128xf32>
    %701 = arith.mulf %700, %1 : vector<4x128xf32>
    %702 = arith.addf %698, %701 : vector<4x128xf32>
    %c237 = arith.constant 237 : index
    %703 = memref.load %arg1[%c237] : memref<288xf32, #tpu.memory_space<smem>>
    %704 = vector.broadcast %703 : f32 to vector<4x128xf32>
    %705 = arith.mulf %704, %9 : vector<4x128xf32>
    %706 = arith.addf %702, %705 : vector<4x128xf32>
    %c245 = arith.constant 245 : index
    %707 = memref.load %arg1[%c245] : memref<288xf32, #tpu.memory_space<smem>>
    %708 = vector.broadcast %707 : f32 to vector<4x128xf32>
    %709 = arith.mulf %708, %17 : vector<4x128xf32>
    %710 = arith.addf %706, %709 : vector<4x128xf32>
    %c253 = arith.constant 253 : index
    %711 = memref.load %arg1[%c253] : memref<288xf32, #tpu.memory_space<smem>>
    %712 = vector.broadcast %711 : f32 to vector<4x128xf32>
    %713 = arith.mulf %712, %25 : vector<4x128xf32>
    %714 = arith.addf %710, %713 : vector<4x128xf32>
    %c2_162 = arith.constant 2 : index
    %c5_163 = arith.constant 5 : index
    %c0_164 = arith.constant 0 : index
    %c0_165 = arith.constant 0 : index
    %715 = vector.load %arg4[%c2_162, %c5_163, %c0_164, %c0_165] : memref<4x8x4x128xf32, #tpu.memory_space<vmem>>, vector<1x1x4x128xf32>
    %716 = vector.shape_cast %715 : vector<1x1x4x128xf32> to vector<4x128xf32>
    %717 = vector.shape_cast %714 : vector<4x128xf32> to vector<1x1x4x128xf32>
    tpu.vector_store %arg4[%c2_162, %c5_163, %c0_164, %c0_165], %717 {strides = array<i32>} : memref<4x8x4x128xf32, #tpu.memory_space<vmem>>, vector<1x1x4x128xf32>,
    %c6_166 = arith.constant 6 : index
    %718 = memref.load %arg2[%c6_166] : memref<8xf32, #tpu.memory_space<smem>>
    %719 = vector.broadcast %718 : f32 to vector<4x128xf32>
    %c38 = arith.constant 38 : index
    %720 = memref.load %arg1[%c38] : memref<288xf32, #tpu.memory_space<smem>>
    %721 = vector.broadcast %720 : f32 to vector<4x128xf32>
    %722 = arith.mulf %721, %5 : vector<4x128xf32>
    %723 = arith.addf %719, %722 : vector<4x128xf32>
    %c46 = arith.constant 46 : index
    %724 = memref.load %arg1[%c46] : memref<288xf32, #tpu.memory_space<smem>>
    %725 = vector.broadcast %724 : f32 to vector<4x128xf32>
    %726 = arith.mulf %725, %13 : vector<4x128xf32>
    %727 = arith.addf %723, %726 : vector<4x128xf32>
    %c54 = arith.constant 54 : index
    %728 = memref.load %arg1[%c54] : memref<288xf32, #tpu.memory_space<smem>>
    %729 = vector.broadcast %728 : f32 to vector<4x128xf32>
    %730 = arith.mulf %729, %21 : vector<4x128xf32>
    %731 = arith.addf %727, %730 : vector<4x128xf32>
    %c62 = arith.constant 62 : index
    %732 = memref.load %arg1[%c62] : memref<288xf32, #tpu.memory_space<smem>>
    %733 = vector.broadcast %732 : f32 to vector<4x128xf32>
    %734 = arith.mulf %733, %29 : vector<4x128xf32>
    %735 = arith.addf %731, %734 : vector<4x128xf32>
    %c230 = arith.constant 230 : index
    %736 = memref.load %arg1[%c230] : memref<288xf32, #tpu.memory_space<smem>>
    %737 = vector.broadcast %736 : f32 to vector<4x128xf32>
    %738 = arith.mulf %737, %1 : vector<4x128xf32>
    %739 = arith.addf %735, %738 : vector<4x128xf32>
    %c238 = arith.constant 238 : index
    %740 = memref.load %arg1[%c238] : memref<288xf32, #tpu.memory_space<smem>>
    %741 = vector.broadcast %740 : f32 to vector<4x128xf32>
    %742 = arith.mulf %741, %9 : vector<4x128xf32>
    %743 = arith.addf %739, %742 : vector<4x128xf32>
    %c246 = arith.constant 246 : index
    %744 = memref.load %arg1[%c246] : memref<288xf32, #tpu.memory_space<smem>>
    %745 = vector.broadcast %744 : f32 to vector<4x128xf32>
    %746 = arith.mulf %745, %17 : vector<4x128xf32>
    %747 = arith.addf %743, %746 : vector<4x128xf32>
    %c254 = arith.constant 254 : index
    %748 = memref.load %arg1[%c254] : memref<288xf32, #tpu.memory_space<smem>>
    %749 = vector.broadcast %748 : f32 to vector<4x128xf32>
    %750 = arith.mulf %749, %25 : vector<4x128xf32>
    %751 = arith.addf %747, %750 : vector<4x128xf32>
    %c2_167 = arith.constant 2 : index
    %c6_168 = arith.constant 6 : index
    %c0_169 = arith.constant 0 : index
    %c0_170 = arith.constant 0 : index
    %752 = vector.load %arg4[%c2_167, %c6_168, %c0_169, %c0_170] : memref<4x8x4x128xf32, #tpu.memory_space<vmem>>, vector<1x1x4x128xf32>
    %753 = vector.shape_cast %752 : vector<1x1x4x128xf32> to vector<4x128xf32>
    %754 = vector.shape_cast %751 : vector<4x128xf32> to vector<1x1x4x128xf32>
    tpu.vector_store %arg4[%c2_167, %c6_168, %c0_169, %c0_170], %754 {strides = array<i32>} : memref<4x8x4x128xf32, #tpu.memory_space<vmem>>, vector<1x1x4x128xf32>,
    %c7_171 = arith.constant 7 : index
    %755 = memref.load %arg2[%c7_171] : memref<8xf32, #tpu.memory_space<smem>>
    %756 = vector.broadcast %755 : f32 to vector<4x128xf32>
    %c39 = arith.constant 39 : index
    %757 = memref.load %arg1[%c39] : memref<288xf32, #tpu.memory_space<smem>>
    %758 = vector.broadcast %757 : f32 to vector<4x128xf32>
    %759 = arith.mulf %758, %5 : vector<4x128xf32>
    %760 = arith.addf %756, %759 : vector<4x128xf32>
    %c47 = arith.constant 47 : index
    %761 = memref.load %arg1[%c47] : memref<288xf32, #tpu.memory_space<smem>>
    %762 = vector.broadcast %761 : f32 to vector<4x128xf32>
    %763 = arith.mulf %762, %13 : vector<4x128xf32>
    %764 = arith.addf %760, %763 : vector<4x128xf32>
    %c55 = arith.constant 55 : index
    %765 = memref.load %arg1[%c55] : memref<288xf32, #tpu.memory_space<smem>>
    %766 = vector.broadcast %765 : f32 to vector<4x128xf32>
    %767 = arith.mulf %766, %21 : vector<4x128xf32>
    %768 = arith.addf %764, %767 : vector<4x128xf32>
    %c63 = arith.constant 63 : index
    %769 = memref.load %arg1[%c63] : memref<288xf32, #tpu.memory_space<smem>>
    %770 = vector.broadcast %769 : f32 to vector<4x128xf32>
    %771 = arith.mulf %770, %29 : vector<4x128xf32>
    %772 = arith.addf %768, %771 : vector<4x128xf32>
    %c231 = arith.constant 231 : index
    %773 = memref.load %arg1[%c231] : memref<288xf32, #tpu.memory_space<smem>>
    %774 = vector.broadcast %773 : f32 to vector<4x128xf32>
    %775 = arith.mulf %774, %1 : vector<4x128xf32>
    %776 = arith.addf %772, %775 : vector<4x128xf32>
    %c239 = arith.constant 239 : index
    %777 = memref.load %arg1[%c239] : memref<288xf32, #tpu.memory_space<smem>>
    %778 = vector.broadcast %777 : f32 to vector<4x128xf32>
    %779 = arith.mulf %778, %9 : vector<4x128xf32>
    %780 = arith.addf %776, %779 : vector<4x128xf32>
    %c247 = arith.constant 247 : index
    %781 = memref.load %arg1[%c247] : memref<288xf32, #tpu.memory_space<smem>>
    %782 = vector.broadcast %781 : f32 to vector<4x128xf32>
    %783 = arith.mulf %782, %17 : vector<4x128xf32>
    %784 = arith.addf %780, %783 : vector<4x128xf32>
    %c255 = arith.constant 255 : index
    %785 = memref.load %arg1[%c255] : memref<288xf32, #tpu.memory_space<smem>>
    %786 = vector.broadcast %785 : f32 to vector<4x128xf32>
    %787 = arith.mulf %786, %25 : vector<4x128xf32>
    %788 = arith.addf %784, %787 : vector<4x128xf32>
    %c2_172 = arith.constant 2 : index
    %c7_173 = arith.constant 7 : index
    %c0_174 = arith.constant 0 : index
    %c0_175 = arith.constant 0 : index
    %789 = vector.load %arg4[%c2_172, %c7_173, %c0_174, %c0_175] : memref<4x8x4x128xf32, #tpu.memory_space<vmem>>, vector<1x1x4x128xf32>
    %790 = vector.shape_cast %789 : vector<1x1x4x128xf32> to vector<4x128xf32>
    %791 = vector.shape_cast %788 : vector<4x128xf32> to vector<1x1x4x128xf32>
    tpu.vector_store %arg4[%c2_172, %c7_173, %c0_174, %c0_175], %791 {strides = array<i32>} : memref<4x8x4x128xf32, #tpu.memory_space<vmem>>, vector<1x1x4x128xf32>,
    %c0_176 = arith.constant 0 : index
    %792 = memref.load %arg2[%c0_176] : memref<8xf32, #tpu.memory_space<smem>>
    %793 = vector.broadcast %792 : f32 to vector<4x128xf32>
    %c0_177 = arith.constant 0 : index
    %794 = memref.load %arg1[%c0_177] : memref<288xf32, #tpu.memory_space<smem>>
    %795 = vector.broadcast %794 : f32 to vector<4x128xf32>
    %796 = arith.mulf %795, %7 : vector<4x128xf32>
    %797 = arith.addf %793, %796 : vector<4x128xf32>
    %c8 = arith.constant 8 : index
    %798 = memref.load %arg1[%c8] : memref<288xf32, #tpu.memory_space<smem>>
    %799 = vector.broadcast %798 : f32 to vector<4x128xf32>
    %800 = arith.mulf %799, %15 : vector<4x128xf32>
    %801 = arith.addf %797, %800 : vector<4x128xf32>
    %c16 = arith.constant 16 : index
    %802 = memref.load %arg1[%c16] : memref<288xf32, #tpu.memory_space<smem>>
    %803 = vector.broadcast %802 : f32 to vector<4x128xf32>
    %804 = arith.mulf %803, %23 : vector<4x128xf32>
    %805 = arith.addf %801, %804 : vector<4x128xf32>
    %c24 = arith.constant 24 : index
    %806 = memref.load %arg1[%c24] : memref<288xf32, #tpu.memory_space<smem>>
    %807 = vector.broadcast %806 : f32 to vector<4x128xf32>
    %808 = arith.mulf %807, %31 : vector<4x128xf32>
    %809 = arith.addf %805, %808 : vector<4x128xf32>
    %c64 = arith.constant 64 : index
    %810 = memref.load %arg1[%c64] : memref<288xf32, #tpu.memory_space<smem>>
    %811 = vector.broadcast %810 : f32 to vector<4x128xf32>
    %812 = arith.mulf %811, %5 : vector<4x128xf32>
    %813 = arith.addf %809, %812 : vector<4x128xf32>
    %c72 = arith.constant 72 : index
    %814 = memref.load %arg1[%c72] : memref<288xf32, #tpu.memory_space<smem>>
    %815 = vector.broadcast %814 : f32 to vector<4x128xf32>
    %816 = arith.mulf %815, %13 : vector<4x128xf32>
    %817 = arith.addf %813, %816 : vector<4x128xf32>
    %c80 = arith.constant 80 : index
    %818 = memref.load %arg1[%c80] : memref<288xf32, #tpu.memory_space<smem>>
    %819 = vector.broadcast %818 : f32 to vector<4x128xf32>
    %820 = arith.mulf %819, %21 : vector<4x128xf32>
    %821 = arith.addf %817, %820 : vector<4x128xf32>
    %c88 = arith.constant 88 : index
    %822 = memref.load %arg1[%c88] : memref<288xf32, #tpu.memory_space<smem>>
    %823 = vector.broadcast %822 : f32 to vector<4x128xf32>
    %824 = arith.mulf %823, %29 : vector<4x128xf32>
    %825 = arith.addf %821, %824 : vector<4x128xf32>
    %c192 = arith.constant 192 : index
    %826 = memref.load %arg1[%c192] : memref<288xf32, #tpu.memory_space<smem>>
    %827 = vector.broadcast %826 : f32 to vector<4x128xf32>
    %828 = arith.mulf %827, %3 : vector<4x128xf32>
    %829 = arith.addf %825, %828 : vector<4x128xf32>
    %c200 = arith.constant 200 : index
    %830 = memref.load %arg1[%c200] : memref<288xf32, #tpu.memory_space<smem>>
    %831 = vector.broadcast %830 : f32 to vector<4x128xf32>
    %832 = arith.mulf %831, %11 : vector<4x128xf32>
    %833 = arith.addf %829, %832 : vector<4x128xf32>
    %c208 = arith.constant 208 : index
    %834 = memref.load %arg1[%c208] : memref<288xf32, #tpu.memory_space<smem>>
    %835 = vector.broadcast %834 : f32 to vector<4x128xf32>
    %836 = arith.mulf %835, %19 : vector<4x128xf32>
    %837 = arith.addf %833, %836 : vector<4x128xf32>
    %c216 = arith.constant 216 : index
    %838 = memref.load %arg1[%c216] : memref<288xf32, #tpu.memory_space<smem>>
    %839 = vector.broadcast %838 : f32 to vector<4x128xf32>
    %840 = arith.mulf %839, %27 : vector<4x128xf32>
    %841 = arith.addf %837, %840 : vector<4x128xf32>
    %c256 = arith.constant 256 : index
    %842 = memref.load %arg1[%c256] : memref<288xf32, #tpu.memory_space<smem>>
    %843 = vector.broadcast %842 : f32 to vector<4x128xf32>
    %844 = arith.mulf %843, %1 : vector<4x128xf32>
    %845 = arith.addf %841, %844 : vector<4x128xf32>
    %c264 = arith.constant 264 : index
    %846 = memref.load %arg1[%c264] : memref<288xf32, #tpu.memory_space<smem>>
    %847 = vector.broadcast %846 : f32 to vector<4x128xf32>
    %848 = arith.mulf %847, %9 : vector<4x128xf32>
    %849 = arith.addf %845, %848 : vector<4x128xf32>
    %c272 = arith.constant 272 : index
    %850 = memref.load %arg1[%c272] : memref<288xf32, #tpu.memory_space<smem>>
    %851 = vector.broadcast %850 : f32 to vector<4x128xf32>
    %852 = arith.mulf %851, %17 : vector<4x128xf32>
    %853 = arith.addf %849, %852 : vector<4x128xf32>
    %c280 = arith.constant 280 : index
    %854 = memref.load %arg1[%c280] : memref<288xf32, #tpu.memory_space<smem>>
    %855 = vector.broadcast %854 : f32 to vector<4x128xf32>
    %856 = arith.mulf %855, %25 : vector<4x128xf32>
    %857 = arith.addf %853, %856 : vector<4x128xf32>
    %c3_178 = arith.constant 3 : index
    %c0_179 = arith.constant 0 : index
    %c0_180 = arith.constant 0 : index
    %c0_181 = arith.constant 0 : index
    %858 = vector.load %arg4[%c3_178, %c0_179, %c0_180, %c0_181] : memref<4x8x4x128xf32, #tpu.memory_space<vmem>>, vector<1x1x4x128xf32>
    %859 = vector.shape_cast %858 : vector<1x1x4x128xf32> to vector<4x128xf32>
    %860 = vector.shape_cast %857 : vector<4x128xf32> to vector<1x1x4x128xf32>
    tpu.vector_store %arg4[%c3_178, %c0_179, %c0_180, %c0_181], %860 {strides = array<i32>} : memref<4x8x4x128xf32, #tpu.memory_space<vmem>>, vector<1x1x4x128xf32>,
    %c1_182 = arith.constant 1 : index
    %861 = memref.load %arg2[%c1_182] : memref<8xf32, #tpu.memory_space<smem>>
    %862 = vector.broadcast %861 : f32 to vector<4x128xf32>
    %c1_183 = arith.constant 1 : index
    %863 = memref.load %arg1[%c1_183] : memref<288xf32, #tpu.memory_space<smem>>
    %864 = vector.broadcast %863 : f32 to vector<4x128xf32>
    %865 = arith.mulf %864, %7 : vector<4x128xf32>
    %866 = arith.addf %862, %865 : vector<4x128xf32>
    %c9 = arith.constant 9 : index
    %867 = memref.load %arg1[%c9] : memref<288xf32, #tpu.memory_space<smem>>
    %868 = vector.broadcast %867 : f32 to vector<4x128xf32>
    %869 = arith.mulf %868, %15 : vector<4x128xf32>
    %870 = arith.addf %866, %869 : vector<4x128xf32>
    %c17 = arith.constant 17 : index
    %871 = memref.load %arg1[%c17] : memref<288xf32, #tpu.memory_space<smem>>
    %872 = vector.broadcast %871 : f32 to vector<4x128xf32>
    %873 = arith.mulf %872, %23 : vector<4x128xf32>
    %874 = arith.addf %870, %873 : vector<4x128xf32>
    %c25 = arith.constant 25 : index
    %875 = memref.load %arg1[%c25] : memref<288xf32, #tpu.memory_space<smem>>
    %876 = vector.broadcast %875 : f32 to vector<4x128xf32>
    %877 = arith.mulf %876, %31 : vector<4x128xf32>
    %878 = arith.addf %874, %877 : vector<4x128xf32>
    %c65 = arith.constant 65 : index
    %879 = memref.load %arg1[%c65] : memref<288xf32, #tpu.memory_space<smem>>
    %880 = vector.broadcast %879 : f32 to vector<4x128xf32>
    %881 = arith.mulf %880, %5 : vector<4x128xf32>
    %882 = arith.addf %878, %881 : vector<4x128xf32>
    %c73 = arith.constant 73 : index
    %883 = memref.load %arg1[%c73] : memref<288xf32, #tpu.memory_space<smem>>
    %884 = vector.broadcast %883 : f32 to vector<4x128xf32>
    %885 = arith.mulf %884, %13 : vector<4x128xf32>
    %886 = arith.addf %882, %885 : vector<4x128xf32>
    %c81 = arith.constant 81 : index
    %887 = memref.load %arg1[%c81] : memref<288xf32, #tpu.memory_space<smem>>
    %888 = vector.broadcast %887 : f32 to vector<4x128xf32>
    %889 = arith.mulf %888, %21 : vector<4x128xf32>
    %890 = arith.addf %886, %889 : vector<4x128xf32>
    %c89 = arith.constant 89 : index
    %891 = memref.load %arg1[%c89] : memref<288xf32, #tpu.memory_space<smem>>
    %892 = vector.broadcast %891 : f32 to vector<4x128xf32>
    %893 = arith.mulf %892, %29 : vector<4x128xf32>
    %894 = arith.addf %890, %893 : vector<4x128xf32>
    %c193 = arith.constant 193 : index
    %895 = memref.load %arg1[%c193] : memref<288xf32, #tpu.memory_space<smem>>
    %896 = vector.broadcast %895 : f32 to vector<4x128xf32>
    %897 = arith.mulf %896, %3 : vector<4x128xf32>
    %898 = arith.addf %894, %897 : vector<4x128xf32>
    %c201 = arith.constant 201 : index
    %899 = memref.load %arg1[%c201] : memref<288xf32, #tpu.memory_space<smem>>
    %900 = vector.broadcast %899 : f32 to vector<4x128xf32>
    %901 = arith.mulf %900, %11 : vector<4x128xf32>
    %902 = arith.addf %898, %901 : vector<4x128xf32>
    %c209 = arith.constant 209 : index
    %903 = memref.load %arg1[%c209] : memref<288xf32, #tpu.memory_space<smem>>
    %904 = vector.broadcast %903 : f32 to vector<4x128xf32>
    %905 = arith.mulf %904, %19 : vector<4x128xf32>
    %906 = arith.addf %902, %905 : vector<4x128xf32>
    %c217 = arith.constant 217 : index
    %907 = memref.load %arg1[%c217] : memref<288xf32, #tpu.memory_space<smem>>
    %908 = vector.broadcast %907 : f32 to vector<4x128xf32>
    %909 = arith.mulf %908, %27 : vector<4x128xf32>
    %910 = arith.addf %906, %909 : vector<4x128xf32>
    %c257 = arith.constant 257 : index
    %911 = memref.load %arg1[%c257] : memref<288xf32, #tpu.memory_space<smem>>
    %912 = vector.broadcast %911 : f32 to vector<4x128xf32>
    %913 = arith.mulf %912, %1 : vector<4x128xf32>
    %914 = arith.addf %910, %913 : vector<4x128xf32>
    %c265 = arith.constant 265 : index
    %915 = memref.load %arg1[%c265] : memref<288xf32, #tpu.memory_space<smem>>
    %916 = vector.broadcast %915 : f32 to vector<4x128xf32>
    %917 = arith.mulf %916, %9 : vector<4x128xf32>
    %918 = arith.addf %914, %917 : vector<4x128xf32>
    %c273 = arith.constant 273 : index
    %919 = memref.load %arg1[%c273] : memref<288xf32, #tpu.memory_space<smem>>
    %920 = vector.broadcast %919 : f32 to vector<4x128xf32>
    %921 = arith.mulf %920, %17 : vector<4x128xf32>
    %922 = arith.addf %918, %921 : vector<4x128xf32>
    %c281 = arith.constant 281 : index
    %923 = memref.load %arg1[%c281] : memref<288xf32, #tpu.memory_space<smem>>
    %924 = vector.broadcast %923 : f32 to vector<4x128xf32>
    %925 = arith.mulf %924, %25 : vector<4x128xf32>
    %926 = arith.addf %922, %925 : vector<4x128xf32>
    %c3_184 = arith.constant 3 : index
    %c1_185 = arith.constant 1 : index
    %c0_186 = arith.constant 0 : index
    %c0_187 = arith.constant 0 : index
    %927 = vector.load %arg4[%c3_184, %c1_185, %c0_186, %c0_187] : memref<4x8x4x128xf32, #tpu.memory_space<vmem>>, vector<1x1x4x128xf32>
    %928 = vector.shape_cast %927 : vector<1x1x4x128xf32> to vector<4x128xf32>
    %929 = vector.shape_cast %926 : vector<4x128xf32> to vector<1x1x4x128xf32>
    tpu.vector_store %arg4[%c3_184, %c1_185, %c0_186, %c0_187], %929 {strides = array<i32>} : memref<4x8x4x128xf32, #tpu.memory_space<vmem>>, vector<1x1x4x128xf32>,
    %c2_188 = arith.constant 2 : index
    %930 = memref.load %arg2[%c2_188] : memref<8xf32, #tpu.memory_space<smem>>
    %931 = vector.broadcast %930 : f32 to vector<4x128xf32>
    %c2_189 = arith.constant 2 : index
    %932 = memref.load %arg1[%c2_189] : memref<288xf32, #tpu.memory_space<smem>>
    %933 = vector.broadcast %932 : f32 to vector<4x128xf32>
    %934 = arith.mulf %933, %7 : vector<4x128xf32>
    %935 = arith.addf %931, %934 : vector<4x128xf32>
    %c10 = arith.constant 10 : index
    %936 = memref.load %arg1[%c10] : memref<288xf32, #tpu.memory_space<smem>>
    %937 = vector.broadcast %936 : f32 to vector<4x128xf32>
    %938 = arith.mulf %937, %15 : vector<4x128xf32>
    %939 = arith.addf %935, %938 : vector<4x128xf32>
    %c18 = arith.constant 18 : index
    %940 = memref.load %arg1[%c18] : memref<288xf32, #tpu.memory_space<smem>>
    %941 = vector.broadcast %940 : f32 to vector<4x128xf32>
    %942 = arith.mulf %941, %23 : vector<4x128xf32>
    %943 = arith.addf %939, %942 : vector<4x128xf32>
    %c26 = arith.constant 26 : index
    %944 = memref.load %arg1[%c26] : memref<288xf32, #tpu.memory_space<smem>>
    %945 = vector.broadcast %944 : f32 to vector<4x128xf32>
    %946 = arith.mulf %945, %31 : vector<4x128xf32>
    %947 = arith.addf %943, %946 : vector<4x128xf32>
    %c66 = arith.constant 66 : index
    %948 = memref.load %arg1[%c66] : memref<288xf32, #tpu.memory_space<smem>>
    %949 = vector.broadcast %948 : f32 to vector<4x128xf32>
    %950 = arith.mulf %949, %5 : vector<4x128xf32>
    %951 = arith.addf %947, %950 : vector<4x128xf32>
    %c74 = arith.constant 74 : index
    %952 = memref.load %arg1[%c74] : memref<288xf32, #tpu.memory_space<smem>>
    %953 = vector.broadcast %952 : f32 to vector<4x128xf32>
    %954 = arith.mulf %953, %13 : vector<4x128xf32>
    %955 = arith.addf %951, %954 : vector<4x128xf32>
    %c82 = arith.constant 82 : index
    %956 = memref.load %arg1[%c82] : memref<288xf32, #tpu.memory_space<smem>>
    %957 = vector.broadcast %956 : f32 to vector<4x128xf32>
    %958 = arith.mulf %957, %21 : vector<4x128xf32>
    %959 = arith.addf %955, %958 : vector<4x128xf32>
    %c90 = arith.constant 90 : index
    %960 = memref.load %arg1[%c90] : memref<288xf32, #tpu.memory_space<smem>>
    %961 = vector.broadcast %960 : f32 to vector<4x128xf32>
    %962 = arith.mulf %961, %29 : vector<4x128xf32>
    %963 = arith.addf %959, %962 : vector<4x128xf32>
    %c194 = arith.constant 194 : index
    %964 = memref.load %arg1[%c194] : memref<288xf32, #tpu.memory_space<smem>>
    %965 = vector.broadcast %964 : f32 to vector<4x128xf32>
    %966 = arith.mulf %965, %3 : vector<4x128xf32>
    %967 = arith.addf %963, %966 : vector<4x128xf32>
    %c202 = arith.constant 202 : index
    %968 = memref.load %arg1[%c202] : memref<288xf32, #tpu.memory_space<smem>>
    %969 = vector.broadcast %968 : f32 to vector<4x128xf32>
    %970 = arith.mulf %969, %11 : vector<4x128xf32>
    %971 = arith.addf %967, %970 : vector<4x128xf32>
    %c210 = arith.constant 210 : index
    %972 = memref.load %arg1[%c210] : memref<288xf32, #tpu.memory_space<smem>>
    %973 = vector.broadcast %972 : f32 to vector<4x128xf32>
    %974 = arith.mulf %973, %19 : vector<4x128xf32>
    %975 = arith.addf %971, %974 : vector<4x128xf32>
    %c218 = arith.constant 218 : index
    %976 = memref.load %arg1[%c218] : memref<288xf32, #tpu.memory_space<smem>>
    %977 = vector.broadcast %976 : f32 to vector<4x128xf32>
    %978 = arith.mulf %977, %27 : vector<4x128xf32>
    %979 = arith.addf %975, %978 : vector<4x128xf32>
    %c258 = arith.constant 258 : index
    %980 = memref.load %arg1[%c258] : memref<288xf32, #tpu.memory_space<smem>>
    %981 = vector.broadcast %980 : f32 to vector<4x128xf32>
    %982 = arith.mulf %981, %1 : vector<4x128xf32>
    %983 = arith.addf %979, %982 : vector<4x128xf32>
    %c266 = arith.constant 266 : index
    %984 = memref.load %arg1[%c266] : memref<288xf32, #tpu.memory_space<smem>>
    %985 = vector.broadcast %984 : f32 to vector<4x128xf32>
    %986 = arith.mulf %985, %9 : vector<4x128xf32>
    %987 = arith.addf %983, %986 : vector<4x128xf32>
    %c274 = arith.constant 274 : index
    %988 = memref.load %arg1[%c274] : memref<288xf32, #tpu.memory_space<smem>>
    %989 = vector.broadcast %988 : f32 to vector<4x128xf32>
    %990 = arith.mulf %989, %17 : vector<4x128xf32>
    %991 = arith.addf %987, %990 : vector<4x128xf32>
    %c282 = arith.constant 282 : index
    %992 = memref.load %arg1[%c282] : memref<288xf32, #tpu.memory_space<smem>>
    %993 = vector.broadcast %992 : f32 to vector<4x128xf32>
    %994 = arith.mulf %993, %25 : vector<4x128xf32>
    %995 = arith.addf %991, %994 : vector<4x128xf32>
    %c3_190 = arith.constant 3 : index
    %c2_191 = arith.constant 2 : index
    %c0_192 = arith.constant 0 : index
    %c0_193 = arith.constant 0 : index
    %996 = vector.load %arg4[%c3_190, %c2_191, %c0_192, %c0_193] : memref<4x8x4x128xf32, #tpu.memory_space<vmem>>, vector<1x1x4x128xf32>
    %997 = vector.shape_cast %996 : vector<1x1x4x128xf32> to vector<4x128xf32>
    %998 = vector.shape_cast %995 : vector<4x128xf32> to vector<1x1x4x128xf32>
    tpu.vector_store %arg4[%c3_190, %c2_191, %c0_192, %c0_193], %998 {strides = array<i32>} : memref<4x8x4x128xf32, #tpu.memory_space<vmem>>, vector<1x1x4x128xf32>,
    %c3_194 = arith.constant 3 : index
    %999 = memref.load %arg2[%c3_194] : memref<8xf32, #tpu.memory_space<smem>>
    %1000 = vector.broadcast %999 : f32 to vector<4x128xf32>
    %c3_195 = arith.constant 3 : index
    %1001 = memref.load %arg1[%c3_195] : memref<288xf32, #tpu.memory_space<smem>>
    %1002 = vector.broadcast %1001 : f32 to vector<4x128xf32>
    %1003 = arith.mulf %1002, %7 : vector<4x128xf32>
    %1004 = arith.addf %1000, %1003 : vector<4x128xf32>
    %c11 = arith.constant 11 : index
    %1005 = memref.load %arg1[%c11] : memref<288xf32, #tpu.memory_space<smem>>
    %1006 = vector.broadcast %1005 : f32 to vector<4x128xf32>
    %1007 = arith.mulf %1006, %15 : vector<4x128xf32>
    %1008 = arith.addf %1004, %1007 : vector<4x128xf32>
    %c19 = arith.constant 19 : index
    %1009 = memref.load %arg1[%c19] : memref<288xf32, #tpu.memory_space<smem>>
    %1010 = vector.broadcast %1009 : f32 to vector<4x128xf32>
    %1011 = arith.mulf %1010, %23 : vector<4x128xf32>
    %1012 = arith.addf %1008, %1011 : vector<4x128xf32>
    %c27 = arith.constant 27 : index
    %1013 = memref.load %arg1[%c27] : memref<288xf32, #tpu.memory_space<smem>>
    %1014 = vector.broadcast %1013 : f32 to vector<4x128xf32>
    %1015 = arith.mulf %1014, %31 : vector<4x128xf32>
    %1016 = arith.addf %1012, %1015 : vector<4x128xf32>
    %c67 = arith.constant 67 : index
    %1017 = memref.load %arg1[%c67] : memref<288xf32, #tpu.memory_space<smem>>
    %1018 = vector.broadcast %1017 : f32 to vector<4x128xf32>
    %1019 = arith.mulf %1018, %5 : vector<4x128xf32>
    %1020 = arith.addf %1016, %1019 : vector<4x128xf32>
    %c75 = arith.constant 75 : index
    %1021 = memref.load %arg1[%c75] : memref<288xf32, #tpu.memory_space<smem>>
    %1022 = vector.broadcast %1021 : f32 to vector<4x128xf32>
    %1023 = arith.mulf %1022, %13 : vector<4x128xf32>
    %1024 = arith.addf %1020, %1023 : vector<4x128xf32>
    %c83 = arith.constant 83 : index
    %1025 = memref.load %arg1[%c83] : memref<288xf32, #tpu.memory_space<smem>>
    %1026 = vector.broadcast %1025 : f32 to vector<4x128xf32>
    %1027 = arith.mulf %1026, %21 : vector<4x128xf32>
    %1028 = arith.addf %1024, %1027 : vector<4x128xf32>
    %c91 = arith.constant 91 : index
    %1029 = memref.load %arg1[%c91] : memref<288xf32, #tpu.memory_space<smem>>
    %1030 = vector.broadcast %1029 : f32 to vector<4x128xf32>
    %1031 = arith.mulf %1030, %29 : vector<4x128xf32>
    %1032 = arith.addf %1028, %1031 : vector<4x128xf32>
    %c195 = arith.constant 195 : index
    %1033 = memref.load %arg1[%c195] : memref<288xf32, #tpu.memory_space<smem>>
    %1034 = vector.broadcast %1033 : f32 to vector<4x128xf32>
    %1035 = arith.mulf %1034, %3 : vector<4x128xf32>
    %1036 = arith.addf %1032, %1035 : vector<4x128xf32>
    %c203 = arith.constant 203 : index
    %1037 = memref.load %arg1[%c203] : memref<288xf32, #tpu.memory_space<smem>>
    %1038 = vector.broadcast %1037 : f32 to vector<4x128xf32>
    %1039 = arith.mulf %1038, %11 : vector<4x128xf32>
    %1040 = arith.addf %1036, %1039 : vector<4x128xf32>
    %c211 = arith.constant 211 : index
    %1041 = memref.load %arg1[%c211] : memref<288xf32, #tpu.memory_space<smem>>
    %1042 = vector.broadcast %1041 : f32 to vector<4x128xf32>
    %1043 = arith.mulf %1042, %19 : vector<4x128xf32>
    %1044 = arith.addf %1040, %1043 : vector<4x128xf32>
    %c219 = arith.constant 219 : index
    %1045 = memref.load %arg1[%c219] : memref<288xf32, #tpu.memory_space<smem>>
    %1046 = vector.broadcast %1045 : f32 to vector<4x128xf32>
    %1047 = arith.mulf %1046, %27 : vector<4x128xf32>
    %1048 = arith.addf %1044, %1047 : vector<4x128xf32>
    %c259 = arith.constant 259 : index
    %1049 = memref.load %arg1[%c259] : memref<288xf32, #tpu.memory_space<smem>>
    %1050 = vector.broadcast %1049 : f32 to vector<4x128xf32>
    %1051 = arith.mulf %1050, %1 : vector<4x128xf32>
    %1052 = arith.addf %1048, %1051 : vector<4x128xf32>
    %c267 = arith.constant 267 : index
    %1053 = memref.load %arg1[%c267] : memref<288xf32, #tpu.memory_space<smem>>
    %1054 = vector.broadcast %1053 : f32 to vector<4x128xf32>
    %1055 = arith.mulf %1054, %9 : vector<4x128xf32>
    %1056 = arith.addf %1052, %1055 : vector<4x128xf32>
    %c275 = arith.constant 275 : index
    %1057 = memref.load %arg1[%c275] : memref<288xf32, #tpu.memory_space<smem>>
    %1058 = vector.broadcast %1057 : f32 to vector<4x128xf32>
    %1059 = arith.mulf %1058, %17 : vector<4x128xf32>
    %1060 = arith.addf %1056, %1059 : vector<4x128xf32>
    %c283 = arith.constant 283 : index
    %1061 = memref.load %arg1[%c283] : memref<288xf32, #tpu.memory_space<smem>>
    %1062 = vector.broadcast %1061 : f32 to vector<4x128xf32>
    %1063 = arith.mulf %1062, %25 : vector<4x128xf32>
    %1064 = arith.addf %1060, %1063 : vector<4x128xf32>
    %c3_196 = arith.constant 3 : index
    %c3_197 = arith.constant 3 : index
    %c0_198 = arith.constant 0 : index
    %c0_199 = arith.constant 0 : index
    %1065 = vector.load %arg4[%c3_196, %c3_197, %c0_198, %c0_199] : memref<4x8x4x128xf32, #tpu.memory_space<vmem>>, vector<1x1x4x128xf32>
    %1066 = vector.shape_cast %1065 : vector<1x1x4x128xf32> to vector<4x128xf32>
    %1067 = vector.shape_cast %1064 : vector<4x128xf32> to vector<1x1x4x128xf32>
    tpu.vector_store %arg4[%c3_196, %c3_197, %c0_198, %c0_199], %1067 {strides = array<i32>} : memref<4x8x4x128xf32, #tpu.memory_space<vmem>>, vector<1x1x4x128xf32>,
    %c4_200 = arith.constant 4 : index
    %1068 = memref.load %arg2[%c4_200] : memref<8xf32, #tpu.memory_space<smem>>
    %1069 = vector.broadcast %1068 : f32 to vector<4x128xf32>
    %c4_201 = arith.constant 4 : index
    %1070 = memref.load %arg1[%c4_201] : memref<288xf32, #tpu.memory_space<smem>>
    %1071 = vector.broadcast %1070 : f32 to vector<4x128xf32>
    %1072 = arith.mulf %1071, %7 : vector<4x128xf32>
    %1073 = arith.addf %1069, %1072 : vector<4x128xf32>
    %c12 = arith.constant 12 : index
    %1074 = memref.load %arg1[%c12] : memref<288xf32, #tpu.memory_space<smem>>
    %1075 = vector.broadcast %1074 : f32 to vector<4x128xf32>
    %1076 = arith.mulf %1075, %15 : vector<4x128xf32>
    %1077 = arith.addf %1073, %1076 : vector<4x128xf32>
    %c20 = arith.constant 20 : index
    %1078 = memref.load %arg1[%c20] : memref<288xf32, #tpu.memory_space<smem>>
    %1079 = vector.broadcast %1078 : f32 to vector<4x128xf32>
    %1080 = arith.mulf %1079, %23 : vector<4x128xf32>
    %1081 = arith.addf %1077, %1080 : vector<4x128xf32>
    %c28 = arith.constant 28 : index
    %1082 = memref.load %arg1[%c28] : memref<288xf32, #tpu.memory_space<smem>>
    %1083 = vector.broadcast %1082 : f32 to vector<4x128xf32>
    %1084 = arith.mulf %1083, %31 : vector<4x128xf32>
    %1085 = arith.addf %1081, %1084 : vector<4x128xf32>
    %c68 = arith.constant 68 : index
    %1086 = memref.load %arg1[%c68] : memref<288xf32, #tpu.memory_space<smem>>
    %1087 = vector.broadcast %1086 : f32 to vector<4x128xf32>
    %1088 = arith.mulf %1087, %5 : vector<4x128xf32>
    %1089 = arith.addf %1085, %1088 : vector<4x128xf32>
    %c76 = arith.constant 76 : index
    %1090 = memref.load %arg1[%c76] : memref<288xf32, #tpu.memory_space<smem>>
    %1091 = vector.broadcast %1090 : f32 to vector<4x128xf32>
    %1092 = arith.mulf %1091, %13 : vector<4x128xf32>
    %1093 = arith.addf %1089, %1092 : vector<4x128xf32>
    %c84 = arith.constant 84 : index
    %1094 = memref.load %arg1[%c84] : memref<288xf32, #tpu.memory_space<smem>>
    %1095 = vector.broadcast %1094 : f32 to vector<4x128xf32>
    %1096 = arith.mulf %1095, %21 : vector<4x128xf32>
    %1097 = arith.addf %1093, %1096 : vector<4x128xf32>
    %c92 = arith.constant 92 : index
    %1098 = memref.load %arg1[%c92] : memref<288xf32, #tpu.memory_space<smem>>
    %1099 = vector.broadcast %1098 : f32 to vector<4x128xf32>
    %1100 = arith.mulf %1099, %29 : vector<4x128xf32>
    %1101 = arith.addf %1097, %1100 : vector<4x128xf32>
    %c196 = arith.constant 196 : index
    %1102 = memref.load %arg1[%c196] : memref<288xf32, #tpu.memory_space<smem>>
    %1103 = vector.broadcast %1102 : f32 to vector<4x128xf32>
    %1104 = arith.mulf %1103, %3 : vector<4x128xf32>
    %1105 = arith.addf %1101, %1104 : vector<4x128xf32>
    %c204 = arith.constant 204 : index
    %1106 = memref.load %arg1[%c204] : memref<288xf32, #tpu.memory_space<smem>>
    %1107 = vector.broadcast %1106 : f32 to vector<4x128xf32>
    %1108 = arith.mulf %1107, %11 : vector<4x128xf32>
    %1109 = arith.addf %1105, %1108 : vector<4x128xf32>
    %c212 = arith.constant 212 : index
    %1110 = memref.load %arg1[%c212] : memref<288xf32, #tpu.memory_space<smem>>
    %1111 = vector.broadcast %1110 : f32 to vector<4x128xf32>
    %1112 = arith.mulf %1111, %19 : vector<4x128xf32>
    %1113 = arith.addf %1109, %1112 : vector<4x128xf32>
    %c220 = arith.constant 220 : index
    %1114 = memref.load %arg1[%c220] : memref<288xf32, #tpu.memory_space<smem>>
    %1115 = vector.broadcast %1114 : f32 to vector<4x128xf32>
    %1116 = arith.mulf %1115, %27 : vector<4x128xf32>
    %1117 = arith.addf %1113, %1116 : vector<4x128xf32>
    %c260 = arith.constant 260 : index
    %1118 = memref.load %arg1[%c260] : memref<288xf32, #tpu.memory_space<smem>>
    %1119 = vector.broadcast %1118 : f32 to vector<4x128xf32>
    %1120 = arith.mulf %1119, %1 : vector<4x128xf32>
    %1121 = arith.addf %1117, %1120 : vector<4x128xf32>
    %c268 = arith.constant 268 : index
    %1122 = memref.load %arg1[%c268] : memref<288xf32, #tpu.memory_space<smem>>
    %1123 = vector.broadcast %1122 : f32 to vector<4x128xf32>
    %1124 = arith.mulf %1123, %9 : vector<4x128xf32>
    %1125 = arith.addf %1121, %1124 : vector<4x128xf32>
    %c276 = arith.constant 276 : index
    %1126 = memref.load %arg1[%c276] : memref<288xf32, #tpu.memory_space<smem>>
    %1127 = vector.broadcast %1126 : f32 to vector<4x128xf32>
    %1128 = arith.mulf %1127, %17 : vector<4x128xf32>
    %1129 = arith.addf %1125, %1128 : vector<4x128xf32>
    %c284 = arith.constant 284 : index
    %1130 = memref.load %arg1[%c284] : memref<288xf32, #tpu.memory_space<smem>>
    %1131 = vector.broadcast %1130 : f32 to vector<4x128xf32>
    %1132 = arith.mulf %1131, %25 : vector<4x128xf32>
    %1133 = arith.addf %1129, %1132 : vector<4x128xf32>
    %c3_202 = arith.constant 3 : index
    %c4_203 = arith.constant 4 : index
    %c0_204 = arith.constant 0 : index
    %c0_205 = arith.constant 0 : index
    %1134 = vector.load %arg4[%c3_202, %c4_203, %c0_204, %c0_205] : memref<4x8x4x128xf32, #tpu.memory_space<vmem>>, vector<1x1x4x128xf32>
    %1135 = vector.shape_cast %1134 : vector<1x1x4x128xf32> to vector<4x128xf32>
    %1136 = vector.shape_cast %1133 : vector<4x128xf32> to vector<1x1x4x128xf32>
    tpu.vector_store %arg4[%c3_202, %c4_203, %c0_204, %c0_205], %1136 {strides = array<i32>} : memref<4x8x4x128xf32, #tpu.memory_space<vmem>>, vector<1x1x4x128xf32>,
    %c5_206 = arith.constant 5 : index
    %1137 = memref.load %arg2[%c5_206] : memref<8xf32, #tpu.memory_space<smem>>
    %1138 = vector.broadcast %1137 : f32 to vector<4x128xf32>
    %c5_207 = arith.constant 5 : index
    %1139 = memref.load %arg1[%c5_207] : memref<288xf32, #tpu.memory_space<smem>>
    %1140 = vector.broadcast %1139 : f32 to vector<4x128xf32>
    %1141 = arith.mulf %1140, %7 : vector<4x128xf32>
    %1142 = arith.addf %1138, %1141 : vector<4x128xf32>
    %c13 = arith.constant 13 : index
    %1143 = memref.load %arg1[%c13] : memref<288xf32, #tpu.memory_space<smem>>
    %1144 = vector.broadcast %1143 : f32 to vector<4x128xf32>
    %1145 = arith.mulf %1144, %15 : vector<4x128xf32>
    %1146 = arith.addf %1142, %1145 : vector<4x128xf32>
    %c21 = arith.constant 21 : index
    %1147 = memref.load %arg1[%c21] : memref<288xf32, #tpu.memory_space<smem>>
    %1148 = vector.broadcast %1147 : f32 to vector<4x128xf32>
    %1149 = arith.mulf %1148, %23 : vector<4x128xf32>
    %1150 = arith.addf %1146, %1149 : vector<4x128xf32>
    %c29 = arith.constant 29 : index
    %1151 = memref.load %arg1[%c29] : memref<288xf32, #tpu.memory_space<smem>>
    %1152 = vector.broadcast %1151 : f32 to vector<4x128xf32>
    %1153 = arith.mulf %1152, %31 : vector<4x128xf32>
    %1154 = arith.addf %1150, %1153 : vector<4x128xf32>
    %c69 = arith.constant 69 : index
    %1155 = memref.load %arg1[%c69] : memref<288xf32, #tpu.memory_space<smem>>
    %1156 = vector.broadcast %1155 : f32 to vector<4x128xf32>
    %1157 = arith.mulf %1156, %5 : vector<4x128xf32>
    %1158 = arith.addf %1154, %1157 : vector<4x128xf32>
    %c77 = arith.constant 77 : index
    %1159 = memref.load %arg1[%c77] : memref<288xf32, #tpu.memory_space<smem>>
    %1160 = vector.broadcast %1159 : f32 to vector<4x128xf32>
    %1161 = arith.mulf %1160, %13 : vector<4x128xf32>
    %1162 = arith.addf %1158, %1161 : vector<4x128xf32>
    %c85 = arith.constant 85 : index
    %1163 = memref.load %arg1[%c85] : memref<288xf32, #tpu.memory_space<smem>>
    %1164 = vector.broadcast %1163 : f32 to vector<4x128xf32>
    %1165 = arith.mulf %1164, %21 : vector<4x128xf32>
    %1166 = arith.addf %1162, %1165 : vector<4x128xf32>
    %c93 = arith.constant 93 : index
    %1167 = memref.load %arg1[%c93] : memref<288xf32, #tpu.memory_space<smem>>
    %1168 = vector.broadcast %1167 : f32 to vector<4x128xf32>
    %1169 = arith.mulf %1168, %29 : vector<4x128xf32>
    %1170 = arith.addf %1166, %1169 : vector<4x128xf32>
    %c197 = arith.constant 197 : index
    %1171 = memref.load %arg1[%c197] : memref<288xf32, #tpu.memory_space<smem>>
    %1172 = vector.broadcast %1171 : f32 to vector<4x128xf32>
    %1173 = arith.mulf %1172, %3 : vector<4x128xf32>
    %1174 = arith.addf %1170, %1173 : vector<4x128xf32>
    %c205 = arith.constant 205 : index
    %1175 = memref.load %arg1[%c205] : memref<288xf32, #tpu.memory_space<smem>>
    %1176 = vector.broadcast %1175 : f32 to vector<4x128xf32>
    %1177 = arith.mulf %1176, %11 : vector<4x128xf32>
    %1178 = arith.addf %1174, %1177 : vector<4x128xf32>
    %c213 = arith.constant 213 : index
    %1179 = memref.load %arg1[%c213] : memref<288xf32, #tpu.memory_space<smem>>
    %1180 = vector.broadcast %1179 : f32 to vector<4x128xf32>
    %1181 = arith.mulf %1180, %19 : vector<4x128xf32>
    %1182 = arith.addf %1178, %1181 : vector<4x128xf32>
    %c221 = arith.constant 221 : index
    %1183 = memref.load %arg1[%c221] : memref<288xf32, #tpu.memory_space<smem>>
    %1184 = vector.broadcast %1183 : f32 to vector<4x128xf32>
    %1185 = arith.mulf %1184, %27 : vector<4x128xf32>
    %1186 = arith.addf %1182, %1185 : vector<4x128xf32>
    %c261 = arith.constant 261 : index
    %1187 = memref.load %arg1[%c261] : memref<288xf32, #tpu.memory_space<smem>>
    %1188 = vector.broadcast %1187 : f32 to vector<4x128xf32>
    %1189 = arith.mulf %1188, %1 : vector<4x128xf32>
    %1190 = arith.addf %1186, %1189 : vector<4x128xf32>
    %c269 = arith.constant 269 : index
    %1191 = memref.load %arg1[%c269] : memref<288xf32, #tpu.memory_space<smem>>
    %1192 = vector.broadcast %1191 : f32 to vector<4x128xf32>
    %1193 = arith.mulf %1192, %9 : vector<4x128xf32>
    %1194 = arith.addf %1190, %1193 : vector<4x128xf32>
    %c277 = arith.constant 277 : index
    %1195 = memref.load %arg1[%c277] : memref<288xf32, #tpu.memory_space<smem>>
    %1196 = vector.broadcast %1195 : f32 to vector<4x128xf32>
    %1197 = arith.mulf %1196, %17 : vector<4x128xf32>
    %1198 = arith.addf %1194, %1197 : vector<4x128xf32>
    %c285 = arith.constant 285 : index
    %1199 = memref.load %arg1[%c285] : memref<288xf32, #tpu.memory_space<smem>>
    %1200 = vector.broadcast %1199 : f32 to vector<4x128xf32>
    %1201 = arith.mulf %1200, %25 : vector<4x128xf32>
    %1202 = arith.addf %1198, %1201 : vector<4x128xf32>
    %c3_208 = arith.constant 3 : index
    %c5_209 = arith.constant 5 : index
    %c0_210 = arith.constant 0 : index
    %c0_211 = arith.constant 0 : index
    %1203 = vector.load %arg4[%c3_208, %c5_209, %c0_210, %c0_211] : memref<4x8x4x128xf32, #tpu.memory_space<vmem>>, vector<1x1x4x128xf32>
    %1204 = vector.shape_cast %1203 : vector<1x1x4x128xf32> to vector<4x128xf32>
    %1205 = vector.shape_cast %1202 : vector<4x128xf32> to vector<1x1x4x128xf32>
    tpu.vector_store %arg4[%c3_208, %c5_209, %c0_210, %c0_211], %1205 {strides = array<i32>} : memref<4x8x4x128xf32, #tpu.memory_space<vmem>>, vector<1x1x4x128xf32>,
    %c6_212 = arith.constant 6 : index
    %1206 = memref.load %arg2[%c6_212] : memref<8xf32, #tpu.memory_space<smem>>
    %1207 = vector.broadcast %1206 : f32 to vector<4x128xf32>
    %c6_213 = arith.constant 6 : index
    %1208 = memref.load %arg1[%c6_213] : memref<288xf32, #tpu.memory_space<smem>>
    %1209 = vector.broadcast %1208 : f32 to vector<4x128xf32>
    %1210 = arith.mulf %1209, %7 : vector<4x128xf32>
    %1211 = arith.addf %1207, %1210 : vector<4x128xf32>
    %c14 = arith.constant 14 : index
    %1212 = memref.load %arg1[%c14] : memref<288xf32, #tpu.memory_space<smem>>
    %1213 = vector.broadcast %1212 : f32 to vector<4x128xf32>
    %1214 = arith.mulf %1213, %15 : vector<4x128xf32>
    %1215 = arith.addf %1211, %1214 : vector<4x128xf32>
    %c22 = arith.constant 22 : index
    %1216 = memref.load %arg1[%c22] : memref<288xf32, #tpu.memory_space<smem>>
    %1217 = vector.broadcast %1216 : f32 to vector<4x128xf32>
    %1218 = arith.mulf %1217, %23 : vector<4x128xf32>
    %1219 = arith.addf %1215, %1218 : vector<4x128xf32>
    %c30 = arith.constant 30 : index
    %1220 = memref.load %arg1[%c30] : memref<288xf32, #tpu.memory_space<smem>>
    %1221 = vector.broadcast %1220 : f32 to vector<4x128xf32>
    %1222 = arith.mulf %1221, %31 : vector<4x128xf32>
    %1223 = arith.addf %1219, %1222 : vector<4x128xf32>
    %c70 = arith.constant 70 : index
    %1224 = memref.load %arg1[%c70] : memref<288xf32, #tpu.memory_space<smem>>
    %1225 = vector.broadcast %1224 : f32 to vector<4x128xf32>
    %1226 = arith.mulf %1225, %5 : vector<4x128xf32>
    %1227 = arith.addf %1223, %1226 : vector<4x128xf32>
    %c78 = arith.constant 78 : index
    %1228 = memref.load %arg1[%c78] : memref<288xf32, #tpu.memory_space<smem>>
    %1229 = vector.broadcast %1228 : f32 to vector<4x128xf32>
    %1230 = arith.mulf %1229, %13 : vector<4x128xf32>
    %1231 = arith.addf %1227, %1230 : vector<4x128xf32>
    %c86 = arith.constant 86 : index
    %1232 = memref.load %arg1[%c86] : memref<288xf32, #tpu.memory_space<smem>>
    %1233 = vector.broadcast %1232 : f32 to vector<4x128xf32>
    %1234 = arith.mulf %1233, %21 : vector<4x128xf32>
    %1235 = arith.addf %1231, %1234 : vector<4x128xf32>
    %c94 = arith.constant 94 : index
    %1236 = memref.load %arg1[%c94] : memref<288xf32, #tpu.memory_space<smem>>
    %1237 = vector.broadcast %1236 : f32 to vector<4x128xf32>
    %1238 = arith.mulf %1237, %29 : vector<4x128xf32>
    %1239 = arith.addf %1235, %1238 : vector<4x128xf32>
    %c198 = arith.constant 198 : index
    %1240 = memref.load %arg1[%c198] : memref<288xf32, #tpu.memory_space<smem>>
    %1241 = vector.broadcast %1240 : f32 to vector<4x128xf32>
    %1242 = arith.mulf %1241, %3 : vector<4x128xf32>
    %1243 = arith.addf %1239, %1242 : vector<4x128xf32>
    %c206 = arith.constant 206 : index
    %1244 = memref.load %arg1[%c206] : memref<288xf32, #tpu.memory_space<smem>>
    %1245 = vector.broadcast %1244 : f32 to vector<4x128xf32>
    %1246 = arith.mulf %1245, %11 : vector<4x128xf32>
    %1247 = arith.addf %1243, %1246 : vector<4x128xf32>
    %c214 = arith.constant 214 : index
    %1248 = memref.load %arg1[%c214] : memref<288xf32, #tpu.memory_space<smem>>
    %1249 = vector.broadcast %1248 : f32 to vector<4x128xf32>
    %1250 = arith.mulf %1249, %19 : vector<4x128xf32>
    %1251 = arith.addf %1247, %1250 : vector<4x128xf32>
    %c222 = arith.constant 222 : index
    %1252 = memref.load %arg1[%c222] : memref<288xf32, #tpu.memory_space<smem>>
    %1253 = vector.broadcast %1252 : f32 to vector<4x128xf32>
    %1254 = arith.mulf %1253, %27 : vector<4x128xf32>
    %1255 = arith.addf %1251, %1254 : vector<4x128xf32>
    %c262 = arith.constant 262 : index
    %1256 = memref.load %arg1[%c262] : memref<288xf32, #tpu.memory_space<smem>>
    %1257 = vector.broadcast %1256 : f32 to vector<4x128xf32>
    %1258 = arith.mulf %1257, %1 : vector<4x128xf32>
    %1259 = arith.addf %1255, %1258 : vector<4x128xf32>
    %c270 = arith.constant 270 : index
    %1260 = memref.load %arg1[%c270] : memref<288xf32, #tpu.memory_space<smem>>
    %1261 = vector.broadcast %1260 : f32 to vector<4x128xf32>
    %1262 = arith.mulf %1261, %9 : vector<4x128xf32>
    %1263 = arith.addf %1259, %1262 : vector<4x128xf32>
    %c278 = arith.constant 278 : index
    %1264 = memref.load %arg1[%c278] : memref<288xf32, #tpu.memory_space<smem>>
    %1265 = vector.broadcast %1264 : f32 to vector<4x128xf32>
    %1266 = arith.mulf %1265, %17 : vector<4x128xf32>
    %1267 = arith.addf %1263, %1266 : vector<4x128xf32>
    %c286 = arith.constant 286 : index
    %1268 = memref.load %arg1[%c286] : memref<288xf32, #tpu.memory_space<smem>>
    %1269 = vector.broadcast %1268 : f32 to vector<4x128xf32>
    %1270 = arith.mulf %1269, %25 : vector<4x128xf32>
    %1271 = arith.addf %1267, %1270 : vector<4x128xf32>
    %c3_214 = arith.constant 3 : index
    %c6_215 = arith.constant 6 : index
    %c0_216 = arith.constant 0 : index
    %c0_217 = arith.constant 0 : index
    %1272 = vector.load %arg4[%c3_214, %c6_215, %c0_216, %c0_217] : memref<4x8x4x128xf32, #tpu.memory_space<vmem>>, vector<1x1x4x128xf32>
    %1273 = vector.shape_cast %1272 : vector<1x1x4x128xf32> to vector<4x128xf32>
    %1274 = vector.shape_cast %1271 : vector<4x128xf32> to vector<1x1x4x128xf32>
    tpu.vector_store %arg4[%c3_214, %c6_215, %c0_216, %c0_217], %1274 {strides = array<i32>} : memref<4x8x4x128xf32, #tpu.memory_space<vmem>>, vector<1x1x4x128xf32>,
    %c7_218 = arith.constant 7 : index
    %1275 = memref.load %arg2[%c7_218] : memref<8xf32, #tpu.memory_space<smem>>
    %1276 = vector.broadcast %1275 : f32 to vector<4x128xf32>
    %c7_219 = arith.constant 7 : index
    %1277 = memref.load %arg1[%c7_219] : memref<288xf32, #tpu.memory_space<smem>>
    %1278 = vector.broadcast %1277 : f32 to vector<4x128xf32>
    %1279 = arith.mulf %1278, %7 : vector<4x128xf32>
    %1280 = arith.addf %1276, %1279 : vector<4x128xf32>
    %c15 = arith.constant 15 : index
    %1281 = memref.load %arg1[%c15] : memref<288xf32, #tpu.memory_space<smem>>
    %1282 = vector.broadcast %1281 : f32 to vector<4x128xf32>
    %1283 = arith.mulf %1282, %15 : vector<4x128xf32>
    %1284 = arith.addf %1280, %1283 : vector<4x128xf32>
    %c23 = arith.constant 23 : index
    %1285 = memref.load %arg1[%c23] : memref<288xf32, #tpu.memory_space<smem>>
    %1286 = vector.broadcast %1285 : f32 to vector<4x128xf32>
    %1287 = arith.mulf %1286, %23 : vector<4x128xf32>
    %1288 = arith.addf %1284, %1287 : vector<4x128xf32>
    %c31 = arith.constant 31 : index
    %1289 = memref.load %arg1[%c31] : memref<288xf32, #tpu.memory_space<smem>>
    %1290 = vector.broadcast %1289 : f32 to vector<4x128xf32>
    %1291 = arith.mulf %1290, %31 : vector<4x128xf32>
    %1292 = arith.addf %1288, %1291 : vector<4x128xf32>
    %c71 = arith.constant 71 : index
    %1293 = memref.load %arg1[%c71] : memref<288xf32, #tpu.memory_space<smem>>
    %1294 = vector.broadcast %1293 : f32 to vector<4x128xf32>
    %1295 = arith.mulf %1294, %5 : vector<4x128xf32>
    %1296 = arith.addf %1292, %1295 : vector<4x128xf32>
    %c79 = arith.constant 79 : index
    %1297 = memref.load %arg1[%c79] : memref<288xf32, #tpu.memory_space<smem>>
    %1298 = vector.broadcast %1297 : f32 to vector<4x128xf32>
    %1299 = arith.mulf %1298, %13 : vector<4x128xf32>
    %1300 = arith.addf %1296, %1299 : vector<4x128xf32>
    %c87 = arith.constant 87 : index
    %1301 = memref.load %arg1[%c87] : memref<288xf32, #tpu.memory_space<smem>>
    %1302 = vector.broadcast %1301 : f32 to vector<4x128xf32>
    %1303 = arith.mulf %1302, %21 : vector<4x128xf32>
    %1304 = arith.addf %1300, %1303 : vector<4x128xf32>
    %c95 = arith.constant 95 : index
    %1305 = memref.load %arg1[%c95] : memref<288xf32, #tpu.memory_space<smem>>
    %1306 = vector.broadcast %1305 : f32 to vector<4x128xf32>
    %1307 = arith.mulf %1306, %29 : vector<4x128xf32>
    %1308 = arith.addf %1304, %1307 : vector<4x128xf32>
    %c199 = arith.constant 199 : index
    %1309 = memref.load %arg1[%c199] : memref<288xf32, #tpu.memory_space<smem>>
    %1310 = vector.broadcast %1309 : f32 to vector<4x128xf32>
    %1311 = arith.mulf %1310, %3 : vector<4x128xf32>
    %1312 = arith.addf %1308, %1311 : vector<4x128xf32>
    %c207 = arith.constant 207 : index
    %1313 = memref.load %arg1[%c207] : memref<288xf32, #tpu.memory_space<smem>>
    %1314 = vector.broadcast %1313 : f32 to vector<4x128xf32>
    %1315 = arith.mulf %1314, %11 : vector<4x128xf32>
    %1316 = arith.addf %1312, %1315 : vector<4x128xf32>
    %c215 = arith.constant 215 : index
    %1317 = memref.load %arg1[%c215] : memref<288xf32, #tpu.memory_space<smem>>
    %1318 = vector.broadcast %1317 : f32 to vector<4x128xf32>
    %1319 = arith.mulf %1318, %19 : vector<4x128xf32>
    %1320 = arith.addf %1316, %1319 : vector<4x128xf32>
    %c223 = arith.constant 223 : index
    %1321 = memref.load %arg1[%c223] : memref<288xf32, #tpu.memory_space<smem>>
    %1322 = vector.broadcast %1321 : f32 to vector<4x128xf32>
    %1323 = arith.mulf %1322, %27 : vector<4x128xf32>
    %1324 = arith.addf %1320, %1323 : vector<4x128xf32>
    %c263 = arith.constant 263 : index
    %1325 = memref.load %arg1[%c263] : memref<288xf32, #tpu.memory_space<smem>>
    %1326 = vector.broadcast %1325 : f32 to vector<4x128xf32>
    %1327 = arith.mulf %1326, %1 : vector<4x128xf32>
    %1328 = arith.addf %1324, %1327 : vector<4x128xf32>
    %c271 = arith.constant 271 : index
    %1329 = memref.load %arg1[%c271] : memref<288xf32, #tpu.memory_space<smem>>
    %1330 = vector.broadcast %1329 : f32 to vector<4x128xf32>
    %1331 = arith.mulf %1330, %9 : vector<4x128xf32>
    %1332 = arith.addf %1328, %1331 : vector<4x128xf32>
    %c279 = arith.constant 279 : index
    %1333 = memref.load %arg1[%c279] : memref<288xf32, #tpu.memory_space<smem>>
    %1334 = vector.broadcast %1333 : f32 to vector<4x128xf32>
    %1335 = arith.mulf %1334, %17 : vector<4x128xf32>
    %1336 = arith.addf %1332, %1335 : vector<4x128xf32>
    %c287 = arith.constant 287 : index
    %1337 = memref.load %arg1[%c287] : memref<288xf32, #tpu.memory_space<smem>>
    %1338 = vector.broadcast %1337 : f32 to vector<4x128xf32>
    %1339 = arith.mulf %1338, %25 : vector<4x128xf32>
    %1340 = arith.addf %1336, %1339 : vector<4x128xf32>
    %c3_220 = arith.constant 3 : index
    %c7_221 = arith.constant 7 : index
    %c0_222 = arith.constant 0 : index
    %c0_223 = arith.constant 0 : index
    %1341 = vector.load %arg4[%c3_220, %c7_221, %c0_222, %c0_223] : memref<4x8x4x128xf32, #tpu.memory_space<vmem>>, vector<1x1x4x128xf32>
    %1342 = vector.shape_cast %1341 : vector<1x1x4x128xf32> to vector<4x128xf32>
    %1343 = vector.shape_cast %1340 : vector<4x128xf32> to vector<1x1x4x128xf32>
    tpu.vector_store %arg4[%c3_220, %c7_221, %c0_222, %c0_223], %1343 {strides = array<i32>} : memref<4x8x4x128xf32, #tpu.memory_space<vmem>>, vector<1x1x4x128xf32>,
    return
  }
  func.func @transform_0(%arg0: i32) -> i32 {
    %c0_i32 = arith.constant 0 : i32
    %c0_i32_0 = arith.constant 0 : i32
    return %c0_i32 : i32
  }
  func.func @transform_1(%arg0: i32) -> i32 {
    %c0_i32 = arith.constant 0 : i32
    %c0_i32_0 = arith.constant 0 : i32
    return %c0_i32 : i32
  }
  func.func @transform_2(%arg0: i32) -> (i32, i32, i32, i32) {
    %c0_i32 = arith.constant 0 : i32
    %c0_i32_0 = arith.constant 0 : i32
    %c0_i32_1 = arith.constant 0 : i32
    %c0_i32_2 = arith.constant 0 : i32
    %c0_i32_3 = arith.constant 0 : i32
    return %c0_i32, %c0_i32_0, %c0_i32_1, %c0_i32_2 : i32, i32, i32, i32
  }
  func.func @transform_3(%arg0: i32) -> (i32, i32, i32, i32) {
    %c0_i32 = arith.constant 0 : i32
    %c0_i32_0 = arith.constant 0 : i32
    %c0_i32_1 = arith.constant 0 : i32
    %c0_i32_2 = arith.constant 0 : i32
    %c0_i32_3 = arith.constant 0 : i32
    return %c0_i32, %c0_i32_0, %c0_i32_1, %c0_i32_2 : i32, i32, i32, i32
  }
}

</mosaic_0001>

<llo_original>
// kernel: tpu_custom_call.1
$region0: #{tpu_custom_call.1}
  #allocation0 [shape = 'u32[]', space=smem, size = 0x4, offset = 0x4, fixed_abs, tag = 'smem constant byte address 0x4 - core index']
  #allocation1 [shape = 'u32[144,128]{1,0:T(1,128)}', space=vmem, size = 0x12000, scoped, tag = 'internal scratch']
  %s0 = inlined_call_operand.vmem [shape: f32[288], index: 0, kind: input, shape index: {}]
  %s1 = inlined_call_operand.vmem [shape: f32[8], index: 1, kind: input, shape index: {}]
  %s2 = inlined_call_operand.vmem [shape: f32[2,4,5,128], index: 2, kind: input, shape index: {}]
  %s3 = inlined_call_operand.hbm [shape: f32[4,8,4,128], index: 3, kind: output, shape index: {}]
  %s4 = sld [smem:[#allocation0]]
  $region30: #{tpu_custom_call.1} parent=0
    _
  %s6 = ssub.s32 1, %s4
  %s7 = scalar_select 0, %s6, %s4
  $region1: #{tpu_custom_call.1} parent=0
    #allocation2 [shape = 'u8[1536]{0}', space=smem, size = 0x600, scoped, tag = 'input window, operand 0, single buffered']
    #allocation3 [shape = 's32[1]{0}', space=sflag, size = 0x4, scoped, tag = 'scoped memory for tpu_custom_call.1']
    #allocation4 [shape = 's32[1]{0}', space=sflag, size = 0x4, scoped, tag = 'scoped memory for tpu_custom_call.1']
    #allocation5 [shape = 'u8[512]{0}', space=smem, size = 0x200, scoped, tag = 'input window, operand 1, single buffered']
    #allocation6 [shape = 's32[1]{0}', space=sflag, size = 0x4, scoped, tag = 'scoped memory for tpu_custom_call.1']
    #allocation7 [shape = 'u8[65536]{0}', space=vmem, size = 0x10000, scoped, tag = 'output window, operand 0, single buffered']
    %8 = vsyncpa [#allocation4], 0
    %9 = vsyncpa [#allocation6], 0
    %10 = vsyncpa [#allocation3], 0
    // Predicated region
    $region2: #{tpu_custom_call.1} parent=1 // pred_check
      _
    $region3: #{tpu_custom_call.1} parent=1 // pred_check_branch
      %12 = sbr.rel (0) target = $region5
    $region4: #{tpu_custom_call.1} parent=1 // pred_region
      %s14 = ssub.s32 48, 48
      %15 = vsyncadd [#allocation4], %s14
      %s17 = sshll.u32 %s0, 4
      %s18 = int_to_ptr.vmem [resolvable:$true] %s17
      %20 = dma.vmem_to_smem %s18, 48, [#allocation2], [#allocation4]
    $region5: #{tpu_custom_call.1} parent=1 // pred_fallthru
      _
    // Predicated region
    $region6: #{tpu_custom_call.1} parent=1 // pred_check
      _
    $region7: #{tpu_custom_call.1} parent=1 // pred_check_branch
      %22 = sbr.rel (0) target = $region9
    $region8: #{tpu_custom_call.1} parent=1 // pred_region
      %s24 = ssub.s32 16, 16
      %25 = vsyncadd [#allocation6], %s24
      %s27 = sshll.u32 %s1, 4
      %s28 = int_to_ptr.vmem [resolvable:$true] %s27
      %30 = dma.vmem_to_smem %s28, 16, [#allocation5], [#allocation6]
    $region9: #{tpu_custom_call.1} parent=1 // pred_fallthru
      _
    // Predicated region
    $region10: #{tpu_custom_call.1} parent=1 // pred_check
      _
    $region11: #{tpu_custom_call.1} parent=1 // pred_check_branch
      %32 = sbr.rel (0) target = $region13
    $region12: #{tpu_custom_call.1} parent=1 // pred_region
      _
    $region13: #{tpu_custom_call.1} parent=1 // pred_fallthru
      _
    // Predicated region
    $region14: #{tpu_custom_call.1} parent=1 // pred_check
      _
    $region15: #{tpu_custom_call.1} parent=1 // pred_check_branch
      %34 = sbr.rel (0) target = $region17
    $region16: #{tpu_custom_call.1} parent=1 // pred_region
      %35 = dma.done [#allocation4], 48
    $region17: #{tpu_custom_call.1} parent=1 // pred_fallthru
      _
    // Predicated region
    $region18: #{tpu_custom_call.1} parent=1 // pred_check
      _
    $region19: #{tpu_custom_call.1} parent=1 // pred_check_branch
      %37 = sbr.rel (0) target = $region21
    $region20: #{tpu_custom_call.1} parent=1 // pred_region
      %38 = dma.done [#allocation6], 16
    $region21: #{tpu_custom_call.1} parent=1 // pred_fallthru
      _
    %39 = sfence
    %v40 = vld [vmem:[%s2] sm:$0xf]
    %s41 = scalar_lea.vmem %s2, 32
    %v42 = vld [vmem:[%s41] sm:$0xf]
    %v43 = vld [vmem:[%s2 + $0x1] sm:$0xf]
    %v44 = vld [vmem:[%s41 + $0x1] sm:$0xf]
    %s45 = scalar_lea.vmem %s2, 8
    %v46 = vld [vmem:[%s45] sm:$0xf]
    %s47 = scalar_lea.vmem %s2, 40
    %v48 = vld [vmem:[%s47] sm:$0xf]
    %v49 = vld [vmem:[%s45 + $0x1] sm:$0xf]
    %v50 = vld [vmem:[%s47 + $0x1] sm:$0xf]
    %s51 = scalar_lea.vmem %s2, 16
    %v52 = vld [vmem:[%s51] sm:$0xf]
    %s53 = scalar_lea.vmem %s2, 48
    %v54 = vld [vmem:[%s53] sm:$0xf]
    %v55 = vld [vmem:[%s51 + $0x1] sm:$0xf]
    %v56 = vld [vmem:[%s53 + $0x1] sm:$0xf]
    %s57 = scalar_lea.vmem %s2, 24
    %v58 = vld [vmem:[%s57] sm:$0xf]
    %s59 = scalar_lea.vmem %s2, 56
    %v60 = vld [vmem:[%s59] sm:$0xf]
    %v61 = vld [vmem:[%s57 + $0x1] sm:$0xf]
    %v62 = vld [vmem:[%s59 + $0x1] sm:$0xf]
    %s63 = sld [smem:[#allocation5]]
    %v64 = vstv %s63
    %s65 = sld [smem:[#allocation2 + $0x80]]
    %v66 = vstv %s65
    %v67 = vmul.f32 %v66, %v40
    %v68 = vadd.f32 %v64, %v67
    %s69 = sld [smem:[#allocation2 + $0x88]]
    %v70 = vstv %s69
    %v71 = vmul.f32 %v70, %v46
    %v72 = vadd.f32 %v68, %v71
    %s73 = sld [smem:[#allocation2 + $0x90]]
    %v74 = vstv %s73
    %v75 = vmul.f32 %v74, %v52
    %v76 = vadd.f32 %v72, %v75
    %s77 = sld [smem:[#allocation2 + $0x98]]
    %v78 = vstv %s77
    %v79 = vmul.f32 %v78, %v58
    %v80 = vadd.f32 %v76, %v79
    %81 = vst [vmem:[#allocation7] sm:$0xf] %v80
    %s82 = sld [smem:[#allocation5 + $0x1]]
    %v83 = vstv %s82
    %s84 = sld [smem:[#allocation2 + $0x81]]
    %v85 = vstv %s84
    %v86 = vmul.f32 %v85, %v40
    %v87 = vadd.f32 %v83, %v86
    %s88 = sld [smem:[#allocation2 + $0x89]]
    %v89 = vstv %s88
    %v90 = vmul.f32 %v89, %v46
    %v91 = vadd.f32 %v87, %v90
    %s92 = sld [smem:[#allocation2 + $0x91]]
    %v93 = vstv %s92
    %v94 = vmul.f32 %v93, %v52
    %v95 = vadd.f32 %v91, %v94
    %s96 = sld [smem:[#allocation2 + $0x99]]
    %v97 = vstv %s96
    %v98 = vmul.f32 %v97, %v58
    %v99 = vadd.f32 %v95, %v98
    %s100 = scalar_lea.vmem [#allocation7], 4
    %101 = vst [vmem:[%s100] sm:$0xf] %v99
    %s102 = sld [smem:[#allocation5 + $0x2]]
    %v103 = vstv %s102
    %s104 = sld [smem:[#allocation2 + $0x82]]
    %v105 = vstv %s104
    %v106 = vmul.f32 %v105, %v40
    %v107 = vadd.f32 %v103, %v106
    %s108 = sld [smem:[#allocation2 + $0x8a]]
    %v109 = vstv %s108
    %v110 = vmul.f32 %v109, %v46
    %v111 = vadd.f32 %v107, %v110
    %s112 = sld [smem:[#allocation2 + $0x92]]
    %v113 = vstv %s112
    %v114 = vmul.f32 %v113, %v52
    %v115 = vadd.f32 %v111, %v114
    %s116 = sld [smem:[#allocation2 + $0x9a]]
    %v117 = vstv %s116
    %v118 = vmul.f32 %v117, %v58
    %v119 = vadd.f32 %v115, %v118
    %s120 = scalar_lea.vmem [#allocation7], 8
    %121 = vst [vmem:[%s120] sm:$0xf] %v119
    %s122 = sld [smem:[#allocation5 + $0x3]]
    %v123 = vstv %s122
    %s124 = sld [smem:[#allocation2 + $0x83]]
    %v125 = vstv %s124
    %v126 = vmul.f32 %v125, %v40
    %v127 = vadd.f32 %v123, %v126
    %s128 = sld [smem:[#allocation2 + $0x8b]]
    %v129 = vstv %s128
    %v130 = vmul.f32 %v129, %v46
    %v131 = vadd.f32 %v127, %v130
    %s132 = sld [smem:[#allocation2 + $0x93]]
    %v133 = vstv %s132
    %v134 = vmul.f32 %v133, %v52
    %v135 = vadd.f32 %v131, %v134
    %s136 = sld [smem:[#allocation2 + $0x9b]]
    %v137 = vstv %s136
    %v138 = vmul.f32 %v137, %v58
    %v139 = vadd.f32 %v135, %v138
    %s140 = scalar_lea.vmem [#allocation7], 12
    %141 = vst [vmem:[%s140] sm:$0xf] %v139
    %s142 = sld [smem:[#allocation5 + $0x4]]
    %v143 = vstv %s142
    %s144 = sld [smem:[#allocation2 + $0x84]]
    %v145 = vstv %s144
    %v146 = vmul.f32 %v145, %v40
    %v147 = vadd.f32 %v143, %v146
    %s148 = sld [smem:[#allocation2 + $0x8c]]
    %v149 = vstv %s148
    %v150 = vmul.f32 %v149, %v46
    %v151 = vadd.f32 %v147, %v150
    %s152 = sld [smem:[#allocation2 + $0x94]]
    %v153 = vstv %s152
    %v154 = vmul.f32 %v153, %v52
    %v155 = vadd.f32 %v151, %v154
    %s156 = sld [smem:[#allocation2 + $0x9c]]
    %v157 = vstv %s156
    %v158 = vmul.f32 %v157, %v58
    %v159 = vadd.f32 %v155, %v158
    %s160 = scalar_lea.vmem [#allocation7], 16
    %161 = vst [vmem:[%s160] sm:$0xf] %v159
    %s162 = sld [smem:[#allocation5 + $0x5]]
    %v163 = vstv %s162
    %s164 = sld [smem:[#allocation2 + $0x85]]
    %v165 = vstv %s164
    %v166 = vmul.f32 %v165, %v40
    %v167 = vadd.f32 %v163, %v166
    %s168 = sld [smem:[#allocation2 + $0x8d]]
    %v169 = vstv %s168
    %v170 = vmul.f32 %v169, %v46
    %v171 = vadd.f32 %v167, %v170
    %s172 = sld [smem:[#allocation2 + $0x95]]
    %v173 = vstv %s172
    %v174 = vmul.f32 %v173, %v52
    %v175 = vadd.f32 %v171, %v174
    %s176 = sld [smem:[#allocation2 + $0x9d]]
    %v177 = vstv %s176
    %v178 = vmul.f32 %v177, %v58
    %v179 = vadd.f32 %v175, %v178
    %s180 = scalar_lea.vmem [#allocation7], 20
    %181 = vst [vmem:[%s180] sm:$0xf] %v179
    %s182 = sld [smem:[#allocation5 + $0x6]]
    %v183 = vstv %s182
    %s184 = sld [smem:[#allocation2 + $0x86]]
    %v185 = vstv %s184
    %v186 = vmul.f32 %v185, %v40
    %v187 = vadd.f32 %v183, %v186
    %s188 = sld [smem:[#allocation2 + $0x8e]]
    %v189 = vstv %s188
    %v190 = vmul.f32 %v189, %v46
    %v191 = vadd.f32 %v187, %v190
    %s192 = sld [smem:[#allocation2 + $0x96]]
    %v193 = vstv %s192
    %v194 = vmul.f32 %v193, %v52
    %v195 = vadd.f32 %v191, %v194
    %s196 = sld [smem:[#allocation2 + $0x9e]]
    %v197 = vstv %s196
    %v198 = vmul.f32 %v197, %v58
    %v199 = vadd.f32 %v195, %v198
    %s200 = scalar_lea.vmem [#allocation7], 24
    %201 = vst [vmem:[%s200] sm:$0xf] %v199
    %s202 = sld [smem:[#allocation5 + $0x7]]
    %v203 = vstv %s202
    %s204 = sld [smem:[#allocation2 + $0x87]]
    %v205 = vstv %s204
    %v206 = vmul.f32 %v205, %v40
    %v207 = vadd.f32 %v203, %v206
    %s208 = sld [smem:[#allocation2 + $0x8f]]
    %v209 = vstv %s208
    %v210 = vmul.f32 %v209, %v46
    %v211 = vadd.f32 %v207, %v210
    %s212 = sld [smem:[#allocation2 + $0x97]]
    %v213 = vstv %s212
    %v214 = vmul.f32 %v213, %v52
    %v215 = vadd.f32 %v211, %v214
    %s216 = sld [smem:[#allocation2 + $0x9f]]
    %v217 = vstv %s216
    %v218 = vmul.f32 %v217, %v58
    %v219 = vadd.f32 %v215, %v218
    %s220 = scalar_lea.vmem [#allocation7], 28
    %221 = vst [vmem:[%s220] sm:$0xf] %v219
    %s222 = sld [smem:[#allocation5]]
    %v223 = vstv %s222
    %s224 = sld [smem:[#allocation2 + $0x60]]
    %v225 = vstv %s224
    %v226 = vmul.f32 %v225, %v42
    %v227 = vadd.f32 %v223, %v226
    %s228 = sld [smem:[#allocation2 + $0x68]]
    %v229 = vstv %s228
    %v230 = vmul.f32 %v229, %v48
    %v231 = vadd.f32 %v227, %v230
    %s232 = sld [smem:[#allocation2 + $0x70]]
    %v233 = vstv %s232
    %v234 = vmul.f32 %v233, %v54
    %v235 = vadd.f32 %v231, %v234
    %s236 = sld [smem:[#allocation2 + $0x78]]
    %v237 = vstv %s236
    %v238 = vmul.f32 %v237, %v60
    %v239 = vadd.f32 %v235, %v238
    %s240 = sld [smem:[#allocation2 + $0xa0]]
    %v241 = vstv %s240
    %v242 = vmul.f32 %v241, %v40
    %v243 = vadd.f32 %v239, %v242
    %s244 = sld [smem:[#allocation2 + $0xa8]]
    %v245 = vstv %s244
    %v246 = vmul.f32 %v245, %v46
    %v247 = vadd.f32 %v243, %v246
    %s248 = sld [smem:[#allocation2 + $0xb0]]
    %v249 = vstv %s248
    %v250 = vmul.f32 %v249, %v52
    %v251 = vadd.f32 %v247, %v250
    %s252 = sld [smem:[#allocation2 + $0xb8]]
    %v253 = vstv %s252
    %v254 = vmul.f32 %v253, %v58
    %v255 = vadd.f32 %v251, %v254
    %s256 = scalar_lea.vmem [#allocation7], 32
    %257 = vst [vmem:[%s256] sm:$0xf] %v255
    %s258 = sld [smem:[#allocation5 + $0x1]]
    %v259 = vstv %s258
    %s260 = sld [smem:[#allocation2 + $0x61]]
    %v261 = vstv %s260
    %v262 = vmul.f32 %v261, %v42
    %v263 = vadd.f32 %v259, %v262
    %s264 = sld [smem:[#allocation2 + $0x69]]
    %v265 = vstv %s264
    %v266 = vmul.f32 %v265, %v48
    %v267 = vadd.f32 %v263, %v266
    %s268 = sld [smem:[#allocation2 + $0x71]]
    %v269 = vstv %s268
    %v270 = vmul.f32 %v269, %v54
    %v271 = vadd.f32 %v267, %v270
    %s272 = sld [smem:[#allocation2 + $0x79]]
    %v273 = vstv %s272
    %v274 = vmul.f32 %v273, %v60
    %v275 = vadd.f32 %v271, %v274
    %s276 = sld [smem:[#allocation2 + $0xa1]]
    %v277 = vstv %s276
    %v278 = vmul.f32 %v277, %v40
    %v279 = vadd.f32 %v275, %v278
    %s280 = sld [smem:[#allocation2 + $0xa9]]
    %v281 = vstv %s280
    %v282 = vmul.f32 %v281, %v46
    %v283 = vadd.f32 %v279, %v282
    %s284 = sld [smem:[#allocation2 + $0xb1]]
    %v285 = vstv %s284
    %v286 = vmul.f32 %v285, %v52
    %v287 = vadd.f32 %v283, %v286
    %s288 = sld [smem:[#allocation2 + $0xb9]]
    %v289 = vstv %s288
    %v290 = vmul.f32 %v289, %v58
    %v291 = vadd.f32 %v287, %v290
    %s292 = scalar_lea.vmem [#allocation7], 36
    %293 = vst [vmem:[%s292] sm:$0xf] %v291
    %s294 = sld [smem:[#allocation5 + $0x2]]
    %v295 = vstv %s294
    %s296 = sld [smem:[#allocation2 + $0x62]]
    %v297 = vstv %s296
    %v298 = vmul.f32 %v297, %v42
    %v299 = vadd.f32 %v295, %v298
    %s300 = sld [smem:[#allocation2 + $0x6a]]
    %v301 = vstv %s300
    %v302 = vmul.f32 %v301, %v48
    %v303 = vadd.f32 %v299, %v302
    %s304 = sld [smem:[#allocation2 + $0x72]]
    %v305 = vstv %s304
    %v306 = vmul.f32 %v305, %v54
    %v307 = vadd.f32 %v303, %v306
    %s308 = sld [smem:[#allocation2 + $0x7a]]
    %v309 = vstv %s308
    %v310 = vmul.f32 %v309, %v60
    %v311 = vadd.f32 %v307, %v310
    %s312 = sld [smem:[#allocation2 + $0xa2]]
    %v313 = vstv %s312
    %v314 = vmul.f32 %v313, %v40
    %v315 = vadd.f32 %v311, %v314
    %s316 = sld [smem:[#allocation2 + $0xaa]]
    %v317 = vstv %s316
    %v318 = vmul.f32 %v317, %v46
    %v319 = vadd.f32 %v315, %v318
    %s320 = sld [smem:[#allocation2 + $0xb2]]
    %v321 = vstv %s320
    %v322 = vmul.f32 %v321, %v52
    %v323 = vadd.f32 %v319, %v322
    %s324 = sld [smem:[#allocation2 + $0xba]]
    %v325 = vstv %s324
    %v326 = vmul.f32 %v325, %v58
    %v327 = vadd.f32 %v323, %v326
    %s328 = scalar_lea.vmem [#allocation7], 40
    %329 = vst [vmem:[%s328] sm:$0xf] %v327
    %s330 = sld [smem:[#allocation5 + $0x3]]
    %v331 = vstv %s330
    %s332 = sld [smem:[#allocation2 + $0x63]]
    %v333 = vstv %s332
    %v334 = vmul.f32 %v333, %v42
    %v335 = vadd.f32 %v331, %v334
    %s336 = sld [smem:[#allocation2 + $0x6b]]
    %v337 = vstv %s336
    %v338 = vmul.f32 %v337, %v48
    %v339 = vadd.f32 %v335, %v338
    %s340 = sld [smem:[#allocation2 + $0x73]]
    %v341 = vstv %s340
    %v342 = vmul.f32 %v341, %v54
    %v343 = vadd.f32 %v339, %v342
    %s344 = sld [smem:[#allocation2 + $0x7b]]
    %v345 = vstv %s344
    %v346 = vmul.f32 %v345, %v60
    %v347 = vadd.f32 %v343, %v346
    %s348 = sld [smem:[#allocation2 + $0xa3]]
    %v349 = vstv %s348
    %v350 = vmul.f32 %v349, %v40
    %v351 = vadd.f32 %v347, %v350
    %s352 = sld [smem:[#allocation2 + $0xab]]
    %v353 = vstv %s352
    %v354 = vmul.f32 %v353, %v46
    %v355 = vadd.f32 %v351, %v354
    %s356 = sld [smem:[#allocation2 + $0xb3]]
    %v357 = vstv %s356
    %v358 = vmul.f32 %v357, %v52
    %v359 = vadd.f32 %v355, %v358
    %s360 = sld [smem:[#allocation2 + $0xbb]]
    %v361 = vstv %s360
    %v362 = vmul.f32 %v361, %v58
    %v363 = vadd.f32 %v359, %v362
    %s364 = scalar_lea.vmem [#allocation7], 44
    %365 = vst [vmem:[%s364] sm:$0xf] %v363
    %s366 = sld [smem:[#allocation5 + $0x4]]
    %v367 = vstv %s366
    %s368 = sld [smem:[#allocation2 + $0x64]]
    %v369 = vstv %s368
    %v370 = vmul.f32 %v369, %v42
    %v371 = vadd.f32 %v367, %v370
    %s372 = sld [smem:[#allocation2 + $0x6c]]
    %v373 = vstv %s372
    %v374 = vmul.f32 %v373, %v48
    %v375 = vadd.f32 %v371, %v374
    %s376 = sld [smem:[#allocation2 + $0x74]]
    %v377 = vstv %s376
    %v378 = vmul.f32 %v377, %v54
    %v379 = vadd.f32 %v375, %v378
    %s380 = sld [smem:[#allocation2 + $0x7c]]
    %v381 = vstv %s380
    %v382 = vmul.f32 %v381, %v60
    %v383 = vadd.f32 %v379, %v382
    %s384 = sld [smem:[#allocation2 + $0xa4]]
    %v385 = vstv %s384
    %v386 = vmul.f32 %v385, %v40
    %v387 = vadd.f32 %v383, %v386
    %s388 = sld [smem:[#allocation2 + $0xac]]
    %v389 = vstv %s388
    %v390 = vmul.f32 %v389, %v46
    %v391 = vadd.f32 %v387, %v390
    %s392 = sld [smem:[#allocation2 + $0xb4]]
    %v393 = vstv %s392
    %v394 = vmul.f32 %v393, %v52
    %v395 = vadd.f32 %v391, %v394
    %s396 = sld [smem:[#allocation2 + $0xbc]]
    %v397 = vstv %s396
    %v398 = vmul.f32 %v397, %v58
    %v399 = vadd.f32 %v395, %v398
    %s400 = scalar_lea.vmem [#allocation7], 48
    %401 = vst [vmem:[%s400] sm:$0xf] %v399
    %s402 = sld [smem:[#allocation5 + $0x5]]
    %v403 = vstv %s402
    %s404 = sld [smem:[#allocation2 + $0x65]]
    %v405 = vstv %s404
    %v406 = vmul.f32 %v405, %v42
    %v407 = vadd.f32 %v403, %v406
    %s408 = sld [smem:[#allocation2 + $0x6d]]
    %v409 = vstv %s408
    %v410 = vmul.f32 %v409, %v48
    %v411 = vadd.f32 %v407, %v410
    %s412 = sld [smem:[#allocation2 + $0x75]]
    %v413 = vstv %s412
    %v414 = vmul.f32 %v413, %v54
    %v415 = vadd.f32 %v411, %v414
    %s416 = sld [smem:[#allocation2 + $0x7d]]
    %v417 = vstv %s416
    %v418 = vmul.f32 %v417, %v60
    %v419 = vadd.f32 %v415, %v418
    %s420 = sld [smem:[#allocation2 + $0xa5]]
    %v421 = vstv %s420
    %v422 = vmul.f32 %v421, %v40
    %v423 = vadd.f32 %v419, %v422
    %s424 = sld [smem:[#allocation2 + $0xad]]
    %v425 = vstv %s424
    %v426 = vmul.f32 %v425, %v46
    %v427 = vadd.f32 %v423, %v426
    %s428 = sld [smem:[#allocation2 + $0xb5]]
    %v429 = vstv %s428
    %v430 = vmul.f32 %v429, %v52
    %v431 = vadd.f32 %v427, %v430
    %s432 = sld [smem:[#allocation2 + $0xbd]]
    %v433 = vstv %s432
    %v434 = vmul.f32 %v433, %v58
    %v435 = vadd.f32 %v431, %v434
    %s436 = scalar_lea.vmem [#allocation7], 52
    %437 = vst [vmem:[%s436] sm:$0xf] %v435
    %s438 = sld [smem:[#allocation5 + $0x6]]
    %v439 = vstv %s438
    %s440 = sld [smem:[#allocation2 + $0x66]]
    %v441 = vstv %s440
    %v442 = vmul.f32 %v441, %v42
    %v443 = vadd.f32 %v439, %v442
    %s444 = sld [smem:[#allocation2 + $0x6e]]
    %v445 = vstv %s444
    %v446 = vmul.f32 %v445, %v48
    %v447 = vadd.f32 %v443, %v446
    %s448 = sld [smem:[#allocation2 + $0x76]]
    %v449 = vstv %s448
    %v450 = vmul.f32 %v449, %v54
    %v451 = vadd.f32 %v447, %v450
    %s452 = sld [smem:[#allocation2 + $0x7e]]
    %v453 = vstv %s452
    %v454 = vmul.f32 %v453, %v60
    %v455 = vadd.f32 %v451, %v454
    %s456 = sld [smem:[#allocation2 + $0xa6]]
    %v457 = vstv %s456
    %v458 = vmul.f32 %v457, %v40
    %v459 = vadd.f32 %v455, %v458
    %s460 = sld [smem:[#allocation2 + $0xae]]
    %v461 = vstv %s460
    %v462 = vmul.f32 %v461, %v46
    %v463 = vadd.f32 %v459, %v462
    %s464 = sld [smem:[#allocation2 + $0xb6]]
    %v465 = vstv %s464
    %v466 = vmul.f32 %v465, %v52
    %v467 = vadd.f32 %v463, %v466
    %s468 = sld [smem:[#allocation2 + $0xbe]]
    %v469 = vstv %s468
    %v470 = vmul.f32 %v469, %v58
    %v471 = vadd.f32 %v467, %v470
    %s472 = scalar_lea.vmem [#allocation7], 56
    %473 = vst [vmem:[%s472] sm:$0xf] %v471
    %s474 = sld [smem:[#allocation5 + $0x7]]
    %v475 = vstv %s474
    %s476 = sld [smem:[#allocation2 + $0x67]]
    %v477 = vstv %s476
    %v478 = vmul.f32 %v477, %v42
    %v479 = vadd.f32 %v475, %v478
    %s480 = sld [smem:[#allocation2 + $0x6f]]
    %v481 = vstv %s480
    %v482 = vmul.f32 %v481, %v48
    %v483 = vadd.f32 %v479, %v482
    %s484 = sld [smem:[#allocation2 + $0x77]]
    %v485 = vstv %s484
    %v486 = vmul.f32 %v485, %v54
    %v487 = vadd.f32 %v483, %v486
    %s488 = sld [smem:[#allocation2 + $0x7f]]
    %v489 = vstv %s488
    %v490 = vmul.f32 %v489, %v60
    %v491 = vadd.f32 %v487, %v490
    %s492 = sld [smem:[#allocation2 + $0xa7]]
    %v493 = vstv %s492
    %v494 = vmul.f32 %v493, %v40
    %v495 = vadd.f32 %v491, %v494
    %s496 = sld [smem:[#allocation2 + $0xaf]]
    %v497 = vstv %s496
    %v498 = vmul.f32 %v497, %v46
    %v499 = vadd.f32 %v495, %v498
    %s500 = sld [smem:[#allocation2 + $0xb7]]
    %v501 = vstv %s500
    %v502 = vmul.f32 %v501, %v52
    %v503 = vadd.f32 %v499, %v502
    %s504 = sld [smem:[#allocation2 + $0xbf]]
    %v505 = vstv %s504
    %v506 = vmul.f32 %v505, %v58
    %v507 = vadd.f32 %v503, %v506
    %s508 = scalar_lea.vmem [#allocation7], 60
    %509 = vst [vmem:[%s508] sm:$0xf] %v507
    %s510 = sld [smem:[#allocation5]]
    %v511 = vstv %s510
    %s512 = sld [smem:[#allocation2 + $0x20]]
    %v513 = vstv %s512
    %v514 = vmul.f32 %v513, %v43
    %v515 = vadd.f32 %v511, %v514
    %s516 = sld [smem:[#allocation2 + $0x28]]
    %v517 = vstv %s516
    %v518 = vmul.f32 %v517, %v49
    %v519 = vadd.f32 %v515, %v518
    %s520 = sld [smem:[#allocation2 + $0x30]]
    %v521 = vstv %s520
    %v522 = vmul.f32 %v521, %v55
    %v523 = vadd.f32 %v519, %v522
    %s524 = sld [smem:[#allocation2 + $0x38]]
    %v525 = vstv %s524
    %v526 = vmul.f32 %v525, %v61
    %v527 = vadd.f32 %v523, %v526
    %s528 = sld [smem:[#allocation2 + $0xe0]]
    %v529 = vstv %s528
    %v530 = vmul.f32 %v529, %v40
    %v531 = vadd.f32 %v527, %v530
    %s532 = sld [smem:[#allocation2 + $0xe8]]
    %v533 = vstv %s532
    %v534 = vmul.f32 %v533, %v46
    %v535 = vadd.f32 %v531, %v534
    %s536 = sld [smem:[#allocation2 + $0xf0]]
    %v537 = vstv %s536
    %v538 = vmul.f32 %v537, %v52
    %v539 = vadd.f32 %v535, %v538
    %s540 = sld [smem:[#allocation2 + $0xf8]]
    %v541 = vstv %s540
    %v542 = vmul.f32 %v541, %v58
    %v543 = vadd.f32 %v539, %v542
    %s544 = scalar_lea.vmem [#allocation7], 64
    %545 = vst [vmem:[%s544] sm:$0xf] %v543
    %s546 = sld [smem:[#allocation5 + $0x1]]
    %v547 = vstv %s546
    %s548 = sld [smem:[#allocation2 + $0x21]]
    %v549 = vstv %s548
    %v550 = vmul.f32 %v549, %v43
    %v551 = vadd.f32 %v547, %v550
    %s552 = sld [smem:[#allocation2 + $0x29]]
    %v553 = vstv %s552
    %v554 = vmul.f32 %v553, %v49
    %v555 = vadd.f32 %v551, %v554
    %s556 = sld [smem:[#allocation2 + $0x31]]
    %v557 = vstv %s556
    %v558 = vmul.f32 %v557, %v55
    %v559 = vadd.f32 %v555, %v558
    %s560 = sld [smem:[#allocation2 + $0x39]]
    %v561 = vstv %s560
    %v562 = vmul.f32 %v561, %v61
    %v563 = vadd.f32 %v559, %v562
    %s564 = sld [smem:[#allocation2 + $0xe1]]
    %v565 = vstv %s564
    %v566 = vmul.f32 %v565, %v40
    %v567 = vadd.f32 %v563, %v566
    %s568 = sld [smem:[#allocation2 + $0xe9]]
    %v569 = vstv %s568
    %v570 = vmul.f32 %v569, %v46
    %v571 = vadd.f32 %v567, %v570
    %s572 = sld [smem:[#allocation2 + $0xf1]]
    %v573 = vstv %s572
    %v574 = vmul.f32 %v573, %v52
    %v575 = vadd.f32 %v571, %v574
    %s576 = sld [smem:[#allocation2 + $0xf9]]
    %v577 = vstv %s576
    %v578 = vmul.f32 %v577, %v58
    %v579 = vadd.f32 %v575, %v578
    %s580 = scalar_lea.vmem [#allocation7], 68
    %581 = vst [vmem:[%s580] sm:$0xf] %v579
    %s582 = sld [smem:[#allocation5 + $0x2]]
    %v583 = vstv %s582
    %s584 = sld [smem:[#allocation2 + $0x22]]
    %v585 = vstv %s584
    %v586 = vmul.f32 %v585, %v43
    %v587 = vadd.f32 %v583, %v586
    %s588 = sld [smem:[#allocation2 + $0x2a]]
    %v589 = vstv %s588
    %v590 = vmul.f32 %v589, %v49
    %v591 = vadd.f32 %v587, %v590
    %s592 = sld [smem:[#allocation2 + $0x32]]
    %v593 = vstv %s592
    %v594 = vmul.f32 %v593, %v55
    %v595 = vadd.f32 %v591, %v594
    %s596 = sld [smem:[#allocation2 + $0x3a]]
    %v597 = vstv %s596
    %v598 = vmul.f32 %v597, %v61
    %v599 = vadd.f32 %v595, %v598
    %s600 = sld [smem:[#allocation2 + $0xe2]]
    %v601 = vstv %s600
    %v602 = vmul.f32 %v601, %v40
    %v603 = vadd.f32 %v599, %v602
    %s604 = sld [smem:[#allocation2 + $0xea]]
    %v605 = vstv %s604
    %v606 = vmul.f32 %v605, %v46
    %v607 = vadd.f32 %v603, %v606
    %s608 = sld [smem:[#allocation2 + $0xf2]]
    %v609 = vstv %s608
    %v610 = vmul.f32 %v609, %v52
    %v611 = vadd.f32 %v607, %v610
    %s612 = sld [smem:[#allocation2 + $0xfa]]
    %v613 = vstv %s612
    %v614 = vmul.f32 %v613, %v58
    %v615 = vadd.f32 %v611, %v614
    %s616 = scalar_lea.vmem [#allocation7], 72
    %617 = vst [vmem:[%s616] sm:$0xf] %v615
    %s618 = sld [smem:[#allocation5 + $0x3]]
    %v619 = vstv %s618
    %s620 = sld [smem:[#allocation2 + $0x23]]
    %v621 = vstv %s620
    %v622 = vmul.f32 %v621, %v43
    %v623 = vadd.f32 %v619, %v622
    %s624 = sld [smem:[#allocation2 + $0x2b]]
    %v625 = vstv %s624
    %v626 = vmul.f32 %v625, %v49
    %v627 = vadd.f32 %v623, %v626
    %s628 = sld [smem:[#allocation2 + $0x33]]
    %v629 = vstv %s628
    %v630 = vmul.f32 %v629, %v55
    %v631 = vadd.f32 %v627, %v630
    %s632 = sld [smem:[#allocation2 + $0x3b]]
    %v633 = vstv %s632
    %v634 = vmul.f32 %v633, %v61
    %v635 = vadd.f32 %v631, %v634
    %s636 = sld [smem:[#allocation2 + $0xe3]]
    %v637 = vstv %s636
    %v638 = vmul.f32 %v637, %v40
    %v639 = vadd.f32 %v635, %v638
    %s640 = sld [smem:[#allocation2 + $0xeb]]
    %v641 = vstv %s640
    %v642 = vmul.f32 %v641, %v46
    %v643 = vadd.f32 %v639, %v642
    %s644 = sld [smem:[#allocation2 + $0xf3]]
    %v645 = vstv %s644
    %v646 = vmul.f32 %v645, %v52
    %v647 = vadd.f32 %v643, %v646
    %s648 = sld [smem:[#allocation2 + $0xfb]]
    %v649 = vstv %s648
    %v650 = vmul.f32 %v649, %v58
    %v651 = vadd.f32 %v647, %v650
    %s652 = scalar_lea.vmem [#allocation7], 76
    %653 = vst [vmem:[%s652] sm:$0xf] %v651
    %s654 = sld [smem:[#allocation5 + $0x4]]
    %v655 = vstv %s654
    %s656 = sld [smem:[#allocation2 + $0x24]]
    %v657 = vstv %s656
    %v658 = vmul.f32 %v657, %v43
    %v659 = vadd.f32 %v655, %v658
    %s660 = sld [smem:[#allocation2 + $0x2c]]
    %v661 = vstv %s660
    %v662 = vmul.f32 %v661, %v49
    %v663 = vadd.f32 %v659, %v662
    %s664 = sld [smem:[#allocation2 + $0x34]]
    %v665 = vstv %s664
    %v666 = vmul.f32 %v665, %v55
    %v667 = vadd.f32 %v663, %v666
    %s668 = sld [smem:[#allocation2 + $0x3c]]
    %v669 = vstv %s668
    %v670 = vmul.f32 %v669, %v61
    %v671 = vadd.f32 %v667, %v670
    %s672 = sld [smem:[#allocation2 + $0xe4]]
    %v673 = vstv %s672
    %v674 = vmul.f32 %v673, %v40
    %v675 = vadd.f32 %v671, %v674
    %s676 = sld [smem:[#allocation2 + $0xec]]
    %v677 = vstv %s676
    %v678 = vmul.f32 %v677, %v46
    %v679 = vadd.f32 %v675, %v678
    %s680 = sld [smem:[#allocation2 + $0xf4]]
    %v681 = vstv %s680
    %v682 = vmul.f32 %v681, %v52
    %v683 = vadd.f32 %v679, %v682
    %s684 = sld [smem:[#allocation2 + $0xfc]]
    %v685 = vstv %s684
    %v686 = vmul.f32 %v685, %v58
    %v687 = vadd.f32 %v683, %v686
    %s688 = scalar_lea.vmem [#allocation7], 80
    %689 = vst [vmem:[%s688] sm:$0xf] %v687
    %s690 = sld [smem:[#allocation5 + $0x5]]
    %v691 = vstv %s690
    %s692 = sld [smem:[#allocation2 + $0x25]]
    %v693 = vstv %s692
    %v694 = vmul.f32 %v693, %v43
    %v695 = vadd.f32 %v691, %v694
    %s696 = sld [smem:[#allocation2 + $0x2d]]
    %v697 = vstv %s696
    %v698 = vmul.f32 %v697, %v49
    %v699 = vadd.f32 %v695, %v698
    %s700 = sld [smem:[#allocation2 + $0x35]]
    %v701 = vstv %s700
    %v702 = vmul.f32 %v701, %v55
    %v703 = vadd.f32 %v699, %v702
    %s704 = sld [smem:[#allocation2 + $0x3d]]
    %v705 = vstv %s704
    %v706 = vmul.f32 %v705, %v61
    %v707 = vadd.f32 %v703, %v706
    %s708 = sld [smem:[#allocation2 + $0xe5]]
    %v709 = vstv %s708
    %v710 = vmul.f32 %v709, %v40
    %v711 = vadd.f32 %v707, %v710
    %s712 = sld [smem:[#allocation2 + $0xed]]
    %v713 = vstv %s712
    %v714 = vmul.f32 %v713, %v46
    %v715 = vadd.f32 %v711, %v714
    %s716 = sld [smem:[#allocation2 + $0xf5]]
    %v717 = vstv %s716
    %v718 = vmul.f32 %v717, %v52
    %v719 = vadd.f32 %v715, %v718
    %s720 = sld [smem:[#allocation2 + $0xfd]]
    %v721 = vstv %s720
    %v722 = vmul.f32 %v721, %v58
    %v723 = vadd.f32 %v719, %v722
    %s724 = scalar_lea.vmem [#allocation7], 84
    %725 = vst [vmem:[%s724] sm:$0xf] %v723
    %s726 = sld [smem:[#allocation5 + $0x6]]
    %v727 = vstv %s726
    %s728 = sld [smem:[#allocation2 + $0x26]]
    %v729 = vstv %s728
    %v730 = vmul.f32 %v729, %v43
    %v731 = vadd.f32 %v727, %v730
    %s732 = sld [smem:[#allocation2 + $0x2e]]
    %v733 = vstv %s732
    %v734 = vmul.f32 %v733, %v49
    %v735 = vadd.f32 %v731, %v734
    %s736 = sld [smem:[#allocation2 + $0x36]]
    %v737 = vstv %s736
    %v738 = vmul.f32 %v737, %v55
    %v739 = vadd.f32 %v735, %v738
    %s740 = sld [smem:[#allocation2 + $0x3e]]
    %v741 = vstv %s740
    %v742 = vmul.f32 %v741, %v61
    %v743 = vadd.f32 %v739, %v742
    %s744 = sld [smem:[#allocation2 + $0xe6]]
    %v745 = vstv %s744
    %v746 = vmul.f32 %v745, %v40
    %v747 = vadd.f32 %v743, %v746
    %s748 = sld [smem:[#allocation2 + $0xee]]
    %v749 = vstv %s748
    %v750 = vmul.f32 %v749, %v46
    %v751 = vadd.f32 %v747, %v750
    %s752 = sld [smem:[#allocation2 + $0xf6]]
    %v753 = vstv %s752
    %v754 = vmul.f32 %v753, %v52
    %v755 = vadd.f32 %v751, %v754
    %s756 = sld [smem:[#allocation2 + $0xfe]]
    %v757 = vstv %s756
    %v758 = vmul.f32 %v757, %v58
    %v759 = vadd.f32 %v755, %v758
    %s760 = scalar_lea.vmem [#allocation7], 88
    %761 = vst [vmem:[%s760] sm:$0xf] %v759
    %s762 = sld [smem:[#allocation5 + $0x7]]
    %v763 = vstv %s762
    %s764 = sld [smem:[#allocation2 + $0x27]]
    %v765 = vstv %s764
    %v766 = vmul.f32 %v765, %v43
    %v767 = vadd.f32 %v763, %v766
    %s768 = sld [smem:[#allocation2 + $0x2f]]
    %v769 = vstv %s768
    %v770 = vmul.f32 %v769, %v49
    %v771 = vadd.f32 %v767, %v770
    %s772 = sld [smem:[#allocation2 + $0x37]]
    %v773 = vstv %s772
    %v774 = vmul.f32 %v773, %v55
    %v775 = vadd.f32 %v771, %v774
    %s776 = sld [smem:[#allocation2 + $0x3f]]
    %v777 = vstv %s776
    %v778 = vmul.f32 %v777, %v61
    %v779 = vadd.f32 %v775, %v778
    %s780 = sld [smem:[#allocation2 + $0xe7]]
    %v781 = vstv %s780
    %v782 = vmul.f32 %v781, %v40
    %v783 = vadd.f32 %v779, %v782
    %s784 = sld [smem:[#allocation2 + $0xef]]
    %v785 = vstv %s784
    %v786 = vmul.f32 %v785, %v46
    %v787 = vadd.f32 %v783, %v786
    %s788 = sld [smem:[#allocation2 + $0xf7]]
    %v789 = vstv %s788
    %v790 = vmul.f32 %v789, %v52
    %v791 = vadd.f32 %v787, %v790
    %s792 = sld [smem:[#allocation2 + $0xff]]
    %v793 = vstv %s792
    %v794 = vmul.f32 %v793, %v58
    %v795 = vadd.f32 %v791, %v794
    %s796 = scalar_lea.vmem [#allocation7], 92
    %797 = vst [vmem:[%s796] sm:$0xf] %v795
    %s798 = sld [smem:[#allocation5]]
    %v799 = vstv %s798
    %s800 = sld [smem:[#allocation2]]
    %v801 = vstv %s800
    %v802 = vmul.f32 %v801, %v44
    %v803 = vadd.f32 %v799, %v802
    %s804 = sld [smem:[#allocation2 + $0x8]]
    %v805 = vstv %s804
    %v806 = vmul.f32 %v805, %v50
    %v807 = vadd.f32 %v803, %v806
    %s808 = sld [smem:[#allocation2 + $0x10]]
    %v809 = vstv %s808
    %v810 = vmul.f32 %v809, %v56
    %v811 = vadd.f32 %v807, %v810
    %s812 = sld [smem:[#allocation2 + $0x18]]
    %v813 = vstv %s812
    %v814 = vmul.f32 %v813, %v62
    %v815 = vadd.f32 %v811, %v814
    %s816 = sld [smem:[#allocation2 + $0x40]]
    %v817 = vstv %s816
    %v818 = vmul.f32 %v817, %v43
    %v819 = vadd.f32 %v815, %v818
    %s820 = sld [smem:[#allocation2 + $0x48]]
    %v821 = vstv %s820
    %v822 = vmul.f32 %v821, %v49
    %v823 = vadd.f32 %v819, %v822
    %s824 = sld [smem:[#allocation2 + $0x50]]
    %v825 = vstv %s824
    %v826 = vmul.f32 %v825, %v55
    %v827 = vadd.f32 %v823, %v826
    %s828 = sld [smem:[#allocation2 + $0x58]]
    %v829 = vstv %s828
    %v830 = vmul.f32 %v829, %v61
    %v831 = vadd.f32 %v827, %v830
    %s832 = sld [smem:[#allocation2 + $0xc0]]
    %v833 = vstv %s832
    %v834 = vmul.f32 %v833, %v42
    %v835 = vadd.f32 %v831, %v834
    %s836 = sld [smem:[#allocation2 + $0xc8]]
    %v837 = vstv %s836
    %v838 = vmul.f32 %v837, %v48
    %v839 = vadd.f32 %v835, %v838
    %s840 = sld [smem:[#allocation2 + $0xd0]]
    %v841 = vstv %s840
    %v842 = vmul.f32 %v841, %v54
    %v843 = vadd.f32 %v839, %v842
    %s844 = sld [smem:[#allocation2 + $0xd8]]
    %v845 = vstv %s844
    %v846 = vmul.f32 %v845, %v60
    %v847 = vadd.f32 %v843, %v846
    %s848 = sld [smem:[#allocation2 + $0x100]]
    %v849 = vstv %s848
    %v850 = vmul.f32 %v849, %v40
    %v851 = vadd.f32 %v847, %v850
    %s852 = sld [smem:[#allocation2 + $0x108]]
    %v853 = vstv %s852
    %v854 = vmul.f32 %v853, %v46
    %v855 = vadd.f32 %v851, %v854
    %s856 = sld [smem:[#allocation2 + $0x110]]
    %v857 = vstv %s856
    %v858 = vmul.f32 %v857, %v52
    %v859 = vadd.f32 %v855, %v858
    %s860 = sld [smem:[#allocation2 + $0x118]]
    %v861 = vstv %s860
    %v862 = vmul.f32 %v861, %v58
    %v863 = vadd.f32 %v859, %v862
    %s864 = scalar_lea.vmem [#allocation7], 96
    %865 = vst [vmem:[%s864] sm:$0xf] %v863
    %s866 = sld [smem:[#allocation5 + $0x1]]
    %v867 = vstv %s866
    %s868 = sld [smem:[#allocation2 + $0x1]]
    %v869 = vstv %s868
    %v870 = vmul.f32 %v869, %v44
    %v871 = vadd.f32 %v867, %v870
    %s872 = sld [smem:[#allocation2 + $0x9]]
    %v873 = vstv %s872
    %v874 = vmul.f32 %v873, %v50
    %v875 = vadd.f32 %v871, %v874
    %s876 = sld [smem:[#allocation2 + $0x11]]
    %v877 = vstv %s876
    %v878 = vmul.f32 %v877, %v56
    %v879 = vadd.f32 %v875, %v878
    %s880 = sld [smem:[#allocation2 + $0x19]]
    %v881 = vstv %s880
    %v882 = vmul.f32 %v881, %v62
    %v883 = vadd.f32 %v879, %v882
    %s884 = sld [smem:[#allocation2 + $0x41]]
    %v885 = vstv %s884
    %v886 = vmul.f32 %v885, %v43
    %v887 = vadd.f32 %v883, %v886
    %s888 = sld [smem:[#allocation2 + $0x49]]
    %v889 = vstv %s888
    %v890 = vmul.f32 %v889, %v49
    %v891 = vadd.f32 %v887, %v890
    %s892 = sld [smem:[#allocation2 + $0x51]]
    %v893 = vstv %s892
    %v894 = vmul.f32 %v893, %v55
    %v895 = vadd.f32 %v891, %v894
    %s896 = sld [smem:[#allocation2 + $0x59]]
    %v897 = vstv %s896
    %v898 = vmul.f32 %v897, %v61
    %v899 = vadd.f32 %v895, %v898
    %s900 = sld [smem:[#allocation2 + $0xc1]]
    %v901 = vstv %s900
    %v902 = vmul.f32 %v901, %v42
    %v903 = vadd.f32 %v899, %v902
    %s904 = sld [smem:[#allocation2 + $0xc9]]
    %v905 = vstv %s904
    %v906 = vmul.f32 %v905, %v48
    %v907 = vadd.f32 %v903, %v906
    %s908 = sld [smem:[#allocation2 + $0xd1]]
    %v909 = vstv %s908
    %v910 = vmul.f32 %v909, %v54
    %v911 = vadd.f32 %v907, %v910
    %s912 = sld [smem:[#allocation2 + $0xd9]]
    %v913 = vstv %s912
    %v914 = vmul.f32 %v913, %v60
    %v915 = vadd.f32 %v911, %v914
    %s916 = sld [smem:[#allocation2 + $0x101]]
    %v917 = vstv %s916
    %v918 = vmul.f32 %v917, %v40
    %v919 = vadd.f32 %v915, %v918
    %s920 = sld [smem:[#allocation2 + $0x109]]
    %v921 = vstv %s920
    %v922 = vmul.f32 %v921, %v46
    %v923 = vadd.f32 %v919, %v922
    %s924 = sld [smem:[#allocation2 + $0x111]]
    %v925 = vstv %s924
    %v926 = vmul.f32 %v925, %v52
    %v927 = vadd.f32 %v923, %v926
    %s928 = sld [smem:[#allocation2 + $0x119]]
    %v929 = vstv %s928
    %v930 = vmul.f32 %v929, %v58
    %v931 = vadd.f32 %v927, %v930
    %s932 = scalar_lea.vmem [#allocation7], 100
    %933 = vst [vmem:[%s932] sm:$0xf] %v931
    %s934 = sld [smem:[#allocation5 + $0x2]]
    %v935 = vstv %s934
    %s936 = sld [smem:[#allocation2 + $0x2]]
    %v937 = vstv %s936
    %v938 = vmul.f32 %v937, %v44
    %v939 = vadd.f32 %v935, %v938
    %s940 = sld [smem:[#allocation2 + $0xa]]
    %v941 = vstv %s940
    %v942 = vmul.f32 %v941, %v50
    %v943 = vadd.f32 %v939, %v942
    %s944 = sld [smem:[#allocation2 + $0x12]]
    %v945 = vstv %s944
    %v946 = vmul.f32 %v945, %v56
    %v947 = vadd.f32 %v943, %v946
    %s948 = sld [smem:[#allocation2 + $0x1a]]
    %v949 = vstv %s948
    %v950 = vmul.f32 %v949, %v62
    %v951 = vadd.f32 %v947, %v950
    %s952 = sld [smem:[#allocation2 + $0x42]]
    %v953 = vstv %s952
    %v954 = vmul.f32 %v953, %v43
    %v955 = vadd.f32 %v951, %v954
    %s956 = sld [smem:[#allocation2 + $0x4a]]
    %v957 = vstv %s956
    %v958 = vmul.f32 %v957, %v49
    %v959 = vadd.f32 %v955, %v958
    %s960 = sld [smem:[#allocation2 + $0x52]]
    %v961 = vstv %s960
    %v962 = vmul.f32 %v961, %v55
    %v963 = vadd.f32 %v959, %v962
    %s964 = sld [smem:[#allocation2 + $0x5a]]
    %v965 = vstv %s964
    %v966 = vmul.f32 %v965, %v61
    %v967 = vadd.f32 %v963, %v966
    %s968 = sld [smem:[#allocation2 + $0xc2]]
    %v969 = vstv %s968
    %v970 = vmul.f32 %v969, %v42
    %v971 = vadd.f32 %v967, %v970
    %s972 = sld [smem:[#allocation2 + $0xca]]
    %v973 = vstv %s972
    %v974 = vmul.f32 %v973, %v48
    %v975 = vadd.f32 %v971, %v974
    %s976 = sld [smem:[#allocation2 + $0xd2]]
    %v977 = vstv %s976
    %v978 = vmul.f32 %v977, %v54
    %v979 = vadd.f32 %v975, %v978
    %s980 = sld [smem:[#allocation2 + $0xda]]
    %v981 = vstv %s980
    %v982 = vmul.f32 %v981, %v60
    %v983 = vadd.f32 %v979, %v982
    %s984 = sld [smem:[#allocation2 + $0x102]]
    %v985 = vstv %s984
    %v986 = vmul.f32 %v985, %v40
    %v987 = vadd.f32 %v983, %v986
    %s988 = sld [smem:[#allocation2 + $0x10a]]
    %v989 = vstv %s988
    %v990 = vmul.f32 %v989, %v46
    %v991 = vadd.f32 %v987, %v990
    %s992 = sld [smem:[#allocation2 + $0x112]]
    %v993 = vstv %s992
    %v994 = vmul.f32 %v993, %v52
    %v995 = vadd.f32 %v991, %v994
    %s996 = sld [smem:[#allocation2 + $0x11a]]
    %v997 = vstv %s996
    %v998 = vmul.f32 %v997, %v58
    %v999 = vadd.f32 %v995, %v998
    %s1000 = scalar_lea.vmem [#allocation7], 104
    %1001 = vst [vmem:[%s1000] sm:$0xf] %v999
    %s1002 = sld [smem:[#allocation5 + $0x3]]
    %v1003 = vstv %s1002
    %s1004 = sld [smem:[#allocation2 + $0x3]]
    %v1005 = vstv %s1004
    %v1006 = vmul.f32 %v1005, %v44
    %v1007 = vadd.f32 %v1003, %v1006
    %s1008 = sld [smem:[#allocation2 + $0xb]]
    %v1009 = vstv %s1008
    %v1010 = vmul.f32 %v1009, %v50
    %v1011 = vadd.f32 %v1007, %v1010
    %s1012 = sld [smem:[#allocation2 + $0x13]]
    %v1013 = vstv %s1012
    %v1014 = vmul.f32 %v1013, %v56
    %v1015 = vadd.f32 %v1011, %v1014
    %s1016 = sld [smem:[#allocation2 + $0x1b]]
    %v1017 = vstv %s1016
    %v1018 = vmul.f32 %v1017, %v62
    %v1019 = vadd.f32 %v1015, %v1018
    %s1020 = sld [smem:[#allocation2 + $0x43]]
    %v1021 = vstv %s1020
    %v1022 = vmul.f32 %v1021, %v43
    %v1023 = vadd.f32 %v1019, %v1022
    %s1024 = sld [smem:[#allocation2 + $0x4b]]
    %v1025 = vstv %s1024
    %v1026 = vmul.f32 %v1025, %v49
    %v1027 = vadd.f32 %v1023, %v1026
    %s1028 = sld [smem:[#allocation2 + $0x53]]
    %v1029 = vstv %s1028
    %v1030 = vmul.f32 %v1029, %v55
    %v1031 = vadd.f32 %v1027, %v1030
    %s1032 = sld [smem:[#allocation2 + $0x5b]]
    %v1033 = vstv %s1032
    %v1034 = vmul.f32 %v1033, %v61
    %v1035 = vadd.f32 %v1031, %v1034
    %s1036 = sld [smem:[#allocation2 + $0xc3]]
    %v1037 = vstv %s1036
    %v1038 = vmul.f32 %v1037, %v42
    %v1039 = vadd.f32 %v1035, %v1038
    %s1040 = sld [smem:[#allocation2 + $0xcb]]
    %v1041 = vstv %s1040
    %v1042 = vmul.f32 %v1041, %v48
    %v1043 = vadd.f32 %v1039, %v1042
    %s1044 = sld [smem:[#allocation2 + $0xd3]]
    %v1045 = vstv %s1044
    %v1046 = vmul.f32 %v1045, %v54
    %v1047 = vadd.f32 %v1043, %v1046
    %s1048 = sld [smem:[#allocation2 + $0xdb]]
    %v1049 = vstv %s1048
    %v1050 = vmul.f32 %v1049, %v60
    %v1051 = vadd.f32 %v1047, %v1050
    %s1052 = sld [smem:[#allocation2 + $0x103]]
    %v1053 = vstv %s1052
    %v1054 = vmul.f32 %v1053, %v40
    %v1055 = vadd.f32 %v1051, %v1054
    %s1056 = sld [smem:[#allocation2 + $0x10b]]
    %v1057 = vstv %s1056
    %v1058 = vmul.f32 %v1057, %v46
    %v1059 = vadd.f32 %v1055, %v1058
    %s1060 = sld [smem:[#allocation2 + $0x113]]
    %v1061 = vstv %s1060
    %v1062 = vmul.f32 %v1061, %v52
    %v1063 = vadd.f32 %v1059, %v1062
    %s1064 = sld [smem:[#allocation2 + $0x11b]]
    %v1065 = vstv %s1064
    %v1066 = vmul.f32 %v1065, %v58
    %v1067 = vadd.f32 %v1063, %v1066
    %s1068 = scalar_lea.vmem [#allocation7], 108
    %1069 = vst [vmem:[%s1068] sm:$0xf] %v1067
    %s1070 = sld [smem:[#allocation5 + $0x4]]
    %v1071 = vstv %s1070
    %s1072 = sld [smem:[#allocation2 + $0x4]]
    %v1073 = vstv %s1072
    %v1074 = vmul.f32 %v1073, %v44
    %v1075 = vadd.f32 %v1071, %v1074
    %s1076 = sld [smem:[#allocation2 + $0xc]]
    %v1077 = vstv %s1076
    %v1078 = vmul.f32 %v1077, %v50
    %v1079 = vadd.f32 %v1075, %v1078
    %s1080 = sld [smem:[#allocation2 + $0x14]]
    %v1081 = vstv %s1080
    %v1082 = vmul.f32 %v1081, %v56
    %v1083 = vadd.f32 %v1079, %v1082
    %s1084 = sld [smem:[#allocation2 + $0x1c]]
    %v1085 = vstv %s1084
    %v1086 = vmul.f32 %v1085, %v62
    %v1087 = vadd.f32 %v1083, %v1086
    %s1088 = sld [smem:[#allocation2 + $0x44]]
    %v1089 = vstv %s1088
    %v1090 = vmul.f32 %v1089, %v43
    %v1091 = vadd.f32 %v1087, %v1090
    %s1092 = sld [smem:[#allocation2 + $0x4c]]
    %v1093 = vstv %s1092
    %v1094 = vmul.f32 %v1093, %v49
    %v1095 = vadd.f32 %v1091, %v1094
    %s1096 = sld [smem:[#allocation2 + $0x54]]
    %v1097 = vstv %s1096
    %v1098 = vmul.f32 %v1097, %v55
    %v1099 = vadd.f32 %v1095, %v1098
    %s1100 = sld [smem:[#allocation2 + $0x5c]]
    %v1101 = vstv %s1100
    %v1102 = vmul.f32 %v1101, %v61
    %v1103 = vadd.f32 %v1099, %v1102
    %s1104 = sld [smem:[#allocation2 + $0xc4]]
    %v1105 = vstv %s1104
    %v1106 = vmul.f32 %v1105, %v42
    %v1107 = vadd.f32 %v1103, %v1106
    %s1108 = sld [smem:[#allocation2 + $0xcc]]
    %v1109 = vstv %s1108
    %v1110 = vmul.f32 %v1109, %v48
    %v1111 = vadd.f32 %v1107, %v1110
    %s1112 = sld [smem:[#allocation2 + $0xd4]]
    %v1113 = vstv %s1112
    %v1114 = vmul.f32 %v1113, %v54
    %v1115 = vadd.f32 %v1111, %v1114
    %s1116 = sld [smem:[#allocation2 + $0xdc]]
    %v1117 = vstv %s1116
    %v1118 = vmul.f32 %v1117, %v60
    %v1119 = vadd.f32 %v1115, %v1118
    %s1120 = sld [smem:[#allocation2 + $0x104]]
    %v1121 = vstv %s1120
    %v1122 = vmul.f32 %v1121, %v40
    %v1123 = vadd.f32 %v1119, %v1122
    %s1124 = sld [smem:[#allocation2 + $0x10c]]
    %v1125 = vstv %s1124
    %v1126 = vmul.f32 %v1125, %v46
    %v1127 = vadd.f32 %v1123, %v1126
    %s1128 = sld [smem:[#allocation2 + $0x114]]
    %v1129 = vstv %s1128
    %v1130 = vmul.f32 %v1129, %v52
    %v1131 = vadd.f32 %v1127, %v1130
    %s1132 = sld [smem:[#allocation2 + $0x11c]]
    %v1133 = vstv %s1132
    %v1134 = vmul.f32 %v1133, %v58
    %v1135 = vadd.f32 %v1131, %v1134
    %s1136 = scalar_lea.vmem [#allocation7], 112
    %1137 = vst [vmem:[%s1136] sm:$0xf] %v1135
    %s1138 = sld [smem:[#allocation5 + $0x5]]
    %v1139 = vstv %s1138
    %s1140 = sld [smem:[#allocation2 + $0x5]]
    %v1141 = vstv %s1140
    %v1142 = vmul.f32 %v1141, %v44
    %v1143 = vadd.f32 %v1139, %v1142
    %s1144 = sld [smem:[#allocation2 + $0xd]]
    %v1145 = vstv %s1144
    %v1146 = vmul.f32 %v1145, %v50
    %v1147 = vadd.f32 %v1143, %v1146
    %s1148 = sld [smem:[#allocation2 + $0x15]]
    %v1149 = vstv %s1148
    %v1150 = vmul.f32 %v1149, %v56
    %v1151 = vadd.f32 %v1147, %v1150
    %s1152 = sld [smem:[#allocation2 + $0x1d]]
    %v1153 = vstv %s1152
    %v1154 = vmul.f32 %v1153, %v62
    %v1155 = vadd.f32 %v1151, %v1154
    %s1156 = sld [smem:[#allocation2 + $0x45]]
    %v1157 = vstv %s1156
    %v1158 = vmul.f32 %v1157, %v43
    %v1159 = vadd.f32 %v1155, %v1158
    %s1160 = sld [smem:[#allocation2 + $0x4d]]
    %v1161 = vstv %s1160
    %v1162 = vmul.f32 %v1161, %v49
    %v1163 = vadd.f32 %v1159, %v1162
    %s1164 = sld [smem:[#allocation2 + $0x55]]
    %v1165 = vstv %s1164
    %v1166 = vmul.f32 %v1165, %v55
    %v1167 = vadd.f32 %v1163, %v1166
    %s1168 = sld [smem:[#allocation2 + $0x5d]]
    %v1169 = vstv %s1168
    %v1170 = vmul.f32 %v1169, %v61
    %v1171 = vadd.f32 %v1167, %v1170
    %s1172 = sld [smem:[#allocation2 + $0xc5]]
    %v1173 = vstv %s1172
    %v1174 = vmul.f32 %v1173, %v42
    %v1175 = vadd.f32 %v1171, %v1174
    %s1176 = sld [smem:[#allocation2 + $0xcd]]
    %v1177 = vstv %s1176
    %v1178 = vmul.f32 %v1177, %v48
    %v1179 = vadd.f32 %v1175, %v1178
    %s1180 = sld [smem:[#allocation2 + $0xd5]]
    %v1181 = vstv %s1180
    %v1182 = vmul.f32 %v1181, %v54
    %v1183 = vadd.f32 %v1179, %v1182
    %s1184 = sld [smem:[#allocation2 + $0xdd]]
    %v1185 = vstv %s1184
    %v1186 = vmul.f32 %v1185, %v60
    %v1187 = vadd.f32 %v1183, %v1186
    %s1188 = sld [smem:[#allocation2 + $0x105]]
    %v1189 = vstv %s1188
    %v1190 = vmul.f32 %v1189, %v40
    %v1191 = vadd.f32 %v1187, %v1190
    %s1192 = sld [smem:[#allocation2 + $0x10d]]
    %v1193 = vstv %s1192
    %v1194 = vmul.f32 %v1193, %v46
    %v1195 = vadd.f32 %v1191, %v1194
    %s1196 = sld [smem:[#allocation2 + $0x115]]
    %v1197 = vstv %s1196
    %v1198 = vmul.f32 %v1197, %v52
    %v1199 = vadd.f32 %v1195, %v1198
    %s1200 = sld [smem:[#allocation2 + $0x11d]]
    %v1201 = vstv %s1200
    %v1202 = vmul.f32 %v1201, %v58
    %v1203 = vadd.f32 %v1199, %v1202
    %s1204 = scalar_lea.vmem [#allocation7], 116
    %1205 = vst [vmem:[%s1204] sm:$0xf] %v1203
    %s1206 = sld [smem:[#allocation5 + $0x6]]
    %v1207 = vstv %s1206
    %s1208 = sld [smem:[#allocation2 + $0x6]]
    %v1209 = vstv %s1208
    %v1210 = vmul.f32 %v1209, %v44
    %v1211 = vadd.f32 %v1207, %v1210
    %s1212 = sld [smem:[#allocation2 + $0xe]]
    %v1213 = vstv %s1212
    %v1214 = vmul.f32 %v1213, %v50
    %v1215 = vadd.f32 %v1211, %v1214
    %s1216 = sld [smem:[#allocation2 + $0x16]]
    %v1217 = vstv %s1216
    %v1218 = vmul.f32 %v1217, %v56
    %v1219 = vadd.f32 %v1215, %v1218
    %s1220 = sld [smem:[#allocation2 + $0x1e]]
    %v1221 = vstv %s1220
    %v1222 = vmul.f32 %v1221, %v62
    %v1223 = vadd.f32 %v1219, %v1222
    %s1224 = sld [smem:[#allocation2 + $0x46]]
    %v1225 = vstv %s1224
    %v1226 = vmul.f32 %v1225, %v43
    %v1227 = vadd.f32 %v1223, %v1226
    %s1228 = sld [smem:[#allocation2 + $0x4e]]
    %v1229 = vstv %s1228
    %v1230 = vmul.f32 %v1229, %v49
    %v1231 = vadd.f32 %v1227, %v1230
    %s1232 = sld [smem:[#allocation2 + $0x56]]
    %v1233 = vstv %s1232
    %v1234 = vmul.f32 %v1233, %v55
    %v1235 = vadd.f32 %v1231, %v1234
    %s1236 = sld [smem:[#allocation2 + $0x5e]]
    %v1237 = vstv %s1236
    %v1238 = vmul.f32 %v1237, %v61
    %v1239 = vadd.f32 %v1235, %v1238
    %s1240 = sld [smem:[#allocation2 + $0xc6]]
    %v1241 = vstv %s1240
    %v1242 = vmul.f32 %v1241, %v42
    %v1243 = vadd.f32 %v1239, %v1242
    %s1244 = sld [smem:[#allocation2 + $0xce]]
    %v1245 = vstv %s1244
    %v1246 = vmul.f32 %v1245, %v48
    %v1247 = vadd.f32 %v1243, %v1246
    %s1248 = sld [smem:[#allocation2 + $0xd6]]
    %v1249 = vstv %s1248
    %v1250 = vmul.f32 %v1249, %v54
    %v1251 = vadd.f32 %v1247, %v1250
    %s1252 = sld [smem:[#allocation2 + $0xde]]
    %v1253 = vstv %s1252
    %v1254 = vmul.f32 %v1253, %v60
    %v1255 = vadd.f32 %v1251, %v1254
    %s1256 = sld [smem:[#allocation2 + $0x106]]
    %v1257 = vstv %s1256
    %v1258 = vmul.f32 %v1257, %v40
    %v1259 = vadd.f32 %v1255, %v1258
    %s1260 = sld [smem:[#allocation2 + $0x10e]]
    %v1261 = vstv %s1260
    %v1262 = vmul.f32 %v1261, %v46
    %v1263 = vadd.f32 %v1259, %v1262
    %s1264 = sld [smem:[#allocation2 + $0x116]]
    %v1265 = vstv %s1264
    %v1266 = vmul.f32 %v1265, %v52
    %v1267 = vadd.f32 %v1263, %v1266
    %s1268 = sld [smem:[#allocation2 + $0x11e]]
    %v1269 = vstv %s1268
    %v1270 = vmul.f32 %v1269, %v58
    %v1271 = vadd.f32 %v1267, %v1270
    %s1272 = scalar_lea.vmem [#allocation7], 120
    %1273 = vst [vmem:[%s1272] sm:$0xf] %v1271
    %s1274 = sld [smem:[#allocation5 + $0x7]]
    %v1275 = vstv %s1274
    %s1276 = sld [smem:[#allocation2 + $0x7]]
    %v1277 = vstv %s1276
    %v1278 = vmul.f32 %v1277, %v44
    %v1279 = vadd.f32 %v1275, %v1278
    %s1280 = sld [smem:[#allocation2 + $0xf]]
    %v1281 = vstv %s1280
    %v1282 = vmul.f32 %v1281, %v50
    %v1283 = vadd.f32 %v1279, %v1282
    %s1284 = sld [smem:[#allocation2 + $0x17]]
    %v1285 = vstv %s1284
    %v1286 = vmul.f32 %v1285, %v56
    %v1287 = vadd.f32 %v1283, %v1286
    %s1288 = sld [smem:[#allocation2 + $0x1f]]
    %v1289 = vstv %s1288
    %v1290 = vmul.f32 %v1289, %v62
    %v1291 = vadd.f32 %v1287, %v1290
    %s1292 = sld [smem:[#allocation2 + $0x47]]
    %v1293 = vstv %s1292
    %v1294 = vmul.f32 %v1293, %v43
    %v1295 = vadd.f32 %v1291, %v1294
    %s1296 = sld [smem:[#allocation2 + $0x4f]]
    %v1297 = vstv %s1296
    %v1298 = vmul.f32 %v1297, %v49
    %v1299 = vadd.f32 %v1295, %v1298
    %s1300 = sld [smem:[#allocation2 + $0x57]]
    %v1301 = vstv %s1300
    %v1302 = vmul.f32 %v1301, %v55
    %v1303 = vadd.f32 %v1299, %v1302
    %s1304 = sld [smem:[#allocation2 + $0x5f]]
    %v1305 = vstv %s1304
    %v1306 = vmul.f32 %v1305, %v61
    %v1307 = vadd.f32 %v1303, %v1306
    %s1308 = sld [smem:[#allocation2 + $0xc7]]
    %v1309 = vstv %s1308
    %v1310 = vmul.f32 %v1309, %v42
    %v1311 = vadd.f32 %v1307, %v1310
    %s1312 = sld [smem:[#allocation2 + $0xcf]]
    %v1313 = vstv %s1312
    %v1314 = vmul.f32 %v1313, %v48
    %v1315 = vadd.f32 %v1311, %v1314
    %s1316 = sld [smem:[#allocation2 + $0xd7]]
    %v1317 = vstv %s1316
    %v1318 = vmul.f32 %v1317, %v54
    %v1319 = vadd.f32 %v1315, %v1318
    %s1320 = sld [smem:[#allocation2 + $0xdf]]
    %v1321 = vstv %s1320
    %v1322 = vmul.f32 %v1321, %v60
    %v1323 = vadd.f32 %v1319, %v1322
    %s1324 = sld [smem:[#allocation2 + $0x107]]
    %v1325 = vstv %s1324
    %v1326 = vmul.f32 %v1325, %v40
    %v1327 = vadd.f32 %v1323, %v1326
    %s1328 = sld [smem:[#allocation2 + $0x10f]]
    %v1329 = vstv %s1328
    %v1330 = vmul.f32 %v1329, %v46
    %v1331 = vadd.f32 %v1327, %v1330
    %s1332 = sld [smem:[#allocation2 + $0x117]]
    %v1333 = vstv %s1332
    %v1334 = vmul.f32 %v1333, %v52
    %v1335 = vadd.f32 %v1331, %v1334
    %s1336 = sld [smem:[#allocation2 + $0x11f]]
    %v1337 = vstv %s1336
    %v1338 = vmul.f32 %v1337, %v58
    %v1339 = vadd.f32 %v1335, %v1338
    %s1340 = scalar_lea.vmem [#allocation7], 124
    %1341 = vst [vmem:[%s1340] sm:$0xf] %v1339
    // Predicated region
    $region22: #{tpu_custom_call.1} parent=1 // pred_check
      _
    $region23: #{tpu_custom_call.1} parent=1 // pred_check_branch
      %1343 = sbr.rel (0) target = $region25
    $region24: #{tpu_custom_call.1} parent=1 // pred_region
      %s1345 = ssub.s32 2048, 2048
      %1346 = vsyncadd [#allocation3], %s1345
      %s1347 = sshll.u32 [#allocation7], 4
      %s1348 = int_to_ptr.vmem [resolvable:$true] %s1347
      %1353 = dma.vmem_to_hbm [thread:$0]  %s1348, 2048, %s3, [#allocation3], 64, 64, 4
    $region25: #{tpu_custom_call.1} parent=1 // pred_fallthru
      _
    // Predicated region
    $region26: #{tpu_custom_call.1} parent=1 // pred_check
      _
    $region27: #{tpu_custom_call.1} parent=1 // pred_check_branch
      %1355 = sbr.rel (0) target = $region29
    $region28: #{tpu_custom_call.1} parent=1 // pred_region
      %1356 = dma.done [#allocation3], 2048
    $region29: #{tpu_custom_call.1} parent=1 // pred_fallthru
      _
    %1357 = vsyncpa [#allocation3], 1
    %1358 = vsyncpa [#allocation4], 1
    %1359 = vsyncpa [#allocation6], 1

</llo_original>
